<compile_context>
chip_gen: v7x
topology: tpu7x:2x2x1
jax: 0.10.0
libtpu: 0.0.40
codegen_flags: <defaults>
</compile_context>

<pallas_src>
import jax
import jax.numpy as jnp
from jax.experimental import pallas as pl
from jax.experimental.pallas import tpu as pltpu

ALPHA = 0.2
BETA = 0.8
LANE = 128


def _round_up(x, m):
    return ((x + m - 1) // m) * m


def _pick_tile(n, pref):
    """Largest multiple of 128 that divides n and is <= pref (n is a multiple of 128)."""
    t = min(pref, n)
    while n % t:
        t -= LANE
    return t


# ----------------------------------------------------------------------------
# Cacheable preprocessing (depends only on edge_index / params — hoist it).
# ----------------------------------------------------------------------------
def precompute_graph(edge_index, num_nodes, *, alpha=ALPHA, beta=BETA):
    """Padded bf16 A_fwd / A_bwd built from one degree pass, scattered directly
    at padded shape (no zeros -> scatter -> pad -> astype chain)."""
    n_pad = _round_up(num_nodes, LANE)
    row, col = edge_index[0], edge_index[1]
    loop = jnp.arange(num_nodes, dtype=edge_index.dtype)
    row = jnp.concatenate([row, loop])
    col = jnp.concatenate([col, loop])
    out_deg = jnp.zeros((num_nodes,), jnp.float32).at[row].add(1.0)
    in_deg = jnp.zeros((num_nodes,), jnp.float32).at[col].add(1.0)
    # self-loops guarantee degree >= 1, so the negative powers are finite.
    norm_fwd = jnp.power(out_deg, -beta)[row] * jnp.power(in_deg, -alpha)[col]
    norm_bwd = jnp.power(in_deg, -beta)[col] * jnp.power(out_deg, -alpha)[row]
    a_fwd = (jnp.zeros((n_pad, n_pad), jnp.float32)
             .at[col, row].add(norm_fwd).astype(jnp.bfloat16))
    a_bwd = (jnp.zeros((n_pad, n_pad), jnp.float32)
             .at[row, col].add(norm_bwd).astype(jnp.bfloat16))
    return a_fwd, a_bwd


def pad_and_fuse_params(params):
    """Zero-pad feature dims to 128, fuse layer-1 [Ws1|Wt1], cast MXU operands bf16."""
    emb, hid = params["ws1"].shape
    out = params["ws2"].shape[1]
    emb_p, hid_p, out_p = (_round_up(emb, LANE), _round_up(hid, LANE),
                           _round_up(out, LANE))

    def pad2(w, r, c):
        return jnp.pad(w, ((0, r - w.shape[0]), (0, c - w.shape[1])))

    w1 = jnp.concatenate(
        [pad2(params["ws1"], emb_p, hid_p), pad2(params["wt1"], emb_p, hid_p)],
        axis=1).astype(jnp.bfloat16)
    b1 = jnp.concatenate(
        [pad2(params["bs1"], 1, hid_p), pad2(params["bt1"], 1, hid_p)],
        axis=1).astype(jnp.float32)
    return dict(
        w1=w1, b1=b1,
        ws2=pad2(params["ws2"], hid_p, out_p).astype(jnp.bfloat16),
        wt2=pad2(params["wt2"], hid_p, out_p).astype(jnp.bfloat16),
        bs2=pad2(params["bs2"], 1, out_p).astype(jnp.float32),
        bt2=pad2(params["bt2"], 1, out_p).astype(jnp.float32),
    )


# ----------------------------------------------------------------------------
# K1: fused layer-1 projection  h = xe @ [Ws1|Wt1] + [bs1|bt1]   (row panels)
# ----------------------------------------------------------------------------
def _project_layer1(xe, w1, b1, *, tm):
    n_pad, emb_p = xe.shape
    two_hid = w1.shape[1]

    def kernel(xe_ref, w_ref, b_ref, h_ref):
        h = jnp.dot(xe_ref[...], w_ref[...], preferred_element_type=jnp.float32)
        h_ref[...] = (h + b_ref[...]).astype(jnp.bfloat16)

    return pl.pallas_call(
        kernel,
        out_shape=jax.ShapeDtypeStruct((n_pad, two_hid), jnp.bfloat16),
        grid=(n_pad // tm,),
        in_specs=[pl.BlockSpec((tm, emb_p), lambda i: (i, 0)),
                  pl.BlockSpec((emb_p, two_hid), lambda i: (0, 0)),
                  pl.BlockSpec((1, two_hid), lambda i: (0, 0))],
        out_specs=pl.BlockSpec((tm, two_hid), lambda i: (i, 0)),
        compiler_params=pltpu.CompilerParams(dimension_semantics=("parallel",)),
        cost_estimate=pl.CostEstimate(
            flops=2 * n_pad * emb_p * two_hid,
            transcendentals=0,
            bytes_accessed=(n_pad * emb_p + emb_p * two_hid + n_pad * two_hid) * 2),
    )(xe, w1, b1)


# ----------------------------------------------------------------------------
# K2: layer-1 propagation + ReLU + fused layer-2 projection.
#     grid = (row panels ["parallel"], A contraction ["arbitrary", last]).
#     g = [ relu(A_bwd@h_t) @ Ws2 + bs2 | relu(A_fwd@h_s) @ Wt2 + bt2 ]  (bf16)
# ----------------------------------------------------------------------------
def _gcn_layer1_and_project2(a_fwd, a_bwd, h, ws2, bs2, wt2, bt2, *, tm, tk):
    n_pad = a_fwd.shape[0]
    hid_p, out_p = ws2.shape

    def kernel(af_ref, ab_ref, h_ref, ws2_ref, bs2_ref, wt2_ref, bt2_ref,
               g_ref, acc_s, acc_t):
        k = pl.program_id(1)

        @pl.when(k == 0)
        def _():
            acc_s[...] = jnp.zeros_like(acc_s)
            acc_t[...] = jnp.zeros_like(acc_t)

        hk = h_ref[...]
        # independent s/t stream matmuls adjacent so the scheduler can interleave
        # their 128-wide MXU pushes (v6e/v7x MXU is 256-wide); f32 accumulation.
        acc_s[...] += jnp.dot(af_ref[...], hk[:, :hid_p],
                              preferred_element_type=jnp.float32)
        acc_t[...] += jnp.dot(ab_ref[...], hk[:, hid_p:],
                              preferred_element_type=jnp.float32)

        @pl.when(k == pl.num_programs(1) - 1)
        def _():
            s1 = jnp.maximum(acc_s[...], 0.0).astype(jnp.bfloat16)
            t1 = jnp.maximum(acc_t[...], 0.0).astype(jnp.bfloat16)
            # layer-2 projections fused into the finalize (streams cross over).
            g_s = jnp.dot(t1, ws2_ref[...], preferred_element_type=jnp.float32) + bs2_ref[...]
            g_t = jnp.dot(s1, wt2_ref[...], preferred_element_type=jnp.float32) + bt2_ref[...]
            g_ref[:, :out_p] = g_s.astype(jnp.bfloat16)
            g_ref[:, out_p:] = g_t.astype(jnp.bfloat16)

    return pl.pallas_call(
        kernel,
        out_shape=jax.ShapeDtypeStruct((n_pad, 2 * out_p), jnp.bfloat16),
        grid=(n_pad // tm, n_pad // tk),          # reduction axis last
        in_specs=[pl.BlockSpec((tm, tk), lambda i, k: (i, k)),
                  pl.BlockSpec((tm, tk), lambda i, k: (i, k)),
                  pl.BlockSpec((tk, 2 * hid_p), lambda i, k: (k, 0)),
                  pl.BlockSpec((hid_p, out_p), lambda i, k: (0, 0)),
                  pl.BlockSpec((1, out_p), lambda i, k: (0, 0)),
                  pl.BlockSpec((hid_p, out_p), lambda i, k: (0, 0)),
                  pl.BlockSpec((1, out_p), lambda i, k: (0, 0))],
        out_specs=pl.BlockSpec((tm, 2 * out_p), lambda i, k: (i, 0)),
        scratch_shapes=[pltpu.VMEM((tm, hid_p), jnp.float32),
                        pltpu.VMEM((tm, hid_p), jnp.float32)],
        compiler_params=pltpu.CompilerParams(
            dimension_semantics=("parallel", "arbitrary")),
        cost_estimate=pl.CostEstimate(
            flops=4 * n_pad * n_pad * hid_p + 4 * n_pad * hid_p * out_p,
            transcendentals=0,
            bytes_accessed=4 * n_pad * n_pad
                           + (n_pad * 2 * hid_p + n_pad * 2 * out_p) * 2),
    )(a_fwd, a_bwd, h, ws2, bs2, wt2, bt2)


# ----------------------------------------------------------------------------
# K3: layer-2 propagation  s = A_fwd @ g_s,  t = A_bwd @ g_t   (same tiling)
# ----------------------------------------------------------------------------
def _gcn_layer2(a_fwd, a_bwd, g, *, tm, tk):
    n_pad = a_fwd.shape[0]
    out_p = g.shape[1] // 2

    def kernel(af_ref, ab_ref, g_ref, s_ref, t_ref, acc_s, acc_t):
        k = pl.program_id(1)

        @pl.when(k == 0)
        def _():
            acc_s[...] = jnp.zeros_like(acc_s)
            acc_t[...] = jnp.zeros_like(acc_t)

        gk = g_ref[...]
        acc_s[...] += jnp.dot(af_ref[...], gk[:, :out_p],
                              preferred_element_type=jnp.float32)
        acc_t[...] += jnp.dot(ab_ref[...], gk[:, out_p:],
                              preferred_element_type=jnp.float32)

        @pl.when(k == pl.num_programs(1) - 1)
        def _():
            s_ref[...] = acc_s[...].astype(jnp.bfloat16)
            t_ref[...] = acc_t[...].astype(jnp.bfloat16)

    return pl.pallas_call(
        kernel,
        out_shape=(jax.ShapeDtypeStruct((n_pad, out_p), jnp.bfloat16),
                   jax.ShapeDtypeStruct((n_pad, out_p), jnp.bfloat16)),
        grid=(n_pad // tm, n_pad // tk),          # reduction axis last
        in_specs=[pl.BlockSpec((tm, tk), lambda i, k: (i, k)),
                  pl.BlockSpec((tm, tk), lambda i, k: (i, k)),
                  pl.BlockSpec((tk, 2 * out_p), lambda i, k: (k, 0))],
        out_specs=(pl.BlockSpec((tm, out_p), lambda i, k: (i, 0)),
                   pl.BlockSpec((tm, out_p), lambda i, k: (i, 0))),
        scratch_shapes=[pltpu.VMEM((tm, out_p), jnp.float32),
                        pltpu.VMEM((tm, out_p), jnp.float32)],
        compiler_params=pltpu.CompilerParams(
            dimension_semantics=("parallel", "arbitrary")),
        cost_estimate=pl.CostEstimate(
            flops=4 * n_pad * n_pad * out_p,
            transcendentals=0,
            bytes_accessed=4 * n_pad * n_pad + 4 * n_pad * out_p * 2),
    )(a_fwd, a_bwd, g)


# ----------------------------------------------------------------------------
# K4: inner-product decoder  sigmoid(S @ T^T), T pre-transposed in the wrapper.
#     2-D "parallel" grid, lane-dense bf16 output tiles (512 x 2048 default).
# ----------------------------------------------------------------------------
def _decode_all(s, t_transposed, *, tm, tn):
    n_pad, out_p = s.shape

    def kernel(s_ref, t_ref, adj_ref):
        # plain (tm, K) @ (K, tn) matmul — no in-kernel transpose of T.
        logits = jnp.dot(s_ref[...], t_ref[...], preferred_element_type=jnp.float32)
        adj_ref[...] = jax.nn.sigmoid(logits).astype(jnp.bfloat16)

    return pl.pallas_call(
        kernel,
        out_shape=jax.ShapeDtypeStruct((n_pad, n_pad), jnp.bfloat16),
        grid=(n_pad // tm, n_pad // tn),
        in_specs=[pl.BlockSpec((tm, out_p), lambda i, j: (i, 0)),
                  pl.BlockSpec((out_p, tn), lambda i, j: (0, j))],
        out_specs=pl.BlockSpec((tm, tn), lambda i, j: (i, j)),
        compiler_params=pltpu.CompilerParams(
            dimension_semantics=("parallel", "parallel")),
        cost_estimate=pl.CostEstimate(
            flops=2 * n_pad * n_pad * out_p,
            transcendentals=n_pad * n_pad,
            bytes_accessed=n_pad * n_pad * 2 + 4 * n_pad * out_p),
    )(s, t_transposed)


# ----------------------------------------------------------------------------
# Forward wrapper
# ----------------------------------------------------------------------------
def one_hot_directed_gae_forward(x, edge_index, params, graph=None, padded=None,
                                 *, unpad=False):
    """Forward pass. `graph` = precompute_graph(...) and `padded` =
    pad_and_fuse_params(...) should be precomputed and cached by the caller.
    Returns the padded (n_pad, n_pad) bf16 adjacency by default (consumers mask
    / slice the [:n, :n] block, which equals sigmoid(s @ t.T)); pass unpad=True
    for the exact unpadded module output."""
    n = x.shape[0]
    n_pad = _round_up(n, LANE)

    if graph is None:
        graph = precompute_graph(edge_index, n)
    a_fwd, a_bwd = graph
    if padded is None:
        padded = pad_and_fuse_params(params)
    emb_p = padded["w1"].shape[0]

    # initial (one-hot) encoder == row gather of W0 (no matmul, no one-hot DMA);
    # all-zero feature rows fall back to the bias only, matching x @ W0 + b0.
    node_ids = jnp.argmax(x, axis=-1)
    has_feat = jnp.sum(x, axis=-1, keepdims=True) > 0
    xe = jnp.where(has_feat, jnp.take(params["w0"], node_ids, axis=0), 0.0) + params["b0"]
    xe = jnp.pad(xe, ((0, n_pad - n), (0, emb_p - xe.shape[1]))).astype(jnp.bfloat16)

    tm = _pick_tile(n_pad, 256)   # row-panel size (parallel axis / megacore)
    tk = _pick_tile(n_pad, 512)   # A-contraction panel size (reduction axis)

    h = _project_layer1(xe, padded["w1"], padded["b1"], tm=tm)
    g = _gcn_layer1_and_project2(a_fwd, a_bwd, h, padded["ws2"], padded["bs2"],
                                 padded["wt2"], padded["bt2"], tm=tm, tk=tk)
    s, t = _gcn_layer2(a_fwd, a_bwd, g, tm=tm, tk=tk)

    # one small wrapper-side transpose of T (n_pad x out_p, tiny vs. N^2) replaces
    # an in-kernel transpose of T inside every decoder grid step.
    t_transposed = jnp.swapaxes(t, 0, 1)

    adj = _decode_all(s, t_transposed,
                      tm=_pick_tile(n_pad, 512), tn=_pick_tile(n_pad, 2048))
    if unpad:
        adj = adj[:n, :n]
    return adj


# ----------------------------------------------------------------------------
# Pure-JAX f32 reference (unpadded, unfused) for the correctness check.
# ----------------------------------------------------------------------------
def _normalized_dense_adjs_f32(edge_index, num_nodes, alpha=ALPHA, beta=BETA):
    row, col = edge_index[0], edge_index[1]
    loop = jnp.arange(num_nodes, dtype=edge_index.dtype)
    row = jnp.concatenate([row, loop])
    col = jnp.concatenate([col, loop])
    out_deg = jnp.zeros((num_nodes,), jnp.float32).at[row].add(1.0)
    in_deg = jnp.zeros((num_nodes,), jnp.float32).at[col].add(1.0)
    norm_fwd = jnp.power(out_deg, -beta)[row] * jnp.power(in_deg, -alpha)[col]
    norm_bwd = jnp.power(in_deg, -beta)[col] * jnp.power(out_deg, -alpha)[row]
    a_fwd = jnp.zeros((num_nodes, num_nodes), jnp.float32).at[col, row].add(norm_fwd)
    a_bwd = jnp.zeros((num_nodes, num_nodes), jnp.float32).at[row, col].add(norm_bwd)
    return a_fwd, a_bwd


def _reference_forward(x, edge_index, params):
    n = x.shape[0]
    a_fwd, a_bwd = _normalized_dense_adjs_f32(edge_index, n)
    xe = x @ params["w0"] + params["b0"]
    s1 = jax.nn.relu(a_fwd @ (xe @ params["ws1"] + params["bs1"]))
    t1 = jax.nn.relu(a_bwd @ (xe @ params["wt1"] + params["bt1"]))
    s = a_fwd @ (t1 @ params["ws2"] + params["bs2"])
    t = a_bwd @ (s1 @ params["wt2"] + params["bt2"])
    return jax.nn.sigmoid(s @ t.T)


def _init_params(key, feat_dim, embedding_dim, hidden_dim, out_dim):
    ks = jax.random.split(key, 8)
    scale = lambda fan_in: 1.0 / jnp.sqrt(jnp.float32(fan_in))
    return {
        "w0":  jax.random.normal(ks[0], (feat_dim, embedding_dim), jnp.float32) * scale(feat_dim),
        "b0":  jnp.zeros((1, embedding_dim), jnp.float32),
        "ws1": jax.random.normal(ks[1], (embedding_dim, hidden_dim), jnp.float32) * scale(embedding_dim),
        "bs1": jax.random.normal(ks[2], (1, hidden_dim), jnp.float32) * 0.01,
        "wt1": jax.random.normal(ks[3], (embedding_dim, hidden_dim), jnp.float32) * scale(embedding_dim),
        "bt1": jax.random.normal(ks[4], (1, hidden_dim), jnp.float32) * 0.01,
        "ws2": jax.random.normal(ks[5], (hidden_dim, out_dim), jnp.float32) * scale(hidden_dim),
        "bs2": jnp.zeros((1, out_dim), jnp.float32),
        "wt2": jax.random.normal(ks[6], (hidden_dim, out_dim), jnp.float32) * scale(hidden_dim),
        "bt2": jnp.zeros((1, out_dim), jnp.float32),
    }


if __name__ == "__main__":
    N = 200              # number of nodes (exercises padding to N_P = 256)
    FEAT = N             # one-hot feature dim
    EMB, HID, OUT = 32, 64, 32
    NUM_EDGES = 512

    key = jax.random.PRNGKey(0)
    k_perm, k_edges, k_params = jax.random.split(key, 3)

    # One-hot node features (data.x, permuted identity) and random directed edges.
    perm = jax.random.permutation(k_perm, N)
    x = jax.nn.one_hot(perm, FEAT, dtype=jnp.float32)
    edge_index = jax.random.randint(k_edges, (2, NUM_EDGES), 0, N, dtype=jnp.int32)
    params = _init_params(k_params, FEAT, EMB, HID, OUT)

    # Cacheable preprocessing hoisted out of the jitted hot path.
    graph = precompute_graph(edge_index, N)
    padded = pad_and_fuse_params(params)

    fwd = jax.jit(lambda x, params, graph, padded:
                  one_hot_directed_gae_forward(x, None, params, graph, padded))
    adj_pad = jax.block_until_ready(fwd(x, params, graph, padded))

    n_pad = _round_up(N, LANE)
    assert adj_pad.shape == (n_pad, n_pad) and adj_pad.dtype == jnp.bfloat16

    # Correctness check only: slice the real-node block and compare in f32.
    ref = _reference_forward(x, edge_index, params)
    adj = adj_pad[:N, :N].astype(jnp.float32)
    assert bool(jnp.all(jnp.isfinite(adj)))
    max_err = float(jnp.max(jnp.abs(adj - ref)))
    assert max_err < 3e-2, f"max abs err vs f32 reference: {max_err}"

    print("KERNEL_OK")
</pallas_src>

<mosaic_0001>
module attributes {stable_mosaic.version = 11 : i64} {
  func.func @kernel(%arg0: i32, %arg1: memref<256x128xbf16, #tpu.memory_space<vmem>>, %arg2: memref<128x256xbf16, #tpu.memory_space<vmem>>, %arg3: memref<1x256xf32, #tpu.memory_space<vmem>>, %arg4: memref<256x256xbf16, #tpu.memory_space<vmem>>) attributes {dimension_semantics = [#tpu.dimension_semantics<parallel>], iteration_bounds = array<i64: 1>, scalar_prefetch = 0 : i64, scratch_operands = 0 : i64, tpu.core_type = #tpu.core_type<tc>, window_params = [{transform_indices = @transform_0, window_bounds = array<i64: 256, 128>}, {pipeline_mode = #tpu.pipeline_mode<synchronous>, transform_indices = @transform_1, window_bounds = array<i64: 128, 256>}, {pipeline_mode = #tpu.pipeline_mode<synchronous>, transform_indices = @transform_2, window_bounds = array<i64: 1, 256>}, {transform_indices = @transform_3, window_bounds = array<i64: 256, 256>}]} {
    %c0 = arith.constant 0 : index
    %c0_0 = arith.constant 0 : index
    %0 = vector.load %arg1[%c0, %c0_0] : memref<256x128xbf16, #tpu.memory_space<vmem>>, vector<256x128xbf16>
    %c0_1 = arith.constant 0 : index
    %c0_2 = arith.constant 0 : index
    %1 = vector.load %arg2[%c0_1, %c0_2] : memref<128x256xbf16, #tpu.memory_space<vmem>>, vector<128x256xbf16>
    %cst = arith.constant dense<0.000000e+00> : vector<256x256xf32>
    %2 = tpu.matmul %0, %1, %cst {dimension_numbers = #tpu.dot_dimension_numbers<[1], [0], [0], [1], [0, 0, 1, 1], [], []>} : vector<256x128xbf16>, vector<128x256xbf16>, vector<256x256xf32> -> vector<256x256xf32>
    %c0_3 = arith.constant 0 : index
    %c0_4 = arith.constant 0 : index
    %3 = vector.load %arg3[%c0_3, %c0_4] : memref<1x256xf32, #tpu.memory_space<vmem>>, vector<1x256xf32>
    %4 = vector.broadcast %3 : vector<1x256xf32> to vector<256x256xf32>
    %5 = arith.addf %2, %4 : vector<256x256xf32>
    %6 = arith.truncf %5 : vector<256x256xf32> to vector<256x256xbf16>
    %c0_5 = arith.constant 0 : index
    %c0_6 = arith.constant 0 : index
    %7 = vector.load %arg4[%c0_5, %c0_6] : memref<256x256xbf16, #tpu.memory_space<vmem>>, vector<256x256xbf16>
    tpu.vector_store %arg4[%c0_5, %c0_6], %6 {strides = array<i32>} : memref<256x256xbf16, #tpu.memory_space<vmem>>, vector<256x256xbf16>,
    return
  }
  func.func @transform_0(%arg0: i32) -> (i32, i32) {
    %c0_i32 = arith.constant 0 : i32
    %c0_i32_0 = arith.constant 0 : i32
    return %arg0, %c0_i32 : i32, i32
  }
  func.func @transform_1(%arg0: i32) -> (i32, i32) {
    %c0_i32 = arith.constant 0 : i32
    %c0_i32_0 = arith.constant 0 : i32
    %c0_i32_1 = arith.constant 0 : i32
    return %c0_i32, %c0_i32_0 : i32, i32
  }
  func.func @transform_2(%arg0: i32) -> (i32, i32) {
    %c0_i32 = arith.constant 0 : i32
    %c0_i32_0 = arith.constant 0 : i32
    %c0_i32_1 = arith.constant 0 : i32
    return %c0_i32, %c0_i32_0 : i32, i32
  }
  func.func @transform_3(%arg0: i32) -> (i32, i32) {
    %c0_i32 = arith.constant 0 : i32
    %c0_i32_0 = arith.constant 0 : i32
    return %arg0, %c0_i32 : i32, i32
  }
}

module attributes {stable_mosaic.version = 11 : i64} {
  func.func @kernel(%arg0: i32, %arg1: i32, %arg2: memref<256x256xbf16, #tpu.memory_space<vmem>>, %arg3: memref<256x256xbf16, #tpu.memory_space<vmem>>, %arg4: memref<256x256xbf16, #tpu.memory_space<vmem>>, %arg5: memref<128x128xbf16, #tpu.memory_space<vmem>>, %arg6: memref<1x128xf32, #tpu.memory_space<vmem>>, %arg7: memref<128x128xbf16, #tpu.memory_space<vmem>>, %arg8: memref<1x128xf32, #tpu.memory_space<vmem>>, %arg9: memref<256x256xbf16, #tpu.memory_space<vmem>>, %arg10: memref<256x128xf32, #tpu.memory_space<vmem>>, %arg11: memref<256x128xf32, #tpu.memory_space<vmem>>) attributes {dimension_semantics = [#tpu.dimension_semantics<parallel>, #tpu.dimension_semantics<arbitrary>], iteration_bounds = array<i64: 1, 1>, scalar_prefetch = 0 : i64, scratch_operands = 2 : i64, tpu.core_type = #tpu.core_type<tc>, window_params = [{transform_indices = @transform_0, window_bounds = array<i64: 256, 256>}, {transform_indices = @transform_1, window_bounds = array<i64: 256, 256>}, {transform_indices = @transform_2, window_bounds = array<i64: 256, 256>}, {pipeline_mode = #tpu.pipeline_mode<synchronous>, transform_indices = @transform_3, window_bounds = array<i64: 128, 128>}, {pipeline_mode = #tpu.pipeline_mode<synchronous>, transform_indices = @transform_4, window_bounds = array<i64: 1, 128>}, {pipeline_mode = #tpu.pipeline_mode<synchronous>, transform_indices = @transform_5, window_bounds = array<i64: 128, 128>}, {pipeline_mode = #tpu.pipeline_mode<synchronous>, transform_indices = @transform_6, window_bounds = array<i64: 1, 128>}, {transform_indices = @transform_7, window_bounds = array<i64: 256, 256>}]} {
    %c0_i32 = arith.constant 0 : i32
    %0 = arith.cmpi eq, %arg1, %c0_i32 : i32
    %1 = arith.extui %0 : i1 to i32
    %c0_i32_0 = arith.constant 0 : i32
    %2 = arith.cmpi ne, %1, %c0_i32_0 : i32
    scf.if %2 {
      %cst_17 = arith.constant 0.000000e+00 : f32
      %19 = vector.broadcast %cst_17 : f32 to vector<256x128xf32>
      %c0_18 = arith.constant 0 : index
      %c0_19 = arith.constant 0 : index
      %20 = vector.load %arg10[%c0_18, %c0_19] : memref<256x128xf32, #tpu.memory_space<vmem>>, vector<256x128xf32>
      tpu.vector_store %arg10[%c0_18, %c0_19], %19 {strides = array<i32>} : memref<256x128xf32, #tpu.memory_space<vmem>>, vector<256x128xf32>,
      %cst_20 = arith.constant 0.000000e+00 : f32
      %21 = vector.broadcast %cst_20 : f32 to vector<256x128xf32>
      %c0_21 = arith.constant 0 : index
      %c0_22 = arith.constant 0 : index
      %22 = vector.load %arg11[%c0_21, %c0_22] : memref<256x128xf32, #tpu.memory_space<vmem>>, vector<256x128xf32>
      tpu.vector_store %arg11[%c0_21, %c0_22], %21 {strides = array<i32>} : memref<256x128xf32, #tpu.memory_space<vmem>>, vector<256x128xf32>,
    } else {
    }
    %c0 = arith.constant 0 : index
    %c0_1 = arith.constant 0 : index
    %3 = vector.load %arg4[%c0, %c0_1] : memref<256x256xbf16, #tpu.memory_space<vmem>>, vector<256x256xbf16>
    %c0_2 = arith.constant 0 : index
    %c0_3 = arith.constant 0 : index
    %4 = vector.load %arg10[%c0_2, %c0_3] : memref<256x128xf32, #tpu.memory_space<vmem>>, vector<256x128xf32>
    %c0_4 = arith.constant 0 : index
    %c0_5 = arith.constant 0 : index
    %5 = vector.load %arg2[%c0_4, %c0_5] : memref<256x256xbf16, #tpu.memory_space<vmem>>, vector<256x256xbf16>
    %6 = vector.extract_strided_slice %3 {offsets = [0, 0], sizes = [256, 128], strides = [1, 1]} : vector<256x256xbf16> to vector<256x128xbf16>
    %cst = arith.constant dense<0.000000e+00> : vector<256x128xf32>
    %7 = tpu.matmul %5, %6, %cst {dimension_numbers = #tpu.dot_dimension_numbers<[1], [0], [0], [1], [0, 0, 1, 1], [], []>} : vector<256x256xbf16>, vector<256x128xbf16>, vector<256x128xf32> -> vector<256x128xf32>
    %8 = arith.addf %4, %7 : vector<256x128xf32>
    %c0_6 = arith.constant 0 : index
    %c0_7 = arith.constant 0 : index
    %9 = vector.load %arg10[%c0_6, %c0_7] : memref<256x128xf32, #tpu.memory_space<vmem>>, vector<256x128xf32>
    tpu.vector_store %arg10[%c0_6, %c0_7], %8 {strides = array<i32>} : memref<256x128xf32, #tpu.memory_space<vmem>>, vector<256x128xf32>,
    %c0_8 = arith.constant 0 : index
    %c0_9 = arith.constant 0 : index
    %10 = vector.load %arg11[%c0_8, %c0_9] : memref<256x128xf32, #tpu.memory_space<vmem>>, vector<256x128xf32>
    %c0_10 = arith.constant 0 : index
    %c0_11 = arith.constant 0 : index
    %11 = vector.load %arg3[%c0_10, %c0_11] : memref<256x256xbf16, #tpu.memory_space<vmem>>, vector<256x256xbf16>
    %12 = vector.extract_strided_slice %3 {offsets = [0, 128], sizes = [256, 128], strides = [1, 1]} : vector<256x256xbf16> to vector<256x128xbf16>
    %cst_12 = arith.constant dense<0.000000e+00> : vector<256x128xf32>
    %13 = tpu.matmul %11, %12, %cst_12 {dimension_numbers = #tpu.dot_dimension_numbers<[1], [0], [0], [1], [0, 0, 1, 1], [], []>} : vector<256x256xbf16>, vector<256x128xbf16>, vector<256x128xf32> -> vector<256x128xf32>
    %14 = arith.addf %10, %13 : vector<256x128xf32>
    %c0_13 = arith.constant 0 : index
    %c0_14 = arith.constant 0 : index
    %15 = vector.load %arg11[%c0_13, %c0_14] : memref<256x128xf32, #tpu.memory_space<vmem>>, vector<256x128xf32>
    tpu.vector_store %arg11[%c0_13, %c0_14], %14 {strides = array<i32>} : memref<256x128xf32, #tpu.memory_space<vmem>>, vector<256x128xf32>,
    %c0_i32_15 = arith.constant 0 : i32
    %16 = arith.cmpi eq, %arg1, %c0_i32_15 : i32
    %17 = arith.extui %16 : i1 to i32
    %c0_i32_16 = arith.constant 0 : i32
    %18 = arith.cmpi ne, %17, %c0_i32_16 : i32
    scf.if %18 {
      %c0_17 = arith.constant 0 : index
      %c0_18 = arith.constant 0 : index
      %19 = vector.load %arg10[%c0_17, %c0_18] : memref<256x128xf32, #tpu.memory_space<vmem>>, vector<256x128xf32>
      %cst_19 = arith.constant 0.000000e+00 : f32
      %20 = vector.broadcast %cst_19 : f32 to vector<256x128xf32>
      %21 = arith.maximumf %19, %20 : vector<256x128xf32>
      %22 = arith.truncf %21 : vector<256x128xf32> to vector<256x128xbf16>
      %c0_20 = arith.constant 0 : index
      %c0_21 = arith.constant 0 : index
      %23 = vector.load %arg11[%c0_20, %c0_21] : memref<256x128xf32, #tpu.memory_space<vmem>>, vector<256x128xf32>
      %cst_22 = arith.constant 0.000000e+00 : f32
      %24 = vector.broadcast %cst_22 : f32 to vector<256x128xf32>
      %25 = arith.maximumf %23, %24 : vector<256x128xf32>
      %26 = arith.truncf %25 : vector<256x128xf32> to vector<256x128xbf16>
      %c0_23 = arith.constant 0 : index
      %c0_24 = arith.constant 0 : index
      %27 = vector.load %arg5[%c0_23, %c0_24] : memref<128x128xbf16, #tpu.memory_space<vmem>>, vector<128x128xbf16>
      %cst_25 = arith.constant dense<0.000000e+00> : vector<256x128xf32>
      %28 = tpu.matmul %26, %27, %cst_25 {dimension_numbers = #tpu.dot_dimension_numbers<[1], [0], [0], [1], [0, 0, 1, 1], [], []>} : vector<256x128xbf16>, vector<128x128xbf16>, vector<256x128xf32> -> vector<256x128xf32>
      %c0_26 = arith.constant 0 : index
      %c0_27 = arith.constant 0 : index
      %29 = vector.load %arg6[%c0_26, %c0_27] : memref<1x128xf32, #tpu.memory_space<vmem>>, vector<1x128xf32>
      %30 = vector.broadcast %29 : vector<1x128xf32> to vector<256x128xf32>
      %31 = arith.addf %28, %30 : vector<256x128xf32>
      %c0_28 = arith.constant 0 : index
      %c0_29 = arith.constant 0 : index
      %32 = vector.load %arg7[%c0_28, %c0_29] : memref<128x128xbf16, #tpu.memory_space<vmem>>, vector<128x128xbf16>
      %cst_30 = arith.constant dense<0.000000e+00> : vector<256x128xf32>
      %33 = tpu.matmul %22, %32, %cst_30 {dimension_numbers = #tpu.dot_dimension_numbers<[1], [0], [0], [1], [0, 0, 1, 1], [], []>} : vector<256x128xbf16>, vector<128x128xbf16>, vector<256x128xf32> -> vector<256x128xf32>
      %c0_31 = arith.constant 0 : index
      %c0_32 = arith.constant 0 : index
      %34 = vector.load %arg8[%c0_31, %c0_32] : memref<1x128xf32, #tpu.memory_space<vmem>>, vector<1x128xf32>
      %35 = vector.broadcast %34 : vector<1x128xf32> to vector<256x128xf32>
      %36 = arith.addf %33, %35 : vector<256x128xf32>
      %37 = arith.truncf %31 : vector<256x128xf32> to vector<256x128xbf16>
      %c0_33 = arith.constant 0 : index
      %c0_34 = arith.constant 0 : index
      %38 = vector.load %arg9[%c0_33, %c0_34] : memref<256x256xbf16, #tpu.memory_space<vmem>>, vector<256x128xbf16>
      tpu.vector_store %arg9[%c0_33, %c0_34], %37 {strides = array<i32>} : memref<256x256xbf16, #tpu.memory_space<vmem>>, vector<256x128xbf16>,
      %39 = arith.truncf %36 : vector<256x128xf32> to vector<256x128xbf16>
      %c0_35 = arith.constant 0 : index
      %c128 = arith.constant 128 : index
      %40 = vector.load %arg9[%c0_35, %c128] : memref<256x256xbf16, #tpu.memory_space<vmem>>, vector<256x128xbf16>
      tpu.vector_store %arg9[%c0_35, %c128], %39 {strides = array<i32>} : memref<256x256xbf16, #tpu.memory_space<vmem>>, vector<256x128xbf16>,
    } else {
    }
    return
  }
  func.func @transform_0(%arg0: i32, %arg1: i32) -> (i32, i32) {
    %c0_i32 = arith.constant 0 : i32
    return %arg0, %arg1 : i32, i32
  }
  func.func @transform_1(%arg0: i32, %arg1: i32) -> (i32, i32) {
    %c0_i32 = arith.constant 0 : i32
    return %arg0, %arg1 : i32, i32
  }
  func.func @transform_2(%arg0: i32, %arg1: i32) -> (i32, i32) {
    %c0_i32 = arith.constant 0 : i32
    %c0_i32_0 = arith.constant 0 : i32
    return %arg1, %c0_i32 : i32, i32
  }
  func.func @transform_3(%arg0: i32, %arg1: i32) -> (i32, i32) {
    %c0_i32 = arith.constant 0 : i32
    %c0_i32_0 = arith.constant 0 : i32
    %c0_i32_1 = arith.constant 0 : i32
    return %c0_i32, %c0_i32_0 : i32, i32
  }
  func.func @transform_4(%arg0: i32, %arg1: i32) -> (i32, i32) {
    %c0_i32 = arith.constant 0 : i32
    %c0_i32_0 = arith.constant 0 : i32
    %c0_i32_1 = arith.constant 0 : i32
    return %c0_i32, %c0_i32_0 : i32, i32
  }
  func.func @transform_5(%arg0: i32, %arg1: i32) -> (i32, i32) {
    %c0_i32 = arith.constant 0 : i32
    %c0_i32_0 = arith.constant 0 : i32
    %c0_i32_1 = arith.constant 0 : i32
    return %c0_i32, %c0_i32_0 : i32, i32
  }
  func.func @transform_6(%arg0: i32, %arg1: i32) -> (i32, i32) {
    %c0_i32 = arith.constant 0 : i32
    %c0_i32_0 = arith.constant 0 : i32
    %c0_i32_1 = arith.constant 0 : i32
    return %c0_i32, %c0_i32_0 : i32, i32
  }
  func.func @transform_7(%arg0: i32, %arg1: i32) -> (i32, i32) {
    %c0_i32 = arith.constant 0 : i32
    %c0_i32_0 = arith.constant 0 : i32
    return %arg0, %c0_i32 : i32, i32
  }
}

module attributes {stable_mosaic.version = 11 : i64} {
  func.func @kernel(%arg0: i32, %arg1: i32, %arg2: memref<256x256xbf16, #tpu.memory_space<vmem>>, %arg3: memref<256x256xbf16, #tpu.memory_space<vmem>>, %arg4: memref<256x256xbf16, #tpu.memory_space<vmem>>, %arg5: memref<256x128xbf16, #tpu.memory_space<vmem>>, %arg6: memref<256x128xbf16, #tpu.memory_space<vmem>>, %arg7: memref<256x128xf32, #tpu.memory_space<vmem>>, %arg8: memref<256x128xf32, #tpu.memory_space<vmem>>) attributes {dimension_semantics = [#tpu.dimension_semantics<parallel>, #tpu.dimension_semantics<arbitrary>], iteration_bounds = array<i64: 1, 1>, scalar_prefetch = 0 : i64, scratch_operands = 2 : i64, tpu.core_type = #tpu.core_type<tc>, window_params = [{transform_indices = @transform_0, window_bounds = array<i64: 256, 256>}, {transform_indices = @transform_1, window_bounds = array<i64: 256, 256>}, {transform_indices = @transform_2, window_bounds = array<i64: 256, 256>}, {transform_indices = @transform_3, window_bounds = array<i64: 256, 128>}, {transform_indices = @transform_4, window_bounds = array<i64: 256, 128>}]} {
    %c0_i32 = arith.constant 0 : i32
    %0 = arith.cmpi eq, %arg1, %c0_i32 : i32
    %1 = arith.extui %0 : i1 to i32
    %c0_i32_0 = arith.constant 0 : i32
    %2 = arith.cmpi ne, %1, %c0_i32_0 : i32
    scf.if %2 {
      %cst_17 = arith.constant 0.000000e+00 : f32
      %19 = vector.broadcast %cst_17 : f32 to vector<256x128xf32>
      %c0_18 = arith.constant 0 : index
      %c0_19 = arith.constant 0 : index
      %20 = vector.load %arg7[%c0_18, %c0_19] : memref<256x128xf32, #tpu.memory_space<vmem>>, vector<256x128xf32>
      tpu.vector_store %arg7[%c0_18, %c0_19], %19 {strides = array<i32>} : memref<256x128xf32, #tpu.memory_space<vmem>>, vector<256x128xf32>,
      %cst_20 = arith.constant 0.000000e+00 : f32
      %21 = vector.broadcast %cst_20 : f32 to vector<256x128xf32>
      %c0_21 = arith.constant 0 : index
      %c0_22 = arith.constant 0 : index
      %22 = vector.load %arg8[%c0_21, %c0_22] : memref<256x128xf32, #tpu.memory_space<vmem>>, vector<256x128xf32>
      tpu.vector_store %arg8[%c0_21, %c0_22], %21 {strides = array<i32>} : memref<256x128xf32, #tpu.memory_space<vmem>>, vector<256x128xf32>,
    } else {
    }
    %c0 = arith.constant 0 : index
    %c0_1 = arith.constant 0 : index
    %3 = vector.load %arg4[%c0, %c0_1] : memref<256x256xbf16, #tpu.memory_space<vmem>>, vector<256x256xbf16>
    %c0_2 = arith.constant 0 : index
    %c0_3 = arith.constant 0 : index
    %4 = vector.load %arg7[%c0_2, %c0_3] : memref<256x128xf32, #tpu.memory_space<vmem>>, vector<256x128xf32>
    %c0_4 = arith.constant 0 : index
    %c0_5 = arith.constant 0 : index
    %5 = vector.load %arg2[%c0_4, %c0_5] : memref<256x256xbf16, #tpu.memory_space<vmem>>, vector<256x256xbf16>
    %6 = vector.extract_strided_slice %3 {offsets = [0, 0], sizes = [256, 128], strides = [1, 1]} : vector<256x256xbf16> to vector<256x128xbf16>
    %cst = arith.constant dense<0.000000e+00> : vector<256x128xf32>
    %7 = tpu.matmul %5, %6, %cst {dimension_numbers = #tpu.dot_dimension_numbers<[1], [0], [0], [1], [0, 0, 1, 1], [], []>} : vector<256x256xbf16>, vector<256x128xbf16>, vector<256x128xf32> -> vector<256x128xf32>
    %8 = arith.addf %4, %7 : vector<256x128xf32>
    %c0_6 = arith.constant 0 : index
    %c0_7 = arith.constant 0 : index
    %9 = vector.load %arg7[%c0_6, %c0_7] : memref<256x128xf32, #tpu.memory_space<vmem>>, vector<256x128xf32>
    tpu.vector_store %arg7[%c0_6, %c0_7], %8 {strides = array<i32>} : memref<256x128xf32, #tpu.memory_space<vmem>>, vector<256x128xf32>,
    %c0_8 = arith.constant 0 : index
    %c0_9 = arith.constant 0 : index
    %10 = vector.load %arg8[%c0_8, %c0_9] : memref<256x128xf32, #tpu.memory_space<vmem>>, vector<256x128xf32>
    %c0_10 = arith.constant 0 : index
    %c0_11 = arith.constant 0 : index
    %11 = vector.load %arg3[%c0_10, %c0_11] : memref<256x256xbf16, #tpu.memory_space<vmem>>, vector<256x256xbf16>
    %12 = vector.extract_strided_slice %3 {offsets = [0, 128], sizes = [256, 128], strides = [1, 1]} : vector<256x256xbf16> to vector<256x128xbf16>
    %cst_12 = arith.constant dense<0.000000e+00> : vector<256x128xf32>
    %13 = tpu.matmul %11, %12, %cst_12 {dimension_numbers = #tpu.dot_dimension_numbers<[1], [0], [0], [1], [0, 0, 1, 1], [], []>} : vector<256x256xbf16>, vector<256x128xbf16>, vector<256x128xf32> -> vector<256x128xf32>
    %14 = arith.addf %10, %13 : vector<256x128xf32>
    %c0_13 = arith.constant 0 : index
    %c0_14 = arith.constant 0 : index
    %15 = vector.load %arg8[%c0_13, %c0_14] : memref<256x128xf32, #tpu.memory_space<vmem>>, vector<256x128xf32>
    tpu.vector_store %arg8[%c0_13, %c0_14], %14 {strides = array<i32>} : memref<256x128xf32, #tpu.memory_space<vmem>>, vector<256x128xf32>,
    %c0_i32_15 = arith.constant 0 : i32
    %16 = arith.cmpi eq, %arg1, %c0_i32_15 : i32
    %17 = arith.extui %16 : i1 to i32
    %c0_i32_16 = arith.constant 0 : i32
    %18 = arith.cmpi ne, %17, %c0_i32_16 : i32
    scf.if %18 {
      %c0_17 = arith.constant 0 : index
      %c0_18 = arith.constant 0 : index
      %19 = vector.load %arg7[%c0_17, %c0_18] : memref<256x128xf32, #tpu.memory_space<vmem>>, vector<256x128xf32>
      %20 = arith.truncf %19 : vector<256x128xf32> to vector<256x128xbf16>
      %c0_19 = arith.constant 0 : index
      %c0_20 = arith.constant 0 : index
      %21 = vector.load %arg5[%c0_19, %c0_20] : memref<256x128xbf16, #tpu.memory_space<vmem>>, vector<256x128xbf16>
      tpu.vector_store %arg5[%c0_19, %c0_20], %20 {strides = array<i32>} : memref<256x128xbf16, #tpu.memory_space<vmem>>, vector<256x128xbf16>,
      %c0_21 = arith.constant 0 : index
      %c0_22 = arith.constant 0 : index
      %22 = vector.load %arg8[%c0_21, %c0_22] : memref<256x128xf32, #tpu.memory_space<vmem>>, vector<256x128xf32>
      %23 = arith.truncf %22 : vector<256x128xf32> to vector<256x128xbf16>
      %c0_23 = arith.constant 0 : index
      %c0_24 = arith.constant 0 : index
      %24 = vector.load %arg6[%c0_23, %c0_24] : memref<256x128xbf16, #tpu.memory_space<vmem>>, vector<256x128xbf16>
      tpu.vector_store %arg6[%c0_23, %c0_24], %23 {strides = array<i32>} : memref<256x128xbf16, #tpu.memory_space<vmem>>, vector<256x128xbf16>,
    } else {
    }
    return
  }
  func.func @transform_0(%arg0: i32, %arg1: i32) -> (i32, i32) {
    %c0_i32 = arith.constant 0 : i32
    return %arg0, %arg1 : i32, i32
  }
  func.func @transform_1(%arg0: i32, %arg1: i32) -> (i32, i32) {
    %c0_i32 = arith.constant 0 : i32
    return %arg0, %arg1 : i32, i32
  }
  func.func @transform_2(%arg0: i32, %arg1: i32) -> (i32, i32) {
    %c0_i32 = arith.constant 0 : i32
    %c0_i32_0 = arith.constant 0 : i32
    return %arg1, %c0_i32 : i32, i32
  }
  func.func @transform_3(%arg0: i32, %arg1: i32) -> (i32, i32) {
    %c0_i32 = arith.constant 0 : i32
    %c0_i32_0 = arith.constant 0 : i32
    return %arg0, %c0_i32 : i32, i32
  }
  func.func @transform_4(%arg0: i32, %arg1: i32) -> (i32, i32) {
    %c0_i32 = arith.constant 0 : i32
    %c0_i32_0 = arith.constant 0 : i32
    return %arg0, %c0_i32 : i32, i32
  }
}

module attributes {stable_mosaic.version = 11 : i64} {
  func.func @kernel(%arg0: i32, %arg1: i32, %arg2: memref<256x128xbf16, #tpu.memory_space<vmem>>, %arg3: memref<128x256xbf16, #tpu.memory_space<vmem>>, %arg4: memref<256x256xbf16, #tpu.memory_space<vmem>>) attributes {dimension_semantics = [#tpu.dimension_semantics<parallel>, #tpu.dimension_semantics<parallel>], iteration_bounds = array<i64: 1, 1>, scalar_prefetch = 0 : i64, scratch_operands = 0 : i64, tpu.core_type = #tpu.core_type<tc>, window_params = [{transform_indices = @transform_0, window_bounds = array<i64: 256, 128>}, {transform_indices = @transform_1, window_bounds = array<i64: 128, 256>}, {transform_indices = @transform_2, window_bounds = array<i64: 256, 256>}]} {
    %c0 = arith.constant 0 : index
    %c0_0 = arith.constant 0 : index
    %0 = vector.load %arg2[%c0, %c0_0] : memref<256x128xbf16, #tpu.memory_space<vmem>>, vector<256x128xbf16>
    %c0_1 = arith.constant 0 : index
    %c0_2 = arith.constant 0 : index
    %1 = vector.load %arg3[%c0_1, %c0_2] : memref<128x256xbf16, #tpu.memory_space<vmem>>, vector<128x256xbf16>
    %cst = arith.constant dense<0.000000e+00> : vector<256x256xf32>
    %2 = tpu.matmul %0, %1, %cst {dimension_numbers = #tpu.dot_dimension_numbers<[1], [0], [0], [1], [0, 0, 1, 1], [], []>} : vector<256x128xbf16>, vector<128x256xbf16>, vector<256x256xf32> -> vector<256x256xf32>
    %3 = arith.negf %2 : vector<256x256xf32>
    %4 = math.exp %3 : vector<256x256xf32>
    %cst_3 = arith.constant 1.000000e+00 : f32
    %5 = vector.broadcast %cst_3 : f32 to vector<256x256xf32>
    %6 = arith.addf %5, %4 : vector<256x256xf32>
    %7 = arith.divf %5, %6 : vector<256x256xf32>
    %8 = arith.truncf %7 : vector<256x256xf32> to vector<256x256xbf16>
    %c0_4 = arith.constant 0 : index
    %c0_5 = arith.constant 0 : index
    %9 = vector.load %arg4[%c0_4, %c0_5] : memref<256x256xbf16, #tpu.memory_space<vmem>>, vector<256x256xbf16>
    tpu.vector_store %arg4[%c0_4, %c0_5], %8 {strides = array<i32>} : memref<256x256xbf16, #tpu.memory_space<vmem>>, vector<256x256xbf16>,
    return
  }
  func.func @transform_0(%arg0: i32, %arg1: i32) -> (i32, i32) {
    %c0_i32 = arith.constant 0 : i32
    %c0_i32_0 = arith.constant 0 : i32
    return %arg0, %c0_i32 : i32, i32
  }
  func.func @transform_1(%arg0: i32, %arg1: i32) -> (i32, i32) {
    %c0_i32 = arith.constant 0 : i32
    %c0_i32_0 = arith.constant 0 : i32
    return %c0_i32, %arg1 : i32, i32
  }
  func.func @transform_2(%arg0: i32, %arg1: i32) -> (i32, i32) {
    %c0_i32 = arith.constant 0 : i32
    return %arg0, %arg1 : i32, i32
  }
}

</mosaic_0001>

<llo_original>
// kernel: _lambda_.4
$region0: #{_lambda_.4}
  #allocation0 [shape = 'u32[]', space=smem, size = 0x4, offset = 0x4, fixed_abs, tag = 'smem constant byte address 0x4 - core index']
  #allocation1 [shape = 'u32[144,128]{1,0:T(1,128)}', space=vmem, size = 0x12000, scoped, tag = 'internal scratch']
  %s0 = inlined_call_operand.vmem [shape: bf16[256,128], index: 0, kind: input, shape index: {}]
  %s1 = inlined_call_operand.vmem [shape: bf16[128,256], index: 1, kind: input, shape index: {}]
  %s2 = inlined_call_operand.vmem [shape: f32[1,256], index: 2, kind: input, shape index: {}]
  %s3 = inlined_call_operand.vmem [shape: bf16[256,256], index: 3, kind: output, shape index: {}]
  %s4 = sld [smem:[#allocation0]]
  $region22: #{_lambda_.4} parent=0
    _
  %s6 = ssub.s32 1, %s4
  %s7 = scalar_select 0, %s6, %s4
  // Predicated region
  $region2: #{_lambda_.4} parent=0 // pred_check
    _
  $region3: #{_lambda_.4} parent=0 // pred_check_branch
    %9 = sbr.rel (0) target = $region5
  $region4: #{_lambda_.4} parent=0 // pred_region
    _
  $region5: #{_lambda_.4} parent=0 // pred_fallthru
    _
  // Predicated region
  $region6: #{_lambda_.4} parent=0 // pred_check
    _
  $region7: #{_lambda_.4} parent=0 // pred_check_branch
    %11 = sbr.rel (0) target = $region9
  $region8: #{_lambda_.4} parent=0 // pred_region
    _
  $region9: #{_lambda_.4} parent=0 // pred_fallthru
    _
  // Predicated region
  $region10: #{_lambda_.4} parent=0 // pred_check
    _
  $region11: #{_lambda_.4} parent=0 // pred_check_branch
    %13 = sbr.rel (0) target = $region13
  $region12: #{_lambda_.4} parent=0 // pred_region
    _
  $region13: #{_lambda_.4} parent=0 // pred_fallthru
    _
  %v15 = vld [vmem:[%s0] sm:$0xf]
  %v16 = vld [vmem:[%s0 + $0x4] sm:$0xf]
  %v17 = vld [vmem:[%s0 + $0x8] sm:$0xf]
  %v18 = vld [vmem:[%s0 + $0xc] sm:$0xf]
  %v19 = vld [vmem:[%s0 + $0x10] sm:$0xf]
  %v20 = vld [vmem:[%s0 + $0x14] sm:$0xf]
  %v21 = vld [vmem:[%s0 + $0x18] sm:$0xf]
  %v22 = vld [vmem:[%s0 + $0x1c] sm:$0xf]
  %v23 = vld [vmem:[%s0 + $0x20] sm:$0xf]
  %v24 = vld [vmem:[%s0 + $0x24] sm:$0xf]
  %v25 = vld [vmem:[%s0 + $0x28] sm:$0xf]
  %v26 = vld [vmem:[%s0 + $0x2c] sm:$0xf]
  %v27 = vld [vmem:[%s0 + $0x30] sm:$0xf]
  %v28 = vld [vmem:[%s0 + $0x34] sm:$0xf]
  %v29 = vld [vmem:[%s0 + $0x38] sm:$0xf]
  %v30 = vld [vmem:[%s0 + $0x3c] sm:$0xf]
  %v31 = vld [vmem:[%s0 + $0x40] sm:$0xf]
  %v32 = vld [vmem:[%s0 + $0x44] sm:$0xf]
  %v33 = vld [vmem:[%s0 + $0x48] sm:$0xf]
  %v34 = vld [vmem:[%s0 + $0x4c] sm:$0xf]
  %v35 = vld [vmem:[%s0 + $0x50] sm:$0xf]
  %v36 = vld [vmem:[%s0 + $0x54] sm:$0xf]
  %v37 = vld [vmem:[%s0 + $0x58] sm:$0xf]
  %v38 = vld [vmem:[%s0 + $0x5c] sm:$0xf]
  %v39 = vld [vmem:[%s0 + $0x60] sm:$0xf]
  %v40 = vld [vmem:[%s0 + $0x64] sm:$0xf]
  %v41 = vld [vmem:[%s0 + $0x68] sm:$0xf]
  %v42 = vld [vmem:[%s0 + $0x6c] sm:$0xf]
  %v43 = vld [vmem:[%s0 + $0x70] sm:$0xf]
  %v44 = vld [vmem:[%s0 + $0x74] sm:$0xf]
  %v45 = vld [vmem:[%s0 + $0x78] sm:$0xf]
  %v46 = vld [vmem:[%s0 + $0x7c] sm:$0xf]
  %v47 = vld [vmem:[%s1] sm:$0xff]
  %v48 = vld [vmem:[%s1 + $0x8] sm:$0xff]
  %v49 = vld [vmem:[%s1 + $0x10] sm:$0xff]
  %v50 = vld [vmem:[%s1 + $0x18] sm:$0xff]
  %v51 = vld [vmem:[%s1 + $0x20] sm:$0xff]
  %v52 = vld [vmem:[%s1 + $0x28] sm:$0xff]
  %v53 = vld [vmem:[%s1 + $0x30] sm:$0xff]
  %v54 = vld [vmem:[%s1 + $0x38] sm:$0xff]
  %v55 = vld [vmem:[%s1 + $0x40] sm:$0xff]
  %v56 = vld [vmem:[%s1 + $0x48] sm:$0xff]
  %v57 = vld [vmem:[%s1 + $0x50] sm:$0xff]
  %v58 = vld [vmem:[%s1 + $0x58] sm:$0xff]
  %v59 = vld [vmem:[%s1 + $0x60] sm:$0xff]
  %v60 = vld [vmem:[%s1 + $0x68] sm:$0xff]
  %v61 = vld [vmem:[%s1 + $0x70] sm:$0xff]
  %v62 = vld [vmem:[%s1 + $0x78] sm:$0xff]
  %v63 = vld [vmem:[%s2] sm:$0x3]
  %v65 = vlaneseq
  %v66 = vshrl.u32 %v65, 7
  %v67 = vsub.s32 0, %v66
  %v68 = vrot.slane %v63, %v67
  %v69 = vlaneseq
  %v70 = vshrl.u32 %v69, 7
  %v71 = vsub.s32 1, %v70
  %v72 = vrot.slane %v63, %v71
  %v107 = vunpack.c.l.b16 %v15
  %v108 = vunpack.c.l.b16 %v16
  %v109 = vunpack.c.l.b16 %v17
  %v110 = vunpack.c.l.b16 %v18
  %v111 = vunpack.c.l.b16 %v19
  %v112 = vunpack.c.l.b16 %v20
  %v113 = vunpack.c.l.b16 %v21
  %v114 = vunpack.c.l.b16 %v22
  %v115 = vunpack.c.l.b16 %v23
  %v116 = vunpack.c.l.b16 %v24
  %v117 = vunpack.c.l.b16 %v25
  %v118 = vunpack.c.l.b16 %v26
  %v119 = vunpack.c.l.b16 %v27
  %v120 = vunpack.c.l.b16 %v28
  %v121 = vunpack.c.l.b16 %v29
  %v122 = vunpack.c.l.b16 %v30
  %v123 = vunpack.c.l.b16 %v31
  %v124 = vunpack.c.l.b16 %v32
  %v125 = vunpack.c.l.b16 %v33
  %v126 = vunpack.c.l.b16 %v34
  %v127 = vunpack.c.l.b16 %v35
  %v128 = vunpack.c.l.b16 %v36
  %v129 = vunpack.c.l.b16 %v37
  %v130 = vunpack.c.l.b16 %v38
  %v131 = vunpack.c.l.b16 %v39
  %v132 = vunpack.c.l.b16 %v40
  %v133 = vunpack.c.l.b16 %v41
  %v134 = vunpack.c.l.b16 %v42
  %v135 = vunpack.c.l.b16 %v43
  %v136 = vunpack.c.l.b16 %v44
  %v137 = vunpack.c.l.b16 %v45
  %v138 = vunpack.c.l.b16 %v46
  %v139 = vpack.c.b16 %v108, %v107
  %v140 = vpack.c.b16 %v110, %v109
  %v141 = vpack.c.b16 %v112, %v111
  %v142 = vpack.c.b16 %v114, %v113
  %v143 = vpack.c.b16 %v116, %v115
  %v144 = vpack.c.b16 %v118, %v117
  %v145 = vpack.c.b16 %v120, %v119
  %v146 = vpack.c.b16 %v122, %v121
  %v147 = vpack.c.b16 %v124, %v123
  %v148 = vpack.c.b16 %v126, %v125
  %v149 = vpack.c.b16 %v128, %v127
  %v150 = vpack.c.b16 %v130, %v129
  %v151 = vpack.c.b16 %v132, %v131
  %v152 = vpack.c.b16 %v134, %v133
  %v153 = vpack.c.b16 %v136, %v135
  %v154 = vpack.c.b16 %v138, %v137
  %v187 = vunpack.c.l.b16 %v47
  %v188 = vunpack.c.h.b16 %v47
  %v189 = vunpack.c.l.b16 %v48
  %v190 = vunpack.c.h.b16 %v48
  %v191 = vunpack.c.l.b16 %v49
  %v192 = vunpack.c.h.b16 %v49
  %v193 = vunpack.c.l.b16 %v50
  %v194 = vunpack.c.h.b16 %v50
  %v195 = vunpack.c.l.b16 %v51
  %v196 = vunpack.c.h.b16 %v51
  %v197 = vunpack.c.l.b16 %v52
  %v198 = vunpack.c.h.b16 %v52
  %v199 = vunpack.c.l.b16 %v53
  %v200 = vunpack.c.h.b16 %v53
  %v201 = vunpack.c.l.b16 %v54
  %v202 = vunpack.c.h.b16 %v54
  %v203 = vunpack.c.l.b16 %v55
  %v204 = vunpack.c.h.b16 %v55
  %v205 = vunpack.c.l.b16 %v56
  %v206 = vunpack.c.h.b16 %v56
  %v207 = vunpack.c.l.b16 %v57
  %v208 = vunpack.c.h.b16 %v57
  %v209 = vunpack.c.l.b16 %v58
  %v210 = vunpack.c.h.b16 %v58
  %v211 = vunpack.c.l.b16 %v59
  %v212 = vunpack.c.h.b16 %v59
  %v213 = vunpack.c.l.b16 %v60
  %v214 = vunpack.c.h.b16 %v60
  %v215 = vunpack.c.l.b16 %v61
  %v216 = vunpack.c.h.b16 %v61
  %v217 = vunpack.c.l.b16 %v62
  %v218 = vunpack.c.h.b16 %v62
  %v219 = vpack.c.b16 %v189, %v187
  %v220 = vpack.c.b16 %v190, %v188
  %v221 = vpack.c.b16 %v193, %v191
  %v222 = vpack.c.b16 %v194, %v192
  %v223 = vpack.c.b16 %v197, %v195
  %v224 = vpack.c.b16 %v198, %v196
  %v225 = vpack.c.b16 %v201, %v199
  %v226 = vpack.c.b16 %v202, %v200
  %v227 = vpack.c.b16 %v205, %v203
  %v228 = vpack.c.b16 %v206, %v204
  %v229 = vpack.c.b16 %v209, %v207
  %v230 = vpack.c.b16 %v210, %v208
  %v231 = vpack.c.b16 %v213, %v211
  %v232 = vpack.c.b16 %v214, %v212
  %v233 = vpack.c.b16 %v217, %v215
  %v234 = vpack.c.b16 %v218, %v216
  %251 = vmatprep.subr.bf16.mxu0 %v220
  %252 = vmatpush1.bf16.msra.mxu0 %v219
  %253 = vmatprep.subr.bf16.mxu0 %v222
  %254 = vmatpush1.bf16.msra.mxu0 %v221
  %255 = vmatprep.subr.bf16.mxu0 %v224
  %256 = vmatpush1.bf16.msra.mxu0 %v223
  %257 = vmatprep.subr.bf16.mxu0 %v226
  %258 = vmatpush1.bf16.msra.mxu0 %v225
  %259 = vmatprep.subr.bf16.mxu0 %v228
  %260 = vmatpush1.bf16.msra.mxu0 %v227
  %261 = vmatprep.subr.bf16.mxu0 %v230
  %262 = vmatpush1.bf16.msra.mxu0 %v229
  %263 = vmatprep.subr.bf16.mxu0 %v232
  %264 = vmatpush1.bf16.msra.mxu0 %v231
  %265 = vmatprep.subr.bf16.mxu0 %v234
  %266 = vmatpush1.bf16.msra.mxu0 %v233
  %267 = vmatprep.subr.bf16.mxu0 0
  %268 = vmatpush1.bf16.msra.mxu0 0
  %269 = vmatprep.subr.bf16.mxu0 0
  %270 = vmatpush1.bf16.msra.mxu0 0
  %271 = vmatprep.subr.bf16.mxu0 0
  %272 = vmatpush1.bf16.msra.mxu0 0
  %273 = vmatprep.subr.bf16.mxu0 0
  %274 = vmatpush1.bf16.msra.mxu0 0
  %275 = vmatprep.subr.bf16.mxu0 0
  %276 = vmatpush1.bf16.msra.mxu0 0
  %277 = vmatprep.subr.bf16.mxu0 0
  %278 = vmatpush1.bf16.msra.mxu0 0
  %279 = vmatprep.subr.bf16.mxu0 0
  %280 = vmatpush1.bf16.msra.mxu0 0
  %281 = vmatprep.subr.bf16.mxu0 0
  %282 = vmatpush1.bf16.msra.mxu0 0
  %283 = vmatprep.mubr.bf16.mxu0 0
  %284 = vmatmul.mubr.bf16.gmra.mrb[0].mxu0 %v139
  %v285 = vpop.f32.mrb[0].mxu0
  %v286 = vadd.f32 %v68, %v285
  %v287 = vpop.f32.mrb[0].mxu0
  %v288 = vadd.f32 %v72, %v287
  %v289 = vpop.f32.mrb[0].mxu0
  %v290 = vadd.f32 %v68, %v289
  %v291 = vpop.f32.mrb[0].mxu0
  %v292 = vadd.f32 %v72, %v291
  %293 = vmatprep.mubr.bf16.mxu0 0
  %294 = vmatmul.mubr.bf16.gmra.mrb[0].mxu0 %v140
  %v295 = vpop.f32.mrb[0].mxu0
  %v296 = vadd.f32 %v68, %v295
  %v297 = vpop.f32.mrb[0].mxu0
  %v298 = vadd.f32 %v72, %v297
  %v299 = vpop.f32.mrb[0].mxu0
  %v300 = vadd.f32 %v68, %v299
  %v301 = vpop.f32.mrb[0].mxu0
  %v302 = vadd.f32 %v72, %v301
  %303 = vmatprep.mubr.bf16.mxu0 0
  %304 = vmatmul.mubr.bf16.gmra.mrb[0].mxu0 %v141
  %v305 = vpop.f32.mrb[0].mxu0
  %v306 = vadd.f32 %v68, %v305
  %v307 = vpop.f32.mrb[0].mxu0
  %v308 = vadd.f32 %v72, %v307
  %v309 = vpop.f32.mrb[0].mxu0
  %v310 = vadd.f32 %v68, %v309
  %v311 = vpop.f32.mrb[0].mxu0
  %v312 = vadd.f32 %v72, %v311
  %313 = vmatprep.mubr.bf16.mxu0 0
  %314 = vmatmul.mubr.bf16.gmra.mrb[0].mxu0 %v142
  %v315 = vpop.f32.mrb[0].mxu0
  %v316 = vadd.f32 %v68, %v315
  %v317 = vpop.f32.mrb[0].mxu0
  %v318 = vadd.f32 %v72, %v317
  %v319 = vpop.f32.mrb[0].mxu0
  %v320 = vadd.f32 %v68, %v319
  %v321 = vpop.f32.mrb[0].mxu0
  %v322 = vadd.f32 %v72, %v321
  %323 = vmatprep.mubr.bf16.mxu0 0
  %324 = vmatmul.mubr.bf16.gmra.mrb[0].mxu0 %v143
  %v325 = vpop.f32.mrb[0].mxu0
  %v326 = vadd.f32 %v68, %v325
  %v327 = vpop.f32.mrb[0].mxu0
  %v328 = vadd.f32 %v72, %v327
  %v329 = vpop.f32.mrb[0].mxu0
  %v330 = vadd.f32 %v68, %v329
  %v331 = vpop.f32.mrb[0].mxu0
  %v332 = vadd.f32 %v72, %v331
  %333 = vmatprep.mubr.bf16.mxu0 0
  %334 = vmatmul.mubr.bf16.gmra.mrb[0].mxu0 %v144
  %v335 = vpop.f32.mrb[0].mxu0
  %v336 = vadd.f32 %v68, %v335
  %v337 = vpop.f32.mrb[0].mxu0
  %v338 = vadd.f32 %v72, %v337
  %v339 = vpop.f32.mrb[0].mxu0
  %v340 = vadd.f32 %v68, %v339
  %v341 = vpop.f32.mrb[0].mxu0
  %v342 = vadd.f32 %v72, %v341
  %343 = vmatprep.mubr.bf16.mxu0 0
  %344 = vmatmul.mubr.bf16.gmra.mrb[0].mxu0 %v145
  %v345 = vpop.f32.mrb[0].mxu0
  %v346 = vadd.f32 %v68, %v345
  %v347 = vpop.f32.mrb[0].mxu0
  %v348 = vadd.f32 %v72, %v347
  %v349 = vpop.f32.mrb[0].mxu0
  %v350 = vadd.f32 %v68, %v349
  %v351 = vpop.f32.mrb[0].mxu0
  %v352 = vadd.f32 %v72, %v351
  %353 = vmatprep.mubr.bf16.mxu0 0
  %354 = vmatmul.mubr.bf16.gmra.mrb[0].mxu0 %v146
  %v355 = vpop.f32.mrb[0].mxu0
  %v356 = vadd.f32 %v68, %v355
  %v357 = vpop.f32.mrb[0].mxu0
  %v358 = vadd.f32 %v72, %v357
  %v359 = vpop.f32.mrb[0].mxu0
  %v360 = vadd.f32 %v68, %v359
  %v361 = vpop.f32.mrb[0].mxu0
  %v362 = vadd.f32 %v72, %v361
  %363 = vmatprep.mubr.bf16.mxu0 0
  %364 = vmatmul.mubr.bf16.gmra.mrb[0].mxu0 %v147
  %v365 = vpop.f32.mrb[0].mxu0
  %v366 = vadd.f32 %v68, %v365
  %v367 = vpop.f32.mrb[0].mxu0
  %v368 = vadd.f32 %v72, %v367
  %v369 = vpop.f32.mrb[0].mxu0
  %v370 = vadd.f32 %v68, %v369
  %v371 = vpop.f32.mrb[0].mxu0
  %v372 = vadd.f32 %v72, %v371
  %373 = vmatprep.mubr.bf16.mxu0 0
  %374 = vmatmul.mubr.bf16.gmra.mrb[0].mxu0 %v148
  %v375 = vpop.f32.mrb[0].mxu0
  %v376 = vadd.f32 %v68, %v375
  %v377 = vpop.f32.mrb[0].mxu0
  %v378 = vadd.f32 %v72, %v377
  %v379 = vpop.f32.mrb[0].mxu0
  %v380 = vadd.f32 %v68, %v379
  %v381 = vpop.f32.mrb[0].mxu0
  %v382 = vadd.f32 %v72, %v381
  %383 = vmatprep.mubr.bf16.mxu0 0
  %384 = vmatmul.mubr.bf16.gmra.mrb[0].mxu0 %v149
  %v385 = vpop.f32.mrb[0].mxu0
  %v386 = vadd.f32 %v68, %v385
  %v387 = vpop.f32.mrb[0].mxu0
  %v388 = vadd.f32 %v72, %v387
  %v389 = vpop.f32.mrb[0].mxu0
  %v390 = vadd.f32 %v68, %v389
  %v391 = vpop.f32.mrb[0].mxu0
  %v392 = vadd.f32 %v72, %v391
  %393 = vmatprep.mubr.bf16.mxu0 0
  %394 = vmatmul.mubr.bf16.gmra.mrb[0].mxu0 %v150
  %v395 = vpop.f32.mrb[0].mxu0
  %v396 = vadd.f32 %v68, %v395
  %v397 = vpop.f32.mrb[0].mxu0
  %v398 = vadd.f32 %v72, %v397
  %v399 = vpop.f32.mrb[0].mxu0
  %v400 = vadd.f32 %v68, %v399
  %v401 = vpop.f32.mrb[0].mxu0
  %v402 = vadd.f32 %v72, %v401
  %403 = vmatprep.mubr.bf16.mxu0 0
  %404 = vmatmul.mubr.bf16.gmra.mrb[0].mxu0 %v151
  %v405 = vpop.f32.mrb[0].mxu0
  %v406 = vadd.f32 %v68, %v405
  %v407 = vpop.f32.mrb[0].mxu0
  %v408 = vadd.f32 %v72, %v407
  %v409 = vpop.f32.mrb[0].mxu0
  %v410 = vadd.f32 %v68, %v409
  %v411 = vpop.f32.mrb[0].mxu0
  %v412 = vadd.f32 %v72, %v411
  %413 = vmatprep.mubr.bf16.mxu0 0
  %414 = vmatmul.mubr.bf16.gmra.mrb[0].mxu0 %v152
  %v415 = vpop.f32.mrb[0].mxu0
  %v416 = vadd.f32 %v68, %v415
  %v417 = vpop.f32.mrb[0].mxu0
  %v418 = vadd.f32 %v72, %v417
  %v419 = vpop.f32.mrb[0].mxu0
  %v420 = vadd.f32 %v68, %v419
  %v421 = vpop.f32.mrb[0].mxu0
  %v422 = vadd.f32 %v72, %v421
  %423 = vmatprep.mubr.bf16.mxu0 0
  %424 = vmatmul.mubr.bf16.gmra.mrb[0].mxu0 %v153
  %v425 = vpop.f32.mrb[0].mxu0
  %v426 = vadd.f32 %v68, %v425
  %v427 = vpop.f32.mrb[0].mxu0
  %v428 = vadd.f32 %v72, %v427
  %v429 = vpop.f32.mrb[0].mxu0
  %v430 = vadd.f32 %v68, %v429
  %v431 = vpop.f32.mrb[0].mxu0
  %v432 = vadd.f32 %v72, %v431
  %433 = vmatprep.mubr.bf16.mxu0 0
  %434 = vmatmul.mubr.bf16.gmra.mrb[0].mxu0 %v154
  %v435 = vpop.f32.mrb[0].mxu0
  %v436 = vadd.f32 %v68, %v435
  %v437 = vpop.f32.mrb[0].mxu0
  %v438 = vadd.f32 %v72, %v437
  %v439 = vpop.f32.mrb[0].mxu0
  %v440 = vadd.f32 %v68, %v439
  %v441 = vpop.f32.mrb[0].mxu0
  %v442 = vadd.f32 %v72, %v441
  %443 = vdwg.mxu0
  %v444 = vpack.c.bf16 %v290, %v286
  %v445 = vpack.c.bf16 %v292, %v288
  %v446 = vpack.c.bf16 %v300, %v296
  %v447 = vpack.c.bf16 %v302, %v298
  %v448 = vpack.c.bf16 %v310, %v306
  %v449 = vpack.c.bf16 %v312, %v308
  %v450 = vpack.c.bf16 %v320, %v316
  %v451 = vpack.c.bf16 %v322, %v318
  %v452 = vpack.c.bf16 %v330, %v326
  %v453 = vpack.c.bf16 %v332, %v328
  %v454 = vpack.c.bf16 %v340, %v336
  %v455 = vpack.c.bf16 %v342, %v338
  %v456 = vpack.c.bf16 %v350, %v346
  %v457 = vpack.c.bf16 %v352, %v348
  %v458 = vpack.c.bf16 %v360, %v356
  %v459 = vpack.c.bf16 %v362, %v358
  %v460 = vpack.c.bf16 %v370, %v366
  %v461 = vpack.c.bf16 %v372, %v368
  %v462 = vpack.c.bf16 %v380, %v376
  %v463 = vpack.c.bf16 %v382, %v378
  %v464 = vpack.c.bf16 %v390, %v386
  %v465 = vpack.c.bf16 %v392, %v388
  %v466 = vpack.c.bf16 %v400, %v396
  %v467 = vpack.c.bf16 %v402, %v398
  %v468 = vpack.c.bf16 %v410, %v406
  %v469 = vpack.c.bf16 %v412, %v408
  %v470 = vpack.c.bf16 %v420, %v416
  %v471 = vpack.c.bf16 %v422, %v418
  %v472 = vpack.c.bf16 %v430, %v426
  %v473 = vpack.c.bf16 %v432, %v428
  %v474 = vpack.c.bf16 %v440, %v436
  %v475 = vpack.c.bf16 %v442, %v438
  %v508 = vunpack.c.l.b16 %v444
  %v509 = vunpack.c.l.b16 %v445
  %v510 = vunpack.c.h.b16 %v444
  %v511 = vunpack.c.h.b16 %v445
  %v512 = vunpack.c.l.b16 %v446
  %v513 = vunpack.c.l.b16 %v447
  %v514 = vunpack.c.h.b16 %v446
  %v515 = vunpack.c.h.b16 %v447
  %v516 = vunpack.c.l.b16 %v448
  %v517 = vunpack.c.l.b16 %v449
  %v518 = vunpack.c.h.b16 %v448
  %v519 = vunpack.c.h.b16 %v449
  %v520 = vunpack.c.l.b16 %v450
  %v521 = vunpack.c.l.b16 %v451
  %v522 = vunpack.c.h.b16 %v450
  %v523 = vunpack.c.h.b16 %v451
  %v524 = vunpack.c.l.b16 %v452
  %v525 = vunpack.c.l.b16 %v453
  %v526 = vunpack.c.h.b16 %v452
  %v527 = vunpack.c.h.b16 %v453
  %v528 = vunpack.c.l.b16 %v454
  %v529 = vunpack.c.l.b16 %v455
  %v530 = vunpack.c.h.b16 %v454
  %v531 = vunpack.c.h.b16 %v455
  %v532 = vunpack.c.l.b16 %v456
  %v533 = vunpack.c.l.b16 %v457
  %v534 = vunpack.c.h.b16 %v456
  %v535 = vunpack.c.h.b16 %v457
  %v536 = vunpack.c.l.b16 %v458
  %v537 = vunpack.c.l.b16 %v459
  %v538 = vunpack.c.h.b16 %v458
  %v539 = vunpack.c.h.b16 %v459
  %v540 = vunpack.c.l.b16 %v460
  %v541 = vunpack.c.l.b16 %v461
  %v542 = vunpack.c.h.b16 %v460
  %v543 = vunpack.c.h.b16 %v461
  %v544 = vunpack.c.l.b16 %v462
  %v545 = vunpack.c.l.b16 %v463
  %v546 = vunpack.c.h.b16 %v462
  %v547 = vunpack.c.h.b16 %v463
  %v548 = vunpack.c.l.b16 %v464
  %v549 = vunpack.c.l.b16 %v465
  %v550 = vunpack.c.h.b16 %v464
  %v551 = vunpack.c.h.b16 %v465
  %v552 = vunpack.c.l.b16 %v466
  %v553 = vunpack.c.l.b16 %v467
  %v554 = vunpack.c.h.b16 %v466
  %v555 = vunpack.c.h.b16 %v467
  %v556 = vunpack.c.l.b16 %v468
  %v557 = vunpack.c.l.b16 %v469
  %v558 = vunpack.c.h.b16 %v468
  %v559 = vunpack.c.h.b16 %v469
  %v560 = vunpack.c.l.b16 %v470
  %v561 = vunpack.c.l.b16 %v471
  %v562 = vunpack.c.h.b16 %v470
  %v563 = vunpack.c.h.b16 %v471
  %v564 = vunpack.c.l.b16 %v472
  %v565 = vunpack.c.l.b16 %v473
  %v566 = vunpack.c.h.b16 %v472
  %v567 = vunpack.c.h.b16 %v473
  %v568 = vunpack.c.l.b16 %v474
  %v569 = vunpack.c.l.b16 %v475
  %v570 = vunpack.c.h.b16 %v474
  %v571 = vunpack.c.h.b16 %v475
  %v572 = vpack.c.b16 %v509, %v508
  %v573 = vpack.c.b16 %v511, %v510
  %v574 = vpack.c.b16 %v513, %v512
  %v575 = vpack.c.b16 %v515, %v514
  %v576 = vpack.c.b16 %v517, %v516
  %v577 = vpack.c.b16 %v519, %v518
  %v578 = vpack.c.b16 %v521, %v520
  %v579 = vpack.c.b16 %v523, %v522
  %v580 = vpack.c.b16 %v525, %v524
  %v581 = vpack.c.b16 %v527, %v526
  %v582 = vpack.c.b16 %v529, %v528
  %v583 = vpack.c.b16 %v531, %v530
  %v584 = vpack.c.b16 %v533, %v532
  %v585 = vpack.c.b16 %v535, %v534
  %v586 = vpack.c.b16 %v537, %v536
  %v587 = vpack.c.b16 %v539, %v538
  %v588 = vpack.c.b16 %v541, %v540
  %v589 = vpack.c.b16 %v543, %v542
  %v590 = vpack.c.b16 %v545, %v544
  %v591 = vpack.c.b16 %v547, %v546
  %v592 = vpack.c.b16 %v549, %v548
  %v593 = vpack.c.b16 %v551, %v550
  %v594 = vpack.c.b16 %v553, %v552
  %v595 = vpack.c.b16 %v555, %v554
  %v596 = vpack.c.b16 %v557, %v556
  %v597 = vpack.c.b16 %v559, %v558
  %v598 = vpack.c.b16 %v561, %v560
  %v599 = vpack.c.b16 %v563, %v562
  %v600 = vpack.c.b16 %v565, %v564
  %v601 = vpack.c.b16 %v567, %v566
  %v602 = vpack.c.b16 %v569, %v568
  %v603 = vpack.c.b16 %v571, %v570
  %636 = vst [vmem:[%s3] sm:$0xff] %v572
  %637 = vst [vmem:[%s3 + $0x8] sm:$0xff] %v573
  %638 = vst [vmem:[%s3 + $0x10] sm:$0xff] %v574
  %639 = vst [vmem:[%s3 + $0x18] sm:$0xff] %v575
  %640 = vst [vmem:[%s3 + $0x20] sm:$0xff] %v576
  %641 = vst [vmem:[%s3 + $0x28] sm:$0xff] %v577
  %642 = vst [vmem:[%s3 + $0x30] sm:$0xff] %v578
  %643 = vst [vmem:[%s3 + $0x38] sm:$0xff] %v579
  %644 = vst [vmem:[%s3 + $0x40] sm:$0xff] %v580
  %645 = vst [vmem:[%s3 + $0x48] sm:$0xff] %v581
  %646 = vst [vmem:[%s3 + $0x50] sm:$0xff] %v582
  %647 = vst [vmem:[%s3 + $0x58] sm:$0xff] %v583
  %648 = vst [vmem:[%s3 + $0x60] sm:$0xff] %v584
  %649 = vst [vmem:[%s3 + $0x68] sm:$0xff] %v585
  %650 = vst [vmem:[%s3 + $0x70] sm:$0xff] %v586
  %651 = vst [vmem:[%s3 + $0x78] sm:$0xff] %v587
  %652 = vst [vmem:[%s3 + $0x80] sm:$0xff] %v588
  %653 = vst [vmem:[%s3 + $0x88] sm:$0xff] %v589
  %654 = vst [vmem:[%s3 + $0x90] sm:$0xff] %v590
  %655 = vst [vmem:[%s3 + $0x98] sm:$0xff] %v591
  %656 = vst [vmem:[%s3 + $0xa0] sm:$0xff] %v592
  %657 = vst [vmem:[%s3 + $0xa8] sm:$0xff] %v593
  %658 = vst [vmem:[%s3 + $0xb0] sm:$0xff] %v594
  %659 = vst [vmem:[%s3 + $0xb8] sm:$0xff] %v595
  %660 = vst [vmem:[%s3 + $0xc0] sm:$0xff] %v596
  %661 = vst [vmem:[%s3 + $0xc8] sm:$0xff] %v597
  %662 = vst [vmem:[%s3 + $0xd0] sm:$0xff] %v598
  %663 = vst [vmem:[%s3 + $0xd8] sm:$0xff] %v599
  %664 = vst [vmem:[%s3 + $0xe0] sm:$0xff] %v600
  %665 = vst [vmem:[%s3 + $0xe8] sm:$0xff] %v601
  %666 = vst [vmem:[%s3 + $0xf0] sm:$0xff] %v602
  %667 = vst [vmem:[%s3 + $0xf8] sm:$0xff] %v603
  // Predicated region
  $region14: #{_lambda_.4} parent=0 // pred_check
    _
  $region15: #{_lambda_.4} parent=0 // pred_check_branch
    %669 = sbr.rel (0) target = $region17
  $region16: #{_lambda_.4} parent=0 // pred_region
    _
  $region17: #{_lambda_.4} parent=0 // pred_fallthru
    _
  // Predicated region
  $region18: #{_lambda_.4} parent=0 // pred_check
    _
  $region19: #{_lambda_.4} parent=0 // pred_check_branch
    %671 = sbr.rel (0) target = $region21
  $region20: #{_lambda_.4} parent=0 // pred_region
    _
  $region21: #{_lambda_.4} parent=0 // pred_fallthru
    _

// kernel: _lambda_.7
$region0: #{_lambda_.7}
  #allocation0 [shape = 'u32[]', space=smem, size = 0x4, offset = 0x4, fixed_abs, tag = 'smem constant byte address 0x4 - core index']
  #allocation1 [shape = 'u32[144,128]{1,0:T(1,128)}', space=vmem, size = 0x12000, scoped, tag = 'internal scratch']
  %s0 = inlined_call_operand.vmem [shape: bf16[256,128], index: 0, kind: input, shape index: {}]
  %s1 = inlined_call_operand.vmem [shape: bf16[128,256], index: 1, kind: input, shape index: {}]
  %s2 = inlined_call_operand.hbm [shape: bf16[256,256], index: 2, kind: output, shape index: {}]
  %s3 = sld [smem:[#allocation0]]
  $region18: #{_lambda_.7} parent=0
    _
  %s5 = ssub.s32 1, %s3
  %s6 = scalar_select 0, %s5, %s3
  $region1: #{_lambda_.7} parent=0
    #allocation2 [shape = 'u8[131072]{0}', space=vmem, size = 0x20000, scoped, tag = 'output window, operand 0, single buffered']
    #allocation3 [shape = 's32[1]{0}', space=sflag, size = 0x4, scoped, tag = 'scoped memory for _lambda_.7']
    %7 = vsyncpa [#allocation3], 0
    // Predicated region
    $region2: #{_lambda_.7} parent=1 // pred_check
      _
    $region3: #{_lambda_.7} parent=1 // pred_check_branch
      %9 = sbr.rel (0) target = $region5
    $region4: #{_lambda_.7} parent=1 // pred_region
      _
    $region5: #{_lambda_.7} parent=1 // pred_fallthru
      _
    // Predicated region
    $region6: #{_lambda_.7} parent=1 // pred_check
      _
    $region7: #{_lambda_.7} parent=1 // pred_check_branch
      %11 = sbr.rel (0) target = $region9
    $region8: #{_lambda_.7} parent=1 // pred_region
      _
    $region9: #{_lambda_.7} parent=1 // pred_fallthru
      _
    %v13 = vld [vmem:[%s0] sm:$0xf]
    %v14 = vld [vmem:[%s0 + $0x4] sm:$0xf]
    %v15 = vld [vmem:[%s0 + $0x8] sm:$0xf]
    %v16 = vld [vmem:[%s0 + $0xc] sm:$0xf]
    %v17 = vld [vmem:[%s0 + $0x10] sm:$0xf]
    %v18 = vld [vmem:[%s0 + $0x14] sm:$0xf]
    %v19 = vld [vmem:[%s0 + $0x18] sm:$0xf]
    %v20 = vld [vmem:[%s0 + $0x1c] sm:$0xf]
    %v21 = vld [vmem:[%s0 + $0x20] sm:$0xf]
    %v22 = vld [vmem:[%s0 + $0x24] sm:$0xf]
    %v23 = vld [vmem:[%s0 + $0x28] sm:$0xf]
    %v24 = vld [vmem:[%s0 + $0x2c] sm:$0xf]
    %v25 = vld [vmem:[%s0 + $0x30] sm:$0xf]
    %v26 = vld [vmem:[%s0 + $0x34] sm:$0xf]
    %v27 = vld [vmem:[%s0 + $0x38] sm:$0xf]
    %v28 = vld [vmem:[%s0 + $0x3c] sm:$0xf]
    %v29 = vld [vmem:[%s0 + $0x40] sm:$0xf]
    %v30 = vld [vmem:[%s0 + $0x44] sm:$0xf]
    %v31 = vld [vmem:[%s0 + $0x48] sm:$0xf]
    %v32 = vld [vmem:[%s0 + $0x4c] sm:$0xf]
    %v33 = vld [vmem:[%s0 + $0x50] sm:$0xf]
    %v34 = vld [vmem:[%s0 + $0x54] sm:$0xf]
    %v35 = vld [vmem:[%s0 + $0x58] sm:$0xf]
    %v36 = vld [vmem:[%s0 + $0x5c] sm:$0xf]
    %v37 = vld [vmem:[%s0 + $0x60] sm:$0xf]
    %v38 = vld [vmem:[%s0 + $0x64] sm:$0xf]
    %v39 = vld [vmem:[%s0 + $0x68] sm:$0xf]
    %v40 = vld [vmem:[%s0 + $0x6c] sm:$0xf]
    %v41 = vld [vmem:[%s0 + $0x70] sm:$0xf]
    %v42 = vld [vmem:[%s0 + $0x74] sm:$0xf]
    %v43 = vld [vmem:[%s0 + $0x78] sm:$0xf]
    %v44 = vld [vmem:[%s0 + $0x7c] sm:$0xf]
    %v45 = vld [vmem:[%s1] sm:$0xff]
    %v46 = vld [vmem:[%s1 + $0x8] sm:$0xff]
    %v47 = vld [vmem:[%s1 + $0x10] sm:$0xff]
    %v48 = vld [vmem:[%s1 + $0x18] sm:$0xff]
    %v49 = vld [vmem:[%s1 + $0x20] sm:$0xff]
    %v50 = vld [vmem:[%s1 + $0x28] sm:$0xff]
    %v51 = vld [vmem:[%s1 + $0x30] sm:$0xff]
    %v52 = vld [vmem:[%s1 + $0x38] sm:$0xff]
    %v53 = vld [vmem:[%s1 + $0x40] sm:$0xff]
    %v54 = vld [vmem:[%s1 + $0x48] sm:$0xff]
    %v55 = vld [vmem:[%s1 + $0x50] sm:$0xff]
    %v56 = vld [vmem:[%s1 + $0x58] sm:$0xff]
    %v57 = vld [vmem:[%s1 + $0x60] sm:$0xff]
    %v58 = vld [vmem:[%s1 + $0x68] sm:$0xff]
    %v59 = vld [vmem:[%s1 + $0x70] sm:$0xff]
    %v60 = vld [vmem:[%s1 + $0x78] sm:$0xff]
    %v93 = vunpack.c.l.b16 %v13
    %v94 = vunpack.c.l.b16 %v14
    %v95 = vunpack.c.l.b16 %v15
    %v96 = vunpack.c.l.b16 %v16
    %v97 = vunpack.c.l.b16 %v17
    %v98 = vunpack.c.l.b16 %v18
    %v99 = vunpack.c.l.b16 %v19
    %v100 = vunpack.c.l.b16 %v20
    %v101 = vunpack.c.l.b16 %v21
    %v102 = vunpack.c.l.b16 %v22
    %v103 = vunpack.c.l.b16 %v23
    %v104 = vunpack.c.l.b16 %v24
    %v105 = vunpack.c.l.b16 %v25
    %v106 = vunpack.c.l.b16 %v26
    %v107 = vunpack.c.l.b16 %v27
    %v108 = vunpack.c.l.b16 %v28
    %v109 = vunpack.c.l.b16 %v29
    %v110 = vunpack.c.l.b16 %v30
    %v111 = vunpack.c.l.b16 %v31
    %v112 = vunpack.c.l.b16 %v32
    %v113 = vunpack.c.l.b16 %v33
    %v114 = vunpack.c.l.b16 %v34
    %v115 = vunpack.c.l.b16 %v35
    %v116 = vunpack.c.l.b16 %v36
    %v117 = vunpack.c.l.b16 %v37
    %v118 = vunpack.c.l.b16 %v38
    %v119 = vunpack.c.l.b16 %v39
    %v120 = vunpack.c.l.b16 %v40
    %v121 = vunpack.c.l.b16 %v41
    %v122 = vunpack.c.l.b16 %v42
    %v123 = vunpack.c.l.b16 %v43
    %v124 = vunpack.c.l.b16 %v44
    %v125 = vpack.c.b16 %v94, %v93
    %v126 = vpack.c.b16 %v96, %v95
    %v127 = vpack.c.b16 %v98, %v97
    %v128 = vpack.c.b16 %v100, %v99
    %v129 = vpack.c.b16 %v102, %v101
    %v130 = vpack.c.b16 %v104, %v103
    %v131 = vpack.c.b16 %v106, %v105
    %v132 = vpack.c.b16 %v108, %v107
    %v133 = vpack.c.b16 %v110, %v109
    %v134 = vpack.c.b16 %v112, %v111
    %v135 = vpack.c.b16 %v114, %v113
    %v136 = vpack.c.b16 %v116, %v115
    %v137 = vpack.c.b16 %v118, %v117
    %v138 = vpack.c.b16 %v120, %v119
    %v139 = vpack.c.b16 %v122, %v121
    %v140 = vpack.c.b16 %v124, %v123
    %v173 = vunpack.c.l.b16 %v45
    %v174 = vunpack.c.h.b16 %v45
    %v175 = vunpack.c.l.b16 %v46
    %v176 = vunpack.c.h.b16 %v46
    %v177 = vunpack.c.l.b16 %v47
    %v178 = vunpack.c.h.b16 %v47
    %v179 = vunpack.c.l.b16 %v48
    %v180 = vunpack.c.h.b16 %v48
    %v181 = vunpack.c.l.b16 %v49
    %v182 = vunpack.c.h.b16 %v49
    %v183 = vunpack.c.l.b16 %v50
    %v184 = vunpack.c.h.b16 %v50
    %v185 = vunpack.c.l.b16 %v51
    %v186 = vunpack.c.h.b16 %v51
    %v187 = vunpack.c.l.b16 %v52
    %v188 = vunpack.c.h.b16 %v52
    %v189 = vunpack.c.l.b16 %v53
    %v190 = vunpack.c.h.b16 %v53
    %v191 = vunpack.c.l.b16 %v54
    %v192 = vunpack.c.h.b16 %v54
    %v193 = vunpack.c.l.b16 %v55
    %v194 = vunpack.c.h.b16 %v55
    %v195 = vunpack.c.l.b16 %v56
    %v196 = vunpack.c.h.b16 %v56
    %v197 = vunpack.c.l.b16 %v57
    %v198 = vunpack.c.h.b16 %v57
    %v199 = vunpack.c.l.b16 %v58
    %v200 = vunpack.c.h.b16 %v58
    %v201 = vunpack.c.l.b16 %v59
    %v202 = vunpack.c.h.b16 %v59
    %v203 = vunpack.c.l.b16 %v60
    %v204 = vunpack.c.h.b16 %v60
    %v205 = vpack.c.b16 %v175, %v173
    %v206 = vpack.c.b16 %v176, %v174
    %v207 = vpack.c.b16 %v179, %v177
    %v208 = vpack.c.b16 %v180, %v178
    %v209 = vpack.c.b16 %v183, %v181
    %v210 = vpack.c.b16 %v184, %v182
    %v211 = vpack.c.b16 %v187, %v185
    %v212 = vpack.c.b16 %v188, %v186
    %v213 = vpack.c.b16 %v191, %v189
    %v214 = vpack.c.b16 %v192, %v190
    %v215 = vpack.c.b16 %v195, %v193
    %v216 = vpack.c.b16 %v196, %v194
    %v217 = vpack.c.b16 %v199, %v197
    %v218 = vpack.c.b16 %v200, %v198
    %v219 = vpack.c.b16 %v203, %v201
    %v220 = vpack.c.b16 %v204, %v202
    %237 = vmatprep.subr.bf16.mxu0 %v206
    %238 = vmatpush1.bf16.msra.mxu0 %v205
    %239 = vmatprep.subr.bf16.mxu0 %v208
    %240 = vmatpush1.bf16.msra.mxu0 %v207
    %241 = vmatprep.subr.bf16.mxu0 %v210
    %242 = vmatpush1.bf16.msra.mxu0 %v209
    %243 = vmatprep.subr.bf16.mxu0 %v212
    %244 = vmatpush1.bf16.msra.mxu0 %v211
    %245 = vmatprep.subr.bf16.mxu0 %v214
    %246 = vmatpush1.bf16.msra.mxu0 %v213
    %247 = vmatprep.subr.bf16.mxu0 %v216
    %248 = vmatpush1.bf16.msra.mxu0 %v215
    %249 = vmatprep.subr.bf16.mxu0 %v218
    %250 = vmatpush1.bf16.msra.mxu0 %v217
    %251 = vmatprep.subr.bf16.mxu0 %v220
    %252 = vmatpush1.bf16.msra.mxu0 %v219
    %253 = vmatprep.subr.bf16.mxu0 0
    %254 = vmatpush1.bf16.msra.mxu0 0
    %255 = vmatprep.subr.bf16.mxu0 0
    %256 = vmatpush1.bf16.msra.mxu0 0
    %257 = vmatprep.subr.bf16.mxu0 0
    %258 = vmatpush1.bf16.msra.mxu0 0
    %259 = vmatprep.subr.bf16.mxu0 0
    %260 = vmatpush1.bf16.msra.mxu0 0
    %261 = vmatprep.subr.bf16.mxu0 0
    %262 = vmatpush1.bf16.msra.mxu0 0
    %263 = vmatprep.subr.bf16.mxu0 0
    %264 = vmatpush1.bf16.msra.mxu0 0
    %265 = vmatprep.subr.bf16.mxu0 0
    %266 = vmatpush1.bf16.msra.mxu0 0
    %267 = vmatprep.subr.bf16.mxu0 0
    %268 = vmatpush1.bf16.msra.mxu0 0
    %269 = vmatprep.mubr.bf16.mxu0 0
    %270 = vmatmul.mubr.bf16.gmra.mrb[0].mxu0 %v125
    %v271 = vpop.f32.mrb[0].mxu0
    %v272 = vadd.f32 0.0, %v271
    %v273 = vpop.f32.mrb[0].mxu0
    %v274 = vadd.f32 0.0, %v273
    %v275 = vpop.f32.mrb[0].mxu0
    %v276 = vadd.f32 0.0, %v275
    %v277 = vpop.f32.mrb[0].mxu0
    %v278 = vadd.f32 0.0, %v277
    %279 = vmatprep.mubr.bf16.mxu0 0
    %280 = vmatmul.mubr.bf16.gmra.mrb[0].mxu0 %v126
    %v281 = vpop.f32.mrb[0].mxu0
    %v282 = vadd.f32 0.0, %v281
    %v283 = vpop.f32.mrb[0].mxu0
    %v284 = vadd.f32 0.0, %v283
    %v285 = vpop.f32.mrb[0].mxu0
    %v286 = vadd.f32 0.0, %v285
    %v287 = vpop.f32.mrb[0].mxu0
    %v288 = vadd.f32 0.0, %v287
    %289 = vmatprep.mubr.bf16.mxu0 0
    %290 = vmatmul.mubr.bf16.gmra.mrb[0].mxu0 %v127
    %v291 = vpop.f32.mrb[0].mxu0
    %v292 = vadd.f32 0.0, %v291
    %v293 = vpop.f32.mrb[0].mxu0
    %v294 = vadd.f32 0.0, %v293
    %v295 = vpop.f32.mrb[0].mxu0
    %v296 = vadd.f32 0.0, %v295
    %v297 = vpop.f32.mrb[0].mxu0
    %v298 = vadd.f32 0.0, %v297
    %299 = vmatprep.mubr.bf16.mxu0 0
    %300 = vmatmul.mubr.bf16.gmra.mrb[0].mxu0 %v128
    %v301 = vpop.f32.mrb[0].mxu0
    %v302 = vadd.f32 0.0, %v301
    %v303 = vpop.f32.mrb[0].mxu0
    %v304 = vadd.f32 0.0, %v303
    %v305 = vpop.f32.mrb[0].mxu0
    %v306 = vadd.f32 0.0, %v305
    %v307 = vpop.f32.mrb[0].mxu0
    %v308 = vadd.f32 0.0, %v307
    %309 = vmatprep.mubr.bf16.mxu0 0
    %310 = vmatmul.mubr.bf16.gmra.mrb[0].mxu0 %v129
    %v311 = vpop.f32.mrb[0].mxu0
    %v312 = vadd.f32 0.0, %v311
    %v313 = vpop.f32.mrb[0].mxu0
    %v314 = vadd.f32 0.0, %v313
    %v315 = vpop.f32.mrb[0].mxu0
    %v316 = vadd.f32 0.0, %v315
    %v317 = vpop.f32.mrb[0].mxu0
    %v318 = vadd.f32 0.0, %v317
    %319 = vmatprep.mubr.bf16.mxu0 0
    %320 = vmatmul.mubr.bf16.gmra.mrb[0].mxu0 %v130
    %v321 = vpop.f32.mrb[0].mxu0
    %v322 = vadd.f32 0.0, %v321
    %v323 = vpop.f32.mrb[0].mxu0
    %v324 = vadd.f32 0.0, %v323
    %v325 = vpop.f32.mrb[0].mxu0
    %v326 = vadd.f32 0.0, %v325
    %v327 = vpop.f32.mrb[0].mxu0
    %v328 = vadd.f32 0.0, %v327
    %329 = vmatprep.mubr.bf16.mxu0 0
    %330 = vmatmul.mubr.bf16.gmra.mrb[0].mxu0 %v131
    %v331 = vpop.f32.mrb[0].mxu0
    %v332 = vadd.f32 0.0, %v331
    %v333 = vpop.f32.mrb[0].mxu0
    %v334 = vadd.f32 0.0, %v333
    %v335 = vpop.f32.mrb[0].mxu0
    %v336 = vadd.f32 0.0, %v335
    %v337 = vpop.f32.mrb[0].mxu0
    %v338 = vadd.f32 0.0, %v337
    %339 = vmatprep.mubr.bf16.mxu0 0
    %340 = vmatmul.mubr.bf16.gmra.mrb[0].mxu0 %v132
    %v341 = vpop.f32.mrb[0].mxu0
    %v342 = vadd.f32 0.0, %v341
    %v343 = vpop.f32.mrb[0].mxu0
    %v344 = vadd.f32 0.0, %v343
    %v345 = vpop.f32.mrb[0].mxu0
    %v346 = vadd.f32 0.0, %v345
    %v347 = vpop.f32.mrb[0].mxu0
    %v348 = vadd.f32 0.0, %v347
    %349 = vmatprep.mubr.bf16.mxu0 0
    %350 = vmatmul.mubr.bf16.gmra.mrb[0].mxu0 %v133
    %v351 = vpop.f32.mrb[0].mxu0
    %v352 = vadd.f32 0.0, %v351
    %v353 = vpop.f32.mrb[0].mxu0
    %v354 = vadd.f32 0.0, %v353
    %v355 = vpop.f32.mrb[0].mxu0
    %v356 = vadd.f32 0.0, %v355
    %v357 = vpop.f32.mrb[0].mxu0
    %v358 = vadd.f32 0.0, %v357
    %359 = vmatprep.mubr.bf16.mxu0 0
    %360 = vmatmul.mubr.bf16.gmra.mrb[0].mxu0 %v134
    %v361 = vpop.f32.mrb[0].mxu0
    %v362 = vadd.f32 0.0, %v361
    %v363 = vpop.f32.mrb[0].mxu0
    %v364 = vadd.f32 0.0, %v363
    %v365 = vpop.f32.mrb[0].mxu0
    %v366 = vadd.f32 0.0, %v365
    %v367 = vpop.f32.mrb[0].mxu0
    %v368 = vadd.f32 0.0, %v367
    %369 = vmatprep.mubr.bf16.mxu0 0
    %370 = vmatmul.mubr.bf16.gmra.mrb[0].mxu0 %v135
    %v371 = vpop.f32.mrb[0].mxu0
    %v372 = vadd.f32 0.0, %v371
    %v373 = vpop.f32.mrb[0].mxu0
    %v374 = vadd.f32 0.0, %v373
    %v375 = vpop.f32.mrb[0].mxu0
    %v376 = vadd.f32 0.0, %v375
    %v377 = vpop.f32.mrb[0].mxu0
    %v378 = vadd.f32 0.0, %v377
    %379 = vmatprep.mubr.bf16.mxu0 0
    %380 = vmatmul.mubr.bf16.gmra.mrb[0].mxu0 %v136
    %v381 = vpop.f32.mrb[0].mxu0
    %v382 = vadd.f32 0.0, %v381
    %v383 = vpop.f32.mrb[0].mxu0
    %v384 = vadd.f32 0.0, %v383
    %v385 = vpop.f32.mrb[0].mxu0
    %v386 = vadd.f32 0.0, %v385
    %v387 = vpop.f32.mrb[0].mxu0
    %v388 = vadd.f32 0.0, %v387
    %389 = vmatprep.mubr.bf16.mxu0 0
    %390 = vmatmul.mubr.bf16.gmra.mrb[0].mxu0 %v137
    %v391 = vpop.f32.mrb[0].mxu0
    %v392 = vadd.f32 0.0, %v391
    %v393 = vpop.f32.mrb[0].mxu0
    %v394 = vadd.f32 0.0, %v393
    %v395 = vpop.f32.mrb[0].mxu0
    %v396 = vadd.f32 0.0, %v395
    %v397 = vpop.f32.mrb[0].mxu0
    %v398 = vadd.f32 0.0, %v397
    %399 = vmatprep.mubr.bf16.mxu0 0
    %400 = vmatmul.mubr.bf16.gmra.mrb[0].mxu0 %v138
    %v401 = vpop.f32.mrb[0].mxu0
    %v402 = vadd.f32 0.0, %v401
    %v403 = vpop.f32.mrb[0].mxu0
    %v404 = vadd.f32 0.0, %v403
    %v405 = vpop.f32.mrb[0].mxu0
    %v406 = vadd.f32 0.0, %v405
    %v407 = vpop.f32.mrb[0].mxu0
    %v408 = vadd.f32 0.0, %v407
    %409 = vmatprep.mubr.bf16.mxu0 0
    %410 = vmatmul.mubr.bf16.gmra.mrb[0].mxu0 %v139
    %v411 = vpop.f32.mrb[0].mxu0
    %v412 = vadd.f32 0.0, %v411
    %v413 = vpop.f32.mrb[0].mxu0
    %v414 = vadd.f32 0.0, %v413
    %v415 = vpop.f32.mrb[0].mxu0
    %v416 = vadd.f32 0.0, %v415
    %v417 = vpop.f32.mrb[0].mxu0
    %v418 = vadd.f32 0.0, %v417
    %419 = vmatprep.mubr.bf16.mxu0 0
    %420 = vmatmul.mubr.bf16.gmra.mrb[0].mxu0 %v140
    %v421 = vpop.f32.mrb[0].mxu0
    %v422 = vadd.f32 0.0, %v421
    %v423 = vpop.f32.mrb[0].mxu0
    %v424 = vadd.f32 0.0, %v423
    %v425 = vpop.f32.mrb[0].mxu0
    %v426 = vadd.f32 0.0, %v425
    %v427 = vpop.f32.mrb[0].mxu0
    %v428 = vadd.f32 0.0, %v427
    %429 = vdwg.mxu0
    %v430 = vxor.u32 %v272, 2147483648
    %v431 = vxor.u32 %v274, 2147483648
    %v432 = vxor.u32 %v276, 2147483648
    %v433 = vxor.u32 %v278, 2147483648
    %v434 = vxor.u32 %v282, 2147483648
    %v435 = vxor.u32 %v284, 2147483648
    %v436 = vxor.u32 %v286, 2147483648
    %v437 = vxor.u32 %v288, 2147483648
    %v438 = vxor.u32 %v292, 2147483648
    %v439 = vxor.u32 %v294, 2147483648
    %v440 = vxor.u32 %v296, 2147483648
    %v441 = vxor.u32 %v298, 2147483648
    %v442 = vxor.u32 %v302, 2147483648
    %v443 = vxor.u32 %v304, 2147483648
    %v444 = vxor.u32 %v306, 2147483648
    %v445 = vxor.u32 %v308, 2147483648
    %v446 = vxor.u32 %v312, 2147483648
    %v447 = vxor.u32 %v314, 2147483648
    %v448 = vxor.u32 %v316, 2147483648
    %v449 = vxor.u32 %v318, 2147483648
    %v450 = vxor.u32 %v322, 2147483648
    %v451 = vxor.u32 %v324, 2147483648
    %v452 = vxor.u32 %v326, 2147483648
    %v453 = vxor.u32 %v328, 2147483648
    %v454 = vxor.u32 %v332, 2147483648
    %v455 = vxor.u32 %v334, 2147483648
    %v456 = vxor.u32 %v336, 2147483648
    %v457 = vxor.u32 %v338, 2147483648
    %v458 = vxor.u32 %v342, 2147483648
    %v459 = vxor.u32 %v344, 2147483648
    %v460 = vxor.u32 %v346, 2147483648
    %v461 = vxor.u32 %v348, 2147483648
    %v462 = vxor.u32 %v352, 2147483648
    %v463 = vxor.u32 %v354, 2147483648
    %v464 = vxor.u32 %v356, 2147483648
    %v465 = vxor.u32 %v358, 2147483648
    %v466 = vxor.u32 %v362, 2147483648
    %v467 = vxor.u32 %v364, 2147483648
    %v468 = vxor.u32 %v366, 2147483648
    %v469 = vxor.u32 %v368, 2147483648
    %v470 = vxor.u32 %v372, 2147483648
    %v471 = vxor.u32 %v374, 2147483648
    %v472 = vxor.u32 %v376, 2147483648
    %v473 = vxor.u32 %v378, 2147483648
    %v474 = vxor.u32 %v382, 2147483648
    %v475 = vxor.u32 %v384, 2147483648
    %v476 = vxor.u32 %v386, 2147483648
    %v477 = vxor.u32 %v388, 2147483648
    %v478 = vxor.u32 %v392, 2147483648
    %v479 = vxor.u32 %v394, 2147483648
    %v480 = vxor.u32 %v396, 2147483648
    %v481 = vxor.u32 %v398, 2147483648
    %v482 = vxor.u32 %v402, 2147483648
    %v483 = vxor.u32 %v404, 2147483648
    %v484 = vxor.u32 %v406, 2147483648
    %v485 = vxor.u32 %v408, 2147483648
    %v486 = vxor.u32 %v412, 2147483648
    %v487 = vxor.u32 %v414, 2147483648
    %v488 = vxor.u32 %v416, 2147483648
    %v489 = vxor.u32 %v418, 2147483648
    %v490 = vxor.u32 %v422, 2147483648
    %v491 = vxor.u32 %v424, 2147483648
    %v492 = vxor.u32 %v426, 2147483648
    %v493 = vxor.u32 %v428, 2147483648
    %v494 = vmul.f32 %v430, 1.442695
    %v495 = vpow.pop %v494
    %v496 = vmul.f32 %v431, 1.442695
    %v497 = vpow.pop %v496
    %v498 = vmul.f32 %v432, 1.442695
    %v499 = vpow.pop %v498
    %v500 = vmul.f32 %v433, 1.442695
    %v501 = vpow.pop %v500
    %v502 = vmul.f32 %v434, 1.442695
    %v503 = vpow.pop %v502
    %v504 = vmul.f32 %v435, 1.442695
    %v505 = vpow.pop %v504
    %v506 = vmul.f32 %v436, 1.442695
    %v507 = vpow.pop %v506
    %v508 = vmul.f32 %v437, 1.442695
    %v509 = vpow.pop %v508
    %v510 = vmul.f32 %v438, 1.442695
    %v511 = vpow.pop %v510
    %v512 = vmul.f32 %v439, 1.442695
    %v513 = vpow.pop %v512
    %v514 = vmul.f32 %v440, 1.442695
    %v515 = vpow.pop %v514
    %v516 = vmul.f32 %v441, 1.442695
    %v517 = vpow.pop %v516
    %v518 = vmul.f32 %v442, 1.442695
    %v519 = vpow.pop %v518
    %v520 = vmul.f32 %v443, 1.442695
    %v521 = vpow.pop %v520
    %v522 = vmul.f32 %v444, 1.442695
    %v523 = vpow.pop %v522
    %v524 = vmul.f32 %v445, 1.442695
    %v525 = vpow.pop %v524
    %v526 = vmul.f32 %v446, 1.442695
    %v527 = vpow.pop %v526
    %v528 = vmul.f32 %v447, 1.442695
    %v529 = vpow.pop %v528
    %v530 = vmul.f32 %v448, 1.442695
    %v531 = vpow.pop %v530
    %v532 = vmul.f32 %v449, 1.442695
    %v533 = vpow.pop %v532
    %v534 = vmul.f32 %v450, 1.442695
    %v535 = vpow.pop %v534
    %v536 = vmul.f32 %v451, 1.442695
    %v537 = vpow.pop %v536
    %v538 = vmul.f32 %v452, 1.442695
    %v539 = vpow.pop %v538
    %v540 = vmul.f32 %v453, 1.442695
    %v541 = vpow.pop %v540
    %v542 = vmul.f32 %v454, 1.442695
    %v543 = vpow.pop %v542
    %v544 = vmul.f32 %v455, 1.442695
    %v545 = vpow.pop %v544
    %v546 = vmul.f32 %v456, 1.442695
    %v547 = vpow.pop %v546
    %v548 = vmul.f32 %v457, 1.442695
    %v549 = vpow.pop %v548
    %v550 = vmul.f32 %v458, 1.442695
    %v551 = vpow.pop %v550
    %v552 = vmul.f32 %v459, 1.442695
    %v553 = vpow.pop %v552
    %v554 = vmul.f32 %v460, 1.442695
    %v555 = vpow.pop %v554
    %v556 = vmul.f32 %v461, 1.442695
    %v557 = vpow.pop %v556
    %v558 = vmul.f32 %v462, 1.442695
    %v559 = vpow.pop %v558
    %v560 = vmul.f32 %v463, 1.442695
    %v561 = vpow.pop %v560
    %v562 = vmul.f32 %v464, 1.442695
    %v563 = vpow.pop %v562
    %v564 = vmul.f32 %v465, 1.442695
    %v565 = vpow.pop %v564
    %v566 = vmul.f32 %v466, 1.442695
    %v567 = vpow.pop %v566
    %v568 = vmul.f32 %v467, 1.442695
    %v569 = vpow.pop %v568
    %v570 = vmul.f32 %v468, 1.442695
    %v571 = vpow.pop %v570
    %v572 = vmul.f32 %v469, 1.442695
    %v573 = vpow.pop %v572
    %v574 = vmul.f32 %v470, 1.442695
    %v575 = vpow.pop %v574
    %v576 = vmul.f32 %v471, 1.442695
    %v577 = vpow.pop %v576
    %v578 = vmul.f32 %v472, 1.442695
    %v579 = vpow.pop %v578
    %v580 = vmul.f32 %v473, 1.442695
    %v581 = vpow.pop %v580
    %v582 = vmul.f32 %v474, 1.442695
    %v583 = vpow.pop %v582
    %v584 = vmul.f32 %v475, 1.442695
    %v585 = vpow.pop %v584
    %v586 = vmul.f32 %v476, 1.442695
    %v587 = vpow.pop %v586
    %v588 = vmul.f32 %v477, 1.442695
    %v589 = vpow.pop %v588
    %v590 = vmul.f32 %v478, 1.442695
    %v591 = vpow.pop %v590
    %v592 = vmul.f32 %v479, 1.442695
    %v593 = vpow.pop %v592
    %v594 = vmul.f32 %v480, 1.442695
    %v595 = vpow.pop %v594
    %v596 = vmul.f32 %v481, 1.442695
    %v597 = vpow.pop %v596
    %v598 = vmul.f32 %v482, 1.442695
    %v599 = vpow.pop %v598
    %v600 = vmul.f32 %v483, 1.442695
    %v601 = vpow.pop %v600
    %v602 = vmul.f32 %v484, 1.442695
    %v603 = vpow.pop %v602
    %v604 = vmul.f32 %v485, 1.442695
    %v605 = vpow.pop %v604
    %v606 = vmul.f32 %v486, 1.442695
    %v607 = vpow.pop %v606
    %v608 = vmul.f32 %v487, 1.442695
    %v609 = vpow.pop %v608
    %v610 = vmul.f32 %v488, 1.442695
    %v611 = vpow.pop %v610
    %v612 = vmul.f32 %v489, 1.442695
    %v613 = vpow.pop %v612
    %v614 = vmul.f32 %v490, 1.442695
    %v615 = vpow.pop %v614
    %v616 = vmul.f32 %v491, 1.442695
    %v617 = vpow.pop %v616
    %v618 = vmul.f32 %v492, 1.442695
    %v619 = vpow.pop %v618
    %v620 = vmul.f32 %v493, 1.442695
    %v621 = vpow.pop %v620
    %v622 = vadd.f32 %v495, 1.0
    %v623 = vadd.f32 %v497, 1.0
    %v624 = vadd.f32 %v499, 1.0
    %v625 = vadd.f32 %v501, 1.0
    %v626 = vadd.f32 %v503, 1.0
    %v627 = vadd.f32 %v505, 1.0
    %v628 = vadd.f32 %v507, 1.0
    %v629 = vadd.f32 %v509, 1.0
    %v630 = vadd.f32 %v511, 1.0
    %v631 = vadd.f32 %v513, 1.0
    %v632 = vadd.f32 %v515, 1.0
    %v633 = vadd.f32 %v517, 1.0
    %v634 = vadd.f32 %v519, 1.0
    %v635 = vadd.f32 %v521, 1.0
    %v636 = vadd.f32 %v523, 1.0
    %v637 = vadd.f32 %v525, 1.0
    %v638 = vadd.f32 %v527, 1.0
    %v639 = vadd.f32 %v529, 1.0
    %v640 = vadd.f32 %v531, 1.0
    %v641 = vadd.f32 %v533, 1.0
    %v642 = vadd.f32 %v535, 1.0
    %v643 = vadd.f32 %v537, 1.0
    %v644 = vadd.f32 %v539, 1.0
    %v645 = vadd.f32 %v541, 1.0
    %v646 = vadd.f32 %v543, 1.0
    %v647 = vadd.f32 %v545, 1.0
    %v648 = vadd.f32 %v547, 1.0
    %v649 = vadd.f32 %v549, 1.0
    %v650 = vadd.f32 %v551, 1.0
    %v651 = vadd.f32 %v553, 1.0
    %v652 = vadd.f32 %v555, 1.0
    %v653 = vadd.f32 %v557, 1.0
    %v654 = vadd.f32 %v559, 1.0
    %v655 = vadd.f32 %v561, 1.0
    %v656 = vadd.f32 %v563, 1.0
    %v657 = vadd.f32 %v565, 1.0
    %v658 = vadd.f32 %v567, 1.0
    %v659 = vadd.f32 %v569, 1.0
    %v660 = vadd.f32 %v571, 1.0
    %v661 = vadd.f32 %v573, 1.0
    %v662 = vadd.f32 %v575, 1.0
    %v663 = vadd.f32 %v577, 1.0
    %v664 = vadd.f32 %v579, 1.0
    %v665 = vadd.f32 %v581, 1.0
    %v666 = vadd.f32 %v583, 1.0
    %v667 = vadd.f32 %v585, 1.0
    %v668 = vadd.f32 %v587, 1.0
    %v669 = vadd.f32 %v589, 1.0
    %v670 = vadd.f32 %v591, 1.0
    %v671 = vadd.f32 %v593, 1.0
    %v672 = vadd.f32 %v595, 1.0
    %v673 = vadd.f32 %v597, 1.0
    %v674 = vadd.f32 %v599, 1.0
    %v675 = vadd.f32 %v601, 1.0
    %v676 = vadd.f32 %v603, 1.0
    %v677 = vadd.f32 %v605, 1.0
    %v678 = vadd.f32 %v607, 1.0
    %v679 = vadd.f32 %v609, 1.0
    %v680 = vadd.f32 %v611, 1.0
    %v681 = vadd.f32 %v613, 1.0
    %v682 = vadd.f32 %v615, 1.0
    %v683 = vadd.f32 %v617, 1.0
    %v684 = vadd.f32 %v619, 1.0
    %v685 = vadd.f32 %v621, 1.0
    %v686 = vrcp.pop %v622
    %v687 = vmul.f32 1.0, %v686
    %v688 = vrcp.pop %v623
    %v689 = vmul.f32 1.0, %v688
    %v690 = vrcp.pop %v624
    %v691 = vmul.f32 1.0, %v690
    %v692 = vrcp.pop %v625
    %v693 = vmul.f32 1.0, %v692
    %v694 = vrcp.pop %v626
    %v695 = vmul.f32 1.0, %v694
    %v696 = vrcp.pop %v627
    %v697 = vmul.f32 1.0, %v696
    %v698 = vrcp.pop %v628
    %v699 = vmul.f32 1.0, %v698
    %v700 = vrcp.pop %v629
    %v701 = vmul.f32 1.0, %v700
    %v702 = vrcp.pop %v630
    %v703 = vmul.f32 1.0, %v702
    %v704 = vrcp.pop %v631
    %v705 = vmul.f32 1.0, %v704
    %v706 = vrcp.pop %v632
    %v707 = vmul.f32 1.0, %v706
    %v708 = vrcp.pop %v633
    %v709 = vmul.f32 1.0, %v708
    %v710 = vrcp.pop %v634
    %v711 = vmul.f32 1.0, %v710
    %v712 = vrcp.pop %v635
    %v713 = vmul.f32 1.0, %v712
    %v714 = vrcp.pop %v636
    %v715 = vmul.f32 1.0, %v714
    %v716 = vrcp.pop %v637
    %v717 = vmul.f32 1.0, %v716
    %v718 = vrcp.pop %v638
    %v719 = vmul.f32 1.0, %v718
    %v720 = vrcp.pop %v639
    %v721 = vmul.f32 1.0, %v720
    %v722 = vrcp.pop %v640
    %v723 = vmul.f32 1.0, %v722
    %v724 = vrcp.pop %v641
    %v725 = vmul.f32 1.0, %v724
    %v726 = vrcp.pop %v642
    %v727 = vmul.f32 1.0, %v726
    %v728 = vrcp.pop %v643
    %v729 = vmul.f32 1.0, %v728
    %v730 = vrcp.pop %v644
    %v731 = vmul.f32 1.0, %v730
    %v732 = vrcp.pop %v645
    %v733 = vmul.f32 1.0, %v732
    %v734 = vrcp.pop %v646
    %v735 = vmul.f32 1.0, %v734
    %v736 = vrcp.pop %v647
    %v737 = vmul.f32 1.0, %v736
    %v738 = vrcp.pop %v648
    %v739 = vmul.f32 1.0, %v738
    %v740 = vrcp.pop %v649
    %v741 = vmul.f32 1.0, %v740
    %v742 = vrcp.pop %v650
    %v743 = vmul.f32 1.0, %v742
    %v744 = vrcp.pop %v651
    %v745 = vmul.f32 1.0, %v744
    %v746 = vrcp.pop %v652
    %v747 = vmul.f32 1.0, %v746
    %v748 = vrcp.pop %v653
    %v749 = vmul.f32 1.0, %v748
    %v750 = vrcp.pop %v654
    %v751 = vmul.f32 1.0, %v750
    %v752 = vrcp.pop %v655
    %v753 = vmul.f32 1.0, %v752
    %v754 = vrcp.pop %v656
    %v755 = vmul.f32 1.0, %v754
    %v756 = vrcp.pop %v657
    %v757 = vmul.f32 1.0, %v756
    %v758 = vrcp.pop %v658
    %v759 = vmul.f32 1.0, %v758
    %v760 = vrcp.pop %v659
    %v761 = vmul.f32 1.0, %v760
    %v762 = vrcp.pop %v660
    %v763 = vmul.f32 1.0, %v762
    %v764 = vrcp.pop %v661
    %v765 = vmul.f32 1.0, %v764
    %v766 = vrcp.pop %v662
    %v767 = vmul.f32 1.0, %v766
    %v768 = vrcp.pop %v663
    %v769 = vmul.f32 1.0, %v768
    %v770 = vrcp.pop %v664
    %v771 = vmul.f32 1.0, %v770
    %v772 = vrcp.pop %v665
    %v773 = vmul.f32 1.0, %v772
    %v774 = vrcp.pop %v666
    %v775 = vmul.f32 1.0, %v774
    %v776 = vrcp.pop %v667
    %v777 = vmul.f32 1.0, %v776
    %v778 = vrcp.pop %v668
    %v779 = vmul.f32 1.0, %v778
    %v780 = vrcp.pop %v669
    %v781 = vmul.f32 1.0, %v780
    %v782 = vrcp.pop %v670
    %v783 = vmul.f32 1.0, %v782
    %v784 = vrcp.pop %v671
    %v785 = vmul.f32 1.0, %v784
    %v786 = vrcp.pop %v672
    %v787 = vmul.f32 1.0, %v786
    %v788 = vrcp.pop %v673
    %v789 = vmul.f32 1.0, %v788
    %v790 = vrcp.pop %v674
    %v791 = vmul.f32 1.0, %v790
    %v792 = vrcp.pop %v675
    %v793 = vmul.f32 1.0, %v792
    %v794 = vrcp.pop %v676
    %v795 = vmul.f32 1.0, %v794
    %v796 = vrcp.pop %v677
    %v797 = vmul.f32 1.0, %v796
    %v798 = vrcp.pop %v678
    %v799 = vmul.f32 1.0, %v798
    %v800 = vrcp.pop %v679
    %v801 = vmul.f32 1.0, %v800
    %v802 = vrcp.pop %v680
    %v803 = vmul.f32 1.0, %v802
    %v804 = vrcp.pop %v681
    %v805 = vmul.f32 1.0, %v804
    %v806 = vrcp.pop %v682
    %v807 = vmul.f32 1.0, %v806
    %v808 = vrcp.pop %v683
    %v809 = vmul.f32 1.0, %v808
    %v810 = vrcp.pop %v684
    %v811 = vmul.f32 1.0, %v810
    %v812 = vrcp.pop %v685
    %v813 = vmul.f32 1.0, %v812
    %v814 = vpack.c.bf16 %v691, %v687
    %v815 = vpack.c.bf16 %v693, %v689
    %v816 = vpack.c.bf16 %v699, %v695
    %v817 = vpack.c.bf16 %v701, %v697
    %v818 = vpack.c.bf16 %v707, %v703
    %v819 = vpack.c.bf16 %v709, %v705
    %v820 = vpack.c.bf16 %v715, %v711
    %v821 = vpack.c.bf16 %v717, %v713
    %v822 = vpack.c.bf16 %v723, %v719
    %v823 = vpack.c.bf16 %v725, %v721
    %v824 = vpack.c.bf16 %v731, %v727
    %v825 = vpack.c.bf16 %v733, %v729
    %v826 = vpack.c.bf16 %v739, %v735
    %v827 = vpack.c.bf16 %v741, %v737
    %v828 = vpack.c.bf16 %v747, %v743
    %v829 = vpack.c.bf16 %v749, %v745
    %v830 = vpack.c.bf16 %v755, %v751
    %v831 = vpack.c.bf16 %v757, %v753
    %v832 = vpack.c.bf16 %v763, %v759
    %v833 = vpack.c.bf16 %v765, %v761
    %v834 = vpack.c.bf16 %v771, %v767
    %v835 = vpack.c.bf16 %v773, %v769
    %v836 = vpack.c.bf16 %v779, %v775
    %v837 = vpack.c.bf16 %v781, %v777
    %v838 = vpack.c.bf16 %v787, %v783
    %v839 = vpack.c.bf16 %v789, %v785
    %v840 = vpack.c.bf16 %v795, %v791
    %v841 = vpack.c.bf16 %v797, %v793
    %v842 = vpack.c.bf16 %v803, %v799
    %v843 = vpack.c.bf16 %v805, %v801
    %v844 = vpack.c.bf16 %v811, %v807
    %v845 = vpack.c.bf16 %v813, %v809
    %v878 = vunpack.c.l.b16 %v814
    %v879 = vunpack.c.l.b16 %v815
    %v880 = vunpack.c.h.b16 %v814
    %v881 = vunpack.c.h.b16 %v815
    %v882 = vunpack.c.l.b16 %v816
    %v883 = vunpack.c.l.b16 %v817
    %v884 = vunpack.c.h.b16 %v816
    %v885 = vunpack.c.h.b16 %v817
    %v886 = vunpack.c.l.b16 %v818
    %v887 = vunpack.c.l.b16 %v819
    %v888 = vunpack.c.h.b16 %v818
    %v889 = vunpack.c.h.b16 %v819
    %v890 = vunpack.c.l.b16 %v820
    %v891 = vunpack.c.l.b16 %v821
    %v892 = vunpack.c.h.b16 %v820
    %v893 = vunpack.c.h.b16 %v821
    %v894 = vunpack.c.l.b16 %v822
    %v895 = vunpack.c.l.b16 %v823
    %v896 = vunpack.c.h.b16 %v822
    %v897 = vunpack.c.h.b16 %v823
    %v898 = vunpack.c.l.b16 %v824
    %v899 = vunpack.c.l.b16 %v825
    %v900 = vunpack.c.h.b16 %v824
    %v901 = vunpack.c.h.b16 %v825
    %v902 = vunpack.c.l.b16 %v826
    %v903 = vunpack.c.l.b16 %v827
    %v904 = vunpack.c.h.b16 %v826
    %v905 = vunpack.c.h.b16 %v827
    %v906 = vunpack.c.l.b16 %v828
    %v907 = vunpack.c.l.b16 %v829
    %v908 = vunpack.c.h.b16 %v828
    %v909 = vunpack.c.h.b16 %v829
    %v910 = vunpack.c.l.b16 %v830
    %v911 = vunpack.c.l.b16 %v831
    %v912 = vunpack.c.h.b16 %v830
    %v913 = vunpack.c.h.b16 %v831
    %v914 = vunpack.c.l.b16 %v832
    %v915 = vunpack.c.l.b16 %v833
    %v916 = vunpack.c.h.b16 %v832
    %v917 = vunpack.c.h.b16 %v833
    %v918 = vunpack.c.l.b16 %v834
    %v919 = vunpack.c.l.b16 %v835
    %v920 = vunpack.c.h.b16 %v834
    %v921 = vunpack.c.h.b16 %v835
    %v922 = vunpack.c.l.b16 %v836
    %v923 = vunpack.c.l.b16 %v837
    %v924 = vunpack.c.h.b16 %v836
    %v925 = vunpack.c.h.b16 %v837
    %v926 = vunpack.c.l.b16 %v838
    %v927 = vunpack.c.l.b16 %v839
    %v928 = vunpack.c.h.b16 %v838
    %v929 = vunpack.c.h.b16 %v839
    %v930 = vunpack.c.l.b16 %v840
    %v931 = vunpack.c.l.b16 %v841
    %v932 = vunpack.c.h.b16 %v840
    %v933 = vunpack.c.h.b16 %v841
    %v934 = vunpack.c.l.b16 %v842
    %v935 = vunpack.c.l.b16 %v843
    %v936 = vunpack.c.h.b16 %v842
    %v937 = vunpack.c.h.b16 %v843
    %v938 = vunpack.c.l.b16 %v844
    %v939 = vunpack.c.l.b16 %v845
    %v940 = vunpack.c.h.b16 %v844
    %v941 = vunpack.c.h.b16 %v845
    %v942 = vpack.c.b16 %v879, %v878
    %v943 = vpack.c.b16 %v881, %v880
    %v944 = vpack.c.b16 %v883, %v882
    %v945 = vpack.c.b16 %v885, %v884
    %v946 = vpack.c.b16 %v887, %v886
    %v947 = vpack.c.b16 %v889, %v888
    %v948 = vpack.c.b16 %v891, %v890
    %v949 = vpack.c.b16 %v893, %v892
    %v950 = vpack.c.b16 %v895, %v894
    %v951 = vpack.c.b16 %v897, %v896
    %v952 = vpack.c.b16 %v899, %v898
    %v953 = vpack.c.b16 %v901, %v900
    %v954 = vpack.c.b16 %v903, %v902
    %v955 = vpack.c.b16 %v905, %v904
    %v956 = vpack.c.b16 %v907, %v906
    %v957 = vpack.c.b16 %v909, %v908
    %v958 = vpack.c.b16 %v911, %v910
    %v959 = vpack.c.b16 %v913, %v912
    %v960 = vpack.c.b16 %v915, %v914
    %v961 = vpack.c.b16 %v917, %v916
    %v962 = vpack.c.b16 %v919, %v918
    %v963 = vpack.c.b16 %v921, %v920
    %v964 = vpack.c.b16 %v923, %v922
    %v965 = vpack.c.b16 %v925, %v924
    %v966 = vpack.c.b16 %v927, %v926
    %v967 = vpack.c.b16 %v929, %v928
    %v968 = vpack.c.b16 %v931, %v930
    %v969 = vpack.c.b16 %v933, %v932
    %v970 = vpack.c.b16 %v935, %v934
    %v971 = vpack.c.b16 %v937, %v936
    %v972 = vpack.c.b16 %v939, %v938
    %v973 = vpack.c.b16 %v941, %v940
    %1006 = vst [vmem:[#allocation2] sm:$0xff] %v942
    %1007 = vst [vmem:[#allocation2 + $0x8] sm:$0xff] %v943
    %1008 = vst [vmem:[#allocation2 + $0x10] sm:$0xff] %v944
    %1009 = vst [vmem:[#allocation2 + $0x18] sm:$0xff] %v945
    %1010 = vst [vmem:[#allocation2 + $0x20] sm:$0xff] %v946
    %1011 = vst [vmem:[#allocation2 + $0x28] sm:$0xff] %v947
    %1012 = vst [vmem:[#allocation2 + $0x30] sm:$0xff] %v948
    %1013 = vst [vmem:[#allocation2 + $0x38] sm:$0xff] %v949
    %1014 = vst [vmem:[#allocation2 + $0x40] sm:$0xff] %v950
    %1015 = vst [vmem:[#allocation2 + $0x48] sm:$0xff] %v951
    %1016 = vst [vmem:[#allocation2 + $0x50] sm:$0xff] %v952
    %1017 = vst [vmem:[#allocation2 + $0x58] sm:$0xff] %v953
    %1018 = vst [vmem:[#allocation2 + $0x60] sm:$0xff] %v954
    %1019 = vst [vmem:[#allocation2 + $0x68] sm:$0xff] %v955
    %1020 = vst [vmem:[#allocation2 + $0x70] sm:$0xff] %v956
    %1021 = vst [vmem:[#allocation2 + $0x78] sm:$0xff] %v957
    %1022 = vst [vmem:[#allocation2 + $0x80] sm:$0xff] %v958
    %1023 = vst [vmem:[#allocation2 + $0x88] sm:$0xff] %v959
    %1024 = vst [vmem:[#allocation2 + $0x90] sm:$0xff] %v960
    %1025 = vst [vmem:[#allocation2 + $0x98] sm:$0xff] %v961
    %1026 = vst [vmem:[#allocation2 + $0xa0] sm:$0xff] %v962
    %1027 = vst [vmem:[#allocation2 + $0xa8] sm:$0xff] %v963
    %1028 = vst [vmem:[#allocation2 + $0xb0] sm:$0xff] %v964
    %1029 = vst [vmem:[#allocation2 + $0xb8] sm:$0xff] %v965
    %1030 = vst [vmem:[#allocation2 + $0xc0] sm:$0xff] %v966
    %1031 = vst [vmem:[#allocation2 + $0xc8] sm:$0xff] %v967
    %1032 = vst [vmem:[#allocation2 + $0xd0] sm:$0xff] %v968
    %1033 = vst [vmem:[#allocation2 + $0xd8] sm:$0xff] %v969
    %1034 = vst [vmem:[#allocation2 + $0xe0] sm:$0xff] %v970
    %1035 = vst [vmem:[#allocation2 + $0xe8] sm:$0xff] %v971
    %1036 = vst [vmem:[#allocation2 + $0xf0] sm:$0xff] %v972
    %1037 = vst [vmem:[#allocation2 + $0xf8] sm:$0xff] %v973
    // Predicated region
    $region10: #{_lambda_.7} parent=1 // pred_check
      _
    $region11: #{_lambda_.7} parent=1 // pred_check_branch
      %1039 = sbr.rel (0) target = $region13
    $region12: #{_lambda_.7} parent=1 // pred_region
      %s1041 = ssub.s32 4096, 4096
      %1042 = vsyncadd [#allocation3], %s1041
      %s1043 = sshll.u32 [#allocation2], 4
      %s1044 = int_to_ptr.vmem [resolvable:$true] %s1043
      %1049 = dma.vmem_to_hbm [thread:$0]  %s1044, 4096, %s2, [#allocation3], 128, 128, 8
    $region13: #{_lambda_.7} parent=1 // pred_fallthru
      _
    // Predicated region
    $region14: #{_lambda_.7} parent=1 // pred_check
      _
    $region15: #{_lambda_.7} parent=1 // pred_check_branch
      %1051 = sbr.rel (0) target = $region17
    $region16: #{_lambda_.7} parent=1 // pred_region
      %1052 = dma.done [#allocation3], 4096
    $region17: #{_lambda_.7} parent=1 // pred_fallthru
      _
    %1053 = vsyncpa [#allocation3], 1

// kernel: _lambda_.6
$region0: #{_lambda_.6}
  #allocation0 [shape = 'u32[]', space=smem, size = 0x4, offset = 0x4, fixed_abs, tag = 'smem constant byte address 0x4 - core index']
  #allocation1 [shape = 'u32[144,128]{1,0:T(1,128)}', space=vmem, size = 0x12000, scoped, tag = 'internal scratch']
  #allocation2 [shape = 'f32[256,128]{1,0:T(8,128)}', space=vmem, size = 0x20000, scoped, tag = 'scratch operand']
  #allocation3 [shape = 'f32[256,128]{1,0:T(8,128)}', space=vmem, size = 0x20000, scoped, tag = 'scratch operand']
  %s0 = inlined_call_operand.vmem [shape: bf16[256,256], index: 0, kind: input, shape index: {}]
  %s1 = inlined_call_operand.vmem [shape: bf16[256,256], index: 1, kind: input, shape index: {}]
  %s2 = inlined_call_operand.vmem [shape: bf16[256,256], index: 2, kind: input, shape index: {}]
  %s3 = inlined_call_operand.vmem [shape: bf16[256,128], index: 3, kind: output, shape index: {0}]
  %s4 = inlined_call_operand.vmem [shape: bf16[256,128], index: 4, kind: output, shape index: {1}]
  %5 = xla_tuple %s3, %s4
  %s6 = sld [smem:[#allocation0]]
  $region38: #{_lambda_.6} parent=0
    _
  %s8 = ssub.s32 1, %s6
  %s9 = scalar_select 0, %s8, %s6
  // Predicated region
  $region2: #{_lambda_.6} parent=0 // pred_check
    _
  $region3: #{_lambda_.6} parent=0 // pred_check_branch
    %11 = sbr.rel (0) target = $region5
  $region4: #{_lambda_.6} parent=0 // pred_region
    _
  $region5: #{_lambda_.6} parent=0 // pred_fallthru
    _
  // Predicated region
  $region6: #{_lambda_.6} parent=0 // pred_check
    _
  $region7: #{_lambda_.6} parent=0 // pred_check_branch
    %13 = sbr.rel (0) target = $region9
  $region8: #{_lambda_.6} parent=0 // pred_region
    _
  $region9: #{_lambda_.6} parent=0 // pred_fallthru
    _
  // Predicated region
  $region10: #{_lambda_.6} parent=0 // pred_check
    _
  $region11: #{_lambda_.6} parent=0 // pred_check_branch
    %15 = sbr.rel (0) target = $region13
  $region12: #{_lambda_.6} parent=0 // pred_region
    _
  $region13: #{_lambda_.6} parent=0 // pred_fallthru
    _
  %p17 = scmp.eq.s32.totalorder 0, 0
  // Predicated region
  $region14: #{_lambda_.6} parent=0 // pred_check
    %p18 = pneg %p17
  $region15: #{_lambda_.6} parent=0 // pred_check_branch
    %20 = sbr.rel (%p18) target = $region17
  $region16: #{_lambda_.6} parent=0 // pred_region
    %21 = vst [vmem:[#allocation2] sm:$0xff] 0.0
    %22 = vst [vmem:[#allocation2 + $0x8] sm:$0xff] 0.0
    %23 = vst [vmem:[#allocation2 + $0x10] sm:$0xff] 0.0
    %24 = vst [vmem:[#allocation2 + $0x18] sm:$0xff] 0.0
    %25 = vst [vmem:[#allocation2 + $0x20] sm:$0xff] 0.0
    %26 = vst [vmem:[#allocation2 + $0x28] sm:$0xff] 0.0
    %27 = vst [vmem:[#allocation2 + $0x30] sm:$0xff] 0.0
    %28 = vst [vmem:[#allocation2 + $0x38] sm:$0xff] 0.0
    %29 = vst [vmem:[#allocation2 + $0x40] sm:$0xff] 0.0
    %30 = vst [vmem:[#allocation2 + $0x48] sm:$0xff] 0.0
    %31 = vst [vmem:[#allocation2 + $0x50] sm:$0xff] 0.0
    %32 = vst [vmem:[#allocation2 + $0x58] sm:$0xff] 0.0
    %33 = vst [vmem:[#allocation2 + $0x60] sm:$0xff] 0.0
    %34 = vst [vmem:[#allocation2 + $0x68] sm:$0xff] 0.0
    %35 = vst [vmem:[#allocation2 + $0x70] sm:$0xff] 0.0
    %36 = vst [vmem:[#allocation2 + $0x78] sm:$0xff] 0.0
    %37 = vst [vmem:[#allocation2 + $0x80] sm:$0xff] 0.0
    %38 = vst [vmem:[#allocation2 + $0x88] sm:$0xff] 0.0
    %39 = vst [vmem:[#allocation2 + $0x90] sm:$0xff] 0.0
    %40 = vst [vmem:[#allocation2 + $0x98] sm:$0xff] 0.0
    %41 = vst [vmem:[#allocation2 + $0xa0] sm:$0xff] 0.0
    %42 = vst [vmem:[#allocation2 + $0xa8] sm:$0xff] 0.0
    %43 = vst [vmem:[#allocation2 + $0xb0] sm:$0xff] 0.0
    %44 = vst [vmem:[#allocation2 + $0xb8] sm:$0xff] 0.0
    %45 = vst [vmem:[#allocation2 + $0xc0] sm:$0xff] 0.0
    %46 = vst [vmem:[#allocation2 + $0xc8] sm:$0xff] 0.0
    %47 = vst [vmem:[#allocation2 + $0xd0] sm:$0xff] 0.0
    %48 = vst [vmem:[#allocation2 + $0xd8] sm:$0xff] 0.0
    %49 = vst [vmem:[#allocation2 + $0xe0] sm:$0xff] 0.0
    %50 = vst [vmem:[#allocation2 + $0xe8] sm:$0xff] 0.0
    %51 = vst [vmem:[#allocation2 + $0xf0] sm:$0xff] 0.0
    %52 = vst [vmem:[#allocation2 + $0xf8] sm:$0xff] 0.0
    %53 = vst [vmem:[#allocation3] sm:$0xff] 0.0
    %54 = vst [vmem:[#allocation3 + $0x8] sm:$0xff] 0.0
    %55 = vst [vmem:[#allocation3 + $0x10] sm:$0xff] 0.0
    %56 = vst [vmem:[#allocation3 + $0x18] sm:$0xff] 0.0
    %57 = vst [vmem:[#allocation3 + $0x20] sm:$0xff] 0.0
    %58 = vst [vmem:[#allocation3 + $0x28] sm:$0xff] 0.0
    %59 = vst [vmem:[#allocation3 + $0x30] sm:$0xff] 0.0
    %60 = vst [vmem:[#allocation3 + $0x38] sm:$0xff] 0.0
    %61 = vst [vmem:[#allocation3 + $0x40] sm:$0xff] 0.0
    %62 = vst [vmem:[#allocation3 + $0x48] sm:$0xff] 0.0
    %63 = vst [vmem:[#allocation3 + $0x50] sm:$0xff] 0.0
    %64 = vst [vmem:[#allocation3 + $0x58] sm:$0xff] 0.0
    %65 = vst [vmem:[#allocation3 + $0x60] sm:$0xff] 0.0
    %66 = vst [vmem:[#allocation3 + $0x68] sm:$0xff] 0.0
    %67 = vst [vmem:[#allocation3 + $0x70] sm:$0xff] 0.0
    %68 = vst [vmem:[#allocation3 + $0x78] sm:$0xff] 0.0
    %69 = vst [vmem:[#allocation3 + $0x80] sm:$0xff] 0.0
    %70 = vst [vmem:[#allocation3 + $0x88] sm:$0xff] 0.0
    %71 = vst [vmem:[#allocation3 + $0x90] sm:$0xff] 0.0
    %72 = vst [vmem:[#allocation3 + $0x98] sm:$0xff] 0.0
    %73 = vst [vmem:[#allocation3 + $0xa0] sm:$0xff] 0.0
    %74 = vst [vmem:[#allocation3 + $0xa8] sm:$0xff] 0.0
    %75 = vst [vmem:[#allocation3 + $0xb0] sm:$0xff] 0.0
    %76 = vst [vmem:[#allocation3 + $0xb8] sm:$0xff] 0.0
    %77 = vst [vmem:[#allocation3 + $0xc0] sm:$0xff] 0.0
    %78 = vst [vmem:[#allocation3 + $0xc8] sm:$0xff] 0.0
    %79 = vst [vmem:[#allocation3 + $0xd0] sm:$0xff] 0.0
    %80 = vst [vmem:[#allocation3 + $0xd8] sm:$0xff] 0.0
    %81 = vst [vmem:[#allocation3 + $0xe0] sm:$0xff] 0.0
    %82 = vst [vmem:[#allocation3 + $0xe8] sm:$0xff] 0.0
    %83 = vst [vmem:[#allocation3 + $0xf0] sm:$0xff] 0.0
    %84 = vst [vmem:[#allocation3 + $0xf8] sm:$0xff] 0.0
  $region17: #{_lambda_.6} parent=0 // pred_fallthru
    _
  %v85 = vld [vmem:[%s2] sm:$0xff]
  %v86 = vld [vmem:[%s2 + $0x8] sm:$0xff]
  %v87 = vld [vmem:[%s2 + $0x10] sm:$0xff]
  %v88 = vld [vmem:[%s2 + $0x18] sm:$0xff]
  %v89 = vld [vmem:[%s2 + $0x20] sm:$0xff]
  %v90 = vld [vmem:[%s2 + $0x28] sm:$0xff]
  %v91 = vld [vmem:[%s2 + $0x30] sm:$0xff]
  %v92 = vld [vmem:[%s2 + $0x38] sm:$0xff]
  %v93 = vld [vmem:[%s2 + $0x40] sm:$0xff]
  %v94 = vld [vmem:[%s2 + $0x48] sm:$0xff]
  %v95 = vld [vmem:[%s2 + $0x50] sm:$0xff]
  %v96 = vld [vmem:[%s2 + $0x58] sm:$0xff]
  %v97 = vld [vmem:[%s2 + $0x60] sm:$0xff]
  %v98 = vld [vmem:[%s2 + $0x68] sm:$0xff]
  %v99 = vld [vmem:[%s2 + $0x70] sm:$0xff]
  %v100 = vld [vmem:[%s2 + $0x78] sm:$0xff]
  %v101 = vld [vmem:[%s2 + $0x80] sm:$0xff]
  %v102 = vld [vmem:[%s2 + $0x88] sm:$0xff]
  %v103 = vld [vmem:[%s2 + $0x90] sm:$0xff]
  %v104 = vld [vmem:[%s2 + $0x98] sm:$0xff]
  %v105 = vld [vmem:[%s2 + $0xa0] sm:$0xff]
  %v106 = vld [vmem:[%s2 + $0xa8] sm:$0xff]
  %v107 = vld [vmem:[%s2 + $0xb0] sm:$0xff]
  %v108 = vld [vmem:[%s2 + $0xb8] sm:$0xff]
  %v109 = vld [vmem:[%s2 + $0xc0] sm:$0xff]
  %v110 = vld [vmem:[%s2 + $0xc8] sm:$0xff]
  %v111 = vld [vmem:[%s2 + $0xd0] sm:$0xff]
  %v112 = vld [vmem:[%s2 + $0xd8] sm:$0xff]
  %v113 = vld [vmem:[%s2 + $0xe0] sm:$0xff]
  %v114 = vld [vmem:[%s2 + $0xe8] sm:$0xff]
  %v115 = vld [vmem:[%s2 + $0xf0] sm:$0xff]
  %v116 = vld [vmem:[%s2 + $0xf8] sm:$0xff]
  %v117 = vld [vmem:[#allocation2] sm:$0xff]
  %v118 = vld [vmem:[#allocation2 + $0x8] sm:$0xff]
  %v119 = vld [vmem:[#allocation2 + $0x10] sm:$0xff]
  %v120 = vld [vmem:[#allocation2 + $0x18] sm:$0xff]
  %v121 = vld [vmem:[#allocation2 + $0x20] sm:$0xff]
  %v122 = vld [vmem:[#allocation2 + $0x28] sm:$0xff]
  %v123 = vld [vmem:[#allocation2 + $0x30] sm:$0xff]
  %v124 = vld [vmem:[#allocation2 + $0x38] sm:$0xff]
  %v125 = vld [vmem:[#allocation2 + $0x40] sm:$0xff]
  %v126 = vld [vmem:[#allocation2 + $0x48] sm:$0xff]
  %v127 = vld [vmem:[#allocation2 + $0x50] sm:$0xff]
  %v128 = vld [vmem:[#allocation2 + $0x58] sm:$0xff]
  %v129 = vld [vmem:[#allocation2 + $0x60] sm:$0xff]
  %v130 = vld [vmem:[#allocation2 + $0x68] sm:$0xff]
  %v131 = vld [vmem:[#allocation2 + $0x70] sm:$0xff]
  %v132 = vld [vmem:[#allocation2 + $0x78] sm:$0xff]
  %v133 = vld [vmem:[#allocation2 + $0x80] sm:$0xff]
  %v134 = vld [vmem:[#allocation2 + $0x88] sm:$0xff]
  %v135 = vld [vmem:[#allocation2 + $0x90] sm:$0xff]
  %v136 = vld [vmem:[#allocation2 + $0x98] sm:$0xff]
  %v137 = vld [vmem:[#allocation2 + $0xa0] sm:$0xff]
  %v138 = vld [vmem:[#allocation2 + $0xa8] sm:$0xff]
  %v139 = vld [vmem:[#allocation2 + $0xb0] sm:$0xff]
  %v140 = vld [vmem:[#allocation2 + $0xb8] sm:$0xff]
  %v141 = vld [vmem:[#allocation2 + $0xc0] sm:$0xff]
  %v142 = vld [vmem:[#allocation2 + $0xc8] sm:$0xff]
  %v143 = vld [vmem:[#allocation2 + $0xd0] sm:$0xff]
  %v144 = vld [vmem:[#allocation2 + $0xd8] sm:$0xff]
  %v145 = vld [vmem:[#allocation2 + $0xe0] sm:$0xff]
  %v146 = vld [vmem:[#allocation2 + $0xe8] sm:$0xff]
  %v147 = vld [vmem:[#allocation2 + $0xf0] sm:$0xff]
  %v148 = vld [vmem:[#allocation2 + $0xf8] sm:$0xff]
  %v149 = vld [vmem:[%s0] sm:$0xff]
  %v150 = vld [vmem:[%s0 + $0x8] sm:$0xff]
  %v151 = vld [vmem:[%s0 + $0x10] sm:$0xff]
  %v152 = vld [vmem:[%s0 + $0x18] sm:$0xff]
  %v153 = vld [vmem:[%s0 + $0x20] sm:$0xff]
  %v154 = vld [vmem:[%s0 + $0x28] sm:$0xff]
  %v155 = vld [vmem:[%s0 + $0x30] sm:$0xff]
  %v156 = vld [vmem:[%s0 + $0x38] sm:$0xff]
  %v157 = vld [vmem:[%s0 + $0x40] sm:$0xff]
  %v158 = vld [vmem:[%s0 + $0x48] sm:$0xff]
  %v159 = vld [vmem:[%s0 + $0x50] sm:$0xff]
  %v160 = vld [vmem:[%s0 + $0x58] sm:$0xff]
  %v161 = vld [vmem:[%s0 + $0x60] sm:$0xff]
  %v162 = vld [vmem:[%s0 + $0x68] sm:$0xff]
  %v163 = vld [vmem:[%s0 + $0x70] sm:$0xff]
  %v164 = vld [vmem:[%s0 + $0x78] sm:$0xff]
  %v165 = vld [vmem:[%s0 + $0x80] sm:$0xff]
  %v166 = vld [vmem:[%s0 + $0x88] sm:$0xff]
  %v167 = vld [vmem:[%s0 + $0x90] sm:$0xff]
  %v168 = vld [vmem:[%s0 + $0x98] sm:$0xff]
  %v169 = vld [vmem:[%s0 + $0xa0] sm:$0xff]
  %v170 = vld [vmem:[%s0 + $0xa8] sm:$0xff]
  %v171 = vld [vmem:[%s0 + $0xb0] sm:$0xff]
  %v172 = vld [vmem:[%s0 + $0xb8] sm:$0xff]
  %v173 = vld [vmem:[%s0 + $0xc0] sm:$0xff]
  %v174 = vld [vmem:[%s0 + $0xc8] sm:$0xff]
  %v175 = vld [vmem:[%s0 + $0xd0] sm:$0xff]
  %v176 = vld [vmem:[%s0 + $0xd8] sm:$0xff]
  %v177 = vld [vmem:[%s0 + $0xe0] sm:$0xff]
  %v178 = vld [vmem:[%s0 + $0xe8] sm:$0xff]
  %v179 = vld [vmem:[%s0 + $0xf0] sm:$0xff]
  %v180 = vld [vmem:[%s0 + $0xf8] sm:$0xff]
  %v213 = vunpack.c.l.b16 %v149
  %v214 = vunpack.c.h.b16 %v149
  %v215 = vunpack.c.l.b16 %v150
  %v216 = vunpack.c.h.b16 %v150
  %v217 = vunpack.c.l.b16 %v151
  %v218 = vunpack.c.h.b16 %v151
  %v219 = vunpack.c.l.b16 %v152
  %v220 = vunpack.c.h.b16 %v152
  %v221 = vunpack.c.l.b16 %v153
  %v222 = vunpack.c.h.b16 %v153
  %v223 = vunpack.c.l.b16 %v154
  %v224 = vunpack.c.h.b16 %v154
  %v225 = vunpack.c.l.b16 %v155
  %v226 = vunpack.c.h.b16 %v155
  %v227 = vunpack.c.l.b16 %v156
  %v228 = vunpack.c.h.b16 %v156
  %v229 = vunpack.c.l.b16 %v157
  %v230 = vunpack.c.h.b16 %v157
  %v231 = vunpack.c.l.b16 %v158
  %v232 = vunpack.c.h.b16 %v158
  %v233 = vunpack.c.l.b16 %v159
  %v234 = vunpack.c.h.b16 %v159
  %v235 = vunpack.c.l.b16 %v160
  %v236 = vunpack.c.h.b16 %v160
  %v237 = vunpack.c.l.b16 %v161
  %v238 = vunpack.c.h.b16 %v161
  %v239 = vunpack.c.l.b16 %v162
  %v240 = vunpack.c.h.b16 %v162
  %v241 = vunpack.c.l.b16 %v163
  %v242 = vunpack.c.h.b16 %v163
  %v243 = vunpack.c.l.b16 %v164
  %v244 = vunpack.c.h.b16 %v164
  %v245 = vunpack.c.l.b16 %v165
  %v246 = vunpack.c.h.b16 %v165
  %v247 = vunpack.c.l.b16 %v166
  %v248 = vunpack.c.h.b16 %v166
  %v249 = vunpack.c.l.b16 %v167
  %v250 = vunpack.c.h.b16 %v167
  %v251 = vunpack.c.l.b16 %v168
  %v252 = vunpack.c.h.b16 %v168
  %v253 = vunpack.c.l.b16 %v169
  %v254 = vunpack.c.h.b16 %v169
  %v255 = vunpack.c.l.b16 %v170
  %v256 = vunpack.c.h.b16 %v170
  %v257 = vunpack.c.l.b16 %v171
  %v258 = vunpack.c.h.b16 %v171
  %v259 = vunpack.c.l.b16 %v172
  %v260 = vunpack.c.h.b16 %v172
  %v261 = vunpack.c.l.b16 %v173
  %v262 = vunpack.c.h.b16 %v173
  %v263 = vunpack.c.l.b16 %v174
  %v264 = vunpack.c.h.b16 %v174
  %v265 = vunpack.c.l.b16 %v175
  %v266 = vunpack.c.h.b16 %v175
  %v267 = vunpack.c.l.b16 %v176
  %v268 = vunpack.c.h.b16 %v176
  %v269 = vunpack.c.l.b16 %v177
  %v270 = vunpack.c.h.b16 %v177
  %v271 = vunpack.c.l.b16 %v178
  %v272 = vunpack.c.h.b16 %v178
  %v273 = vunpack.c.l.b16 %v179
  %v274 = vunpack.c.h.b16 %v179
  %v275 = vunpack.c.l.b16 %v180
  %v276 = vunpack.c.h.b16 %v180
  %v277 = vpack.c.b16 %v215, %v213
  %v278 = vpack.c.b16 %v216, %v214
  %v279 = vpack.c.b16 %v219, %v217
  %v280 = vpack.c.b16 %v220, %v218
  %v281 = vpack.c.b16 %v223, %v221
  %v282 = vpack.c.b16 %v224, %v222
  %v283 = vpack.c.b16 %v227, %v225
  %v284 = vpack.c.b16 %v228, %v226
  %v285 = vpack.c.b16 %v231, %v229
  %v286 = vpack.c.b16 %v232, %v230
  %v287 = vpack.c.b16 %v235, %v233
  %v288 = vpack.c.b16 %v236, %v234
  %v289 = vpack.c.b16 %v239, %v237
  %v290 = vpack.c.b16 %v240, %v238
  %v291 = vpack.c.b16 %v243, %v241
  %v292 = vpack.c.b16 %v244, %v242
  %v293 = vpack.c.b16 %v247, %v245
  %v294 = vpack.c.b16 %v248, %v246
  %v295 = vpack.c.b16 %v251, %v249
  %v296 = vpack.c.b16 %v252, %v250
  %v297 = vpack.c.b16 %v255, %v253
  %v298 = vpack.c.b16 %v256, %v254
  %v299 = vpack.c.b16 %v259, %v257
  %v300 = vpack.c.b16 %v260, %v258
  %v301 = vpack.c.b16 %v263, %v261
  %v302 = vpack.c.b16 %v264, %v262
  %v303 = vpack.c.b16 %v267, %v265
  %v304 = vpack.c.b16 %v268, %v266
  %v305 = vpack.c.b16 %v271, %v269
  %v306 = vpack.c.b16 %v272, %v270
  %v307 = vpack.c.b16 %v275, %v273
  %v308 = vpack.c.b16 %v276, %v274
  %v373 = vunpack.c.l.b16 %v85
  %v374 = vunpack.c.l.b16 %v86
  %v375 = vunpack.c.l.b16 %v87
  %v376 = vunpack.c.l.b16 %v88
  %v377 = vunpack.c.l.b16 %v89
  %v378 = vunpack.c.l.b16 %v90
  %v379 = vunpack.c.l.b16 %v91
  %v380 = vunpack.c.l.b16 %v92
  %v381 = vunpack.c.l.b16 %v93
  %v382 = vunpack.c.l.b16 %v94
  %v383 = vunpack.c.l.b16 %v95
  %v384 = vunpack.c.l.b16 %v96
  %v385 = vunpack.c.l.b16 %v97
  %v386 = vunpack.c.l.b16 %v98
  %v387 = vunpack.c.l.b16 %v99
  %v388 = vunpack.c.l.b16 %v100
  %v389 = vunpack.c.l.b16 %v101
  %v390 = vunpack.c.l.b16 %v102
  %v391 = vunpack.c.l.b16 %v103
  %v392 = vunpack.c.l.b16 %v104
  %v393 = vunpack.c.l.b16 %v105
  %v394 = vunpack.c.l.b16 %v106
  %v395 = vunpack.c.l.b16 %v107
  %v396 = vunpack.c.l.b16 %v108
  %v397 = vunpack.c.l.b16 %v109
  %v398 = vunpack.c.l.b16 %v110
  %v399 = vunpack.c.l.b16 %v111
  %v400 = vunpack.c.l.b16 %v112
  %v401 = vunpack.c.l.b16 %v113
  %v402 = vunpack.c.l.b16 %v114
  %v403 = vunpack.c.l.b16 %v115
  %v404 = vunpack.c.l.b16 %v116
  %v405 = vpack.c.b16 %v374, %v373
  %v406 = vpack.c.b16 %v376, %v375
  %v407 = vpack.c.b16 %v378, %v377
  %v408 = vpack.c.b16 %v380, %v379
  %v409 = vpack.c.b16 %v382, %v381
  %v410 = vpack.c.b16 %v384, %v383
  %v411 = vpack.c.b16 %v386, %v385
  %v412 = vpack.c.b16 %v388, %v387
  %v413 = vpack.c.b16 %v390, %v389
  %v414 = vpack.c.b16 %v392, %v391
  %v415 = vpack.c.b16 %v394, %v393
  %v416 = vpack.c.b16 %v396, %v395
  %v417 = vpack.c.b16 %v398, %v397
  %v418 = vpack.c.b16 %v400, %v399
  %v419 = vpack.c.b16 %v402, %v401
  %v420 = vpack.c.b16 %v404, %v403
  %437 = vmatprep.subr.bf16.mxu0 0
  %438 = vmatpush1.bf16.msra.mxu0 %v405
  %439 = vmatprep.subr.bf16.mxu0 0
  %440 = vmatpush1.bf16.msra.mxu0 %v406
  %441 = vmatprep.subr.bf16.mxu0 0
  %442 = vmatpush1.bf16.msra.mxu0 %v407
  %443 = vmatprep.subr.bf16.mxu0 0
  %444 = vmatpush1.bf16.msra.mxu0 %v408
  %445 = vmatprep.subr.bf16.mxu0 0
  %446 = vmatpush1.bf16.msra.mxu0 %v409
  %447 = vmatprep.subr.bf16.mxu0 0
  %448 = vmatpush1.bf16.msra.mxu0 %v410
  %449 = vmatprep.subr.bf16.mxu0 0
  %450 = vmatpush1.bf16.msra.mxu0 %v411
  %451 = vmatprep.subr.bf16.mxu0 0
  %452 = vmatpush1.bf16.msra.mxu0 %v412
  %453 = vmatprep.subr.bf16.mxu0 0
  %454 = vmatpush1.bf16.msra.mxu0 %v413
  %455 = vmatprep.subr.bf16.mxu0 0
  %456 = vmatpush1.bf16.msra.mxu0 %v414
  %457 = vmatprep.subr.bf16.mxu0 0
  %458 = vmatpush1.bf16.msra.mxu0 %v415
  %459 = vmatprep.subr.bf16.mxu0 0
  %460 = vmatpush1.bf16.msra.mxu0 %v416
  %461 = vmatprep.subr.bf16.mxu0 0
  %462 = vmatpush1.bf16.msra.mxu0 %v417
  %463 = vmatprep.subr.bf16.mxu0 0
  %464 = vmatpush1.bf16.msra.mxu0 %v418
  %465 = vmatprep.subr.bf16.mxu0 0
  %466 = vmatpush1.bf16.msra.mxu0 %v419
  %467 = vmatprep.subr.bf16.mxu0 0
  %468 = vmatpush1.bf16.msra.mxu0 %v420
  %469 = vmatprep.mubr.bf16.mxu0 %v278
  %470 = vmatmul.mubr.bf16.gmra.mrb[0].mxu0 %v277
  %v471 = vpop.f32.mrb[0].mxu0
  %v472 = vadd.f32 0.0, %v471
  %v473 = vpop.f32.mrb[0].mxu0
  %v474 = vpop.f32.mrb[0].mxu0
  %v475 = vadd.f32 0.0, %v474
  %v476 = vpop.f32.mrb[0].mxu0
  %477 = vmatprep.mubr.bf16.mxu0 %v280
  %478 = vmatmul.mubr.bf16.gmra.mrb[0].mxu0 %v279
  %v479 = vpop.f32.mrb[0].mxu0
  %v480 = vadd.f32 0.0, %v479
  %v481 = vpop.f32.mrb[0].mxu0
  %v482 = vpop.f32.mrb[0].mxu0
  %v483 = vadd.f32 0.0, %v482
  %v484 = vpop.f32.mrb[0].mxu0
  %485 = vmatprep.mubr.bf16.mxu0 %v282
  %486 = vmatmul.mubr.bf16.gmra.mrb[0].mxu0 %v281
  %v487 = vpop.f32.mrb[0].mxu0
  %v488 = vadd.f32 0.0, %v487
  %v489 = vpop.f32.mrb[0].mxu0
  %v490 = vpop.f32.mrb[0].mxu0
  %v491 = vadd.f32 0.0, %v490
  %v492 = vpop.f32.mrb[0].mxu0
  %493 = vmatprep.mubr.bf16.mxu0 %v284
  %494 = vmatmul.mubr.bf16.gmra.mrb[0].mxu0 %v283
  %v495 = vpop.f32.mrb[0].mxu0
  %v496 = vadd.f32 0.0, %v495
  %v497 = vpop.f32.mrb[0].mxu0
  %v498 = vpop.f32.mrb[0].mxu0
  %v499 = vadd.f32 0.0, %v498
  %v500 = vpop.f32.mrb[0].mxu0
  %501 = vmatprep.mubr.bf16.mxu0 %v286
  %502 = vmatmul.mubr.bf16.gmra.mrb[0].mxu0 %v285
  %v503 = vpop.f32.mrb[0].mxu0
  %v504 = vadd.f32 0.0, %v503
  %v505 = vpop.f32.mrb[0].mxu0
  %v506 = vpop.f32.mrb[0].mxu0
  %v507 = vadd.f32 0.0, %v506
  %v508 = vpop.f32.mrb[0].mxu0
  %509 = vmatprep.mubr.bf16.mxu0 %v288
  %510 = vmatmul.mubr.bf16.gmra.mrb[0].mxu0 %v287
  %v511 = vpop.f32.mrb[0].mxu0
  %v512 = vadd.f32 0.0, %v511
  %v513 = vpop.f32.mrb[0].mxu0
  %v514 = vpop.f32.mrb[0].mxu0
  %v515 = vadd.f32 0.0, %v514
  %v516 = vpop.f32.mrb[0].mxu0
  %517 = vmatprep.mubr.bf16.mxu0 %v290
  %518 = vmatmul.mubr.bf16.gmra.mrb[0].mxu0 %v289
  %v519 = vpop.f32.mrb[0].mxu0
  %v520 = vadd.f32 0.0, %v519
  %v521 = vpop.f32.mrb[0].mxu0
  %v522 = vpop.f32.mrb[0].mxu0
  %v523 = vadd.f32 0.0, %v522
  %v524 = vpop.f32.mrb[0].mxu0
  %525 = vmatprep.mubr.bf16.mxu0 %v292
  %526 = vmatmul.mubr.bf16.gmra.mrb[0].mxu0 %v291
  %v527 = vpop.f32.mrb[0].mxu0
  %v528 = vadd.f32 0.0, %v527
  %v529 = vpop.f32.mrb[0].mxu0
  %v530 = vpop.f32.mrb[0].mxu0
  %v531 = vadd.f32 0.0, %v530
  %v532 = vpop.f32.mrb[0].mxu0
  %533 = vmatprep.mubr.bf16.mxu0 %v294
  %534 = vmatmul.mubr.bf16.gmra.mrb[0].mxu0 %v293
  %v535 = vpop.f32.mrb[0].mxu0
  %v536 = vadd.f32 0.0, %v535
  %v537 = vpop.f32.mrb[0].mxu0
  %v538 = vpop.f32.mrb[0].mxu0
  %v539 = vadd.f32 0.0, %v538
  %v540 = vpop.f32.mrb[0].mxu0
  %541 = vmatprep.mubr.bf16.mxu0 %v296
  %542 = vmatmul.mubr.bf16.gmra.mrb[0].mxu0 %v295
  %v543 = vpop.f32.mrb[0].mxu0
  %v544 = vadd.f32 0.0, %v543
  %v545 = vpop.f32.mrb[0].mxu0
  %v546 = vpop.f32.mrb[0].mxu0
  %v547 = vadd.f32 0.0, %v546
  %v548 = vpop.f32.mrb[0].mxu0
  %549 = vmatprep.mubr.bf16.mxu0 %v298
  %550 = vmatmul.mubr.bf16.gmra.mrb[0].mxu0 %v297
  %v551 = vpop.f32.mrb[0].mxu0
  %v552 = vadd.f32 0.0, %v551
  %v553 = vpop.f32.mrb[0].mxu0
  %v554 = vpop.f32.mrb[0].mxu0
  %v555 = vadd.f32 0.0, %v554
  %v556 = vpop.f32.mrb[0].mxu0
  %557 = vmatprep.mubr.bf16.mxu0 %v300
  %558 = vmatmul.mubr.bf16.gmra.mrb[0].mxu0 %v299
  %v559 = vpop.f32.mrb[0].mxu0
  %v560 = vadd.f32 0.0, %v559
  %v561 = vpop.f32.mrb[0].mxu0
  %v562 = vpop.f32.mrb[0].mxu0
  %v563 = vadd.f32 0.0, %v562
  %v564 = vpop.f32.mrb[0].mxu0
  %565 = vmatprep.mubr.bf16.mxu0 %v302
  %566 = vmatmul.mubr.bf16.gmra.mrb[0].mxu0 %v301
  %v567 = vpop.f32.mrb[0].mxu0
  %v568 = vadd.f32 0.0, %v567
  %v569 = vpop.f32.mrb[0].mxu0
  %v570 = vpop.f32.mrb[0].mxu0
  %v571 = vadd.f32 0.0, %v570
  %v572 = vpop.f32.mrb[0].mxu0
  %573 = vmatprep.mubr.bf16.mxu0 %v304
  %574 = vmatmul.mubr.bf16.gmra.mrb[0].mxu0 %v303
  %v575 = vpop.f32.mrb[0].mxu0
  %v576 = vadd.f32 0.0, %v575
  %v577 = vpop.f32.mrb[0].mxu0
  %v578 = vpop.f32.mrb[0].mxu0
  %v579 = vadd.f32 0.0, %v578
  %v580 = vpop.f32.mrb[0].mxu0
  %581 = vmatprep.mubr.bf16.mxu0 %v306
  %582 = vmatmul.mubr.bf16.gmra.mrb[0].mxu0 %v305
  %v583 = vpop.f32.mrb[0].mxu0
  %v584 = vadd.f32 0.0, %v583
  %v585 = vpop.f32.mrb[0].mxu0
  %v586 = vpop.f32.mrb[0].mxu0
  %v587 = vadd.f32 0.0, %v586
  %v588 = vpop.f32.mrb[0].mxu0
  %589 = vmatprep.mubr.bf16.mxu0 %v308
  %590 = vmatmul.mubr.bf16.gmra.mrb[0].mxu0 %v307
  %v591 = vpop.f32.mrb[0].mxu0
  %v592 = vadd.f32 0.0, %v591
  %v593 = vpop.f32.mrb[0].mxu0
  %v594 = vpop.f32.mrb[0].mxu0
  %v595 = vadd.f32 0.0, %v594
  %v596 = vpop.f32.mrb[0].mxu0
  %597 = vdwg.mxu0
  %v598 = vadd.f32 %v117, %v472
  %v599 = vadd.f32 %v118, %v475
  %v600 = vadd.f32 %v119, %v480
  %v601 = vadd.f32 %v120, %v483
  %v602 = vadd.f32 %v121, %v488
  %v603 = vadd.f32 %v122, %v491
  %v604 = vadd.f32 %v123, %v496
  %v605 = vadd.f32 %v124, %v499
  %v606 = vadd.f32 %v125, %v504
  %v607 = vadd.f32 %v126, %v507
  %v608 = vadd.f32 %v127, %v512
  %v609 = vadd.f32 %v128, %v515
  %v610 = vadd.f32 %v129, %v520
  %v611 = vadd.f32 %v130, %v523
  %v612 = vadd.f32 %v131, %v528
  %v613 = vadd.f32 %v132, %v531
  %v614 = vadd.f32 %v133, %v536
  %v615 = vadd.f32 %v134, %v539
  %v616 = vadd.f32 %v135, %v544
  %v617 = vadd.f32 %v136, %v547
  %v618 = vadd.f32 %v137, %v552
  %v619 = vadd.f32 %v138, %v555
  %v620 = vadd.f32 %v139, %v560
  %v621 = vadd.f32 %v140, %v563
  %v622 = vadd.f32 %v141, %v568
  %v623 = vadd.f32 %v142, %v571
  %v624 = vadd.f32 %v143, %v576
  %v625 = vadd.f32 %v144, %v579
  %v626 = vadd.f32 %v145, %v584
  %v627 = vadd.f32 %v146, %v587
  %v628 = vadd.f32 %v147, %v592
  %v629 = vadd.f32 %v148, %v595
  %630 = vst [vmem:[#allocation2] sm:$0xff] %v598
  %631 = vst [vmem:[#allocation2 + $0x8] sm:$0xff] %v599
  %632 = vst [vmem:[#allocation2 + $0x10] sm:$0xff] %v600
  %633 = vst [vmem:[#allocation2 + $0x18] sm:$0xff] %v601
  %634 = vst [vmem:[#allocation2 + $0x20] sm:$0xff] %v602
  %635 = vst [vmem:[#allocation2 + $0x28] sm:$0xff] %v603
  %636 = vst [vmem:[#allocation2 + $0x30] sm:$0xff] %v604
  %637 = vst [vmem:[#allocation2 + $0x38] sm:$0xff] %v605
  %638 = vst [vmem:[#allocation2 + $0x40] sm:$0xff] %v606
  %639 = vst [vmem:[#allocation2 + $0x48] sm:$0xff] %v607
  %640 = vst [vmem:[#allocation2 + $0x50] sm:$0xff] %v608
  %641 = vst [vmem:[#allocation2 + $0x58] sm:$0xff] %v609
  %642 = vst [vmem:[#allocation2 + $0x60] sm:$0xff] %v610
  %643 = vst [vmem:[#allocation2 + $0x68] sm:$0xff] %v611
  %644 = vst [vmem:[#allocation2 + $0x70] sm:$0xff] %v612
  %645 = vst [vmem:[#allocation2 + $0x78] sm:$0xff] %v613
  %646 = vst [vmem:[#allocation2 + $0x80] sm:$0xff] %v614
  %647 = vst [vmem:[#allocation2 + $0x88] sm:$0xff] %v615
  %648 = vst [vmem:[#allocation2 + $0x90] sm:$0xff] %v616
  %649 = vst [vmem:[#allocation2 + $0x98] sm:$0xff] %v617
  %650 = vst [vmem:[#allocation2 + $0xa0] sm:$0xff] %v618
  %651 = vst [vmem:[#allocation2 + $0xa8] sm:$0xff] %v619
  %652 = vst [vmem:[#allocation2 + $0xb0] sm:$0xff] %v620
  %653 = vst [vmem:[#allocation2 + $0xb8] sm:$0xff] %v621
  %654 = vst [vmem:[#allocation2 + $0xc0] sm:$0xff] %v622
  %655 = vst [vmem:[#allocation2 + $0xc8] sm:$0xff] %v623
  %656 = vst [vmem:[#allocation2 + $0xd0] sm:$0xff] %v624
  %657 = vst [vmem:[#allocation2 + $0xd8] sm:$0xff] %v625
  %658 = vst [vmem:[#allocation2 + $0xe0] sm:$0xff] %v626
  %659 = vst [vmem:[#allocation2 + $0xe8] sm:$0xff] %v627
  %660 = vst [vmem:[#allocation2 + $0xf0] sm:$0xff] %v628
  %661 = vst [vmem:[#allocation2 + $0xf8] sm:$0xff] %v629
  %v662 = vld [vmem:[#allocation3] sm:$0xff]
  %v663 = vld [vmem:[#allocation3 + $0x8] sm:$0xff]
  %v664 = vld [vmem:[#allocation3 + $0x10] sm:$0xff]
  %v665 = vld [vmem:[#allocation3 + $0x18] sm:$0xff]
  %v666 = vld [vmem:[#allocation3 + $0x20] sm:$0xff]
  %v667 = vld [vmem:[#allocation3 + $0x28] sm:$0xff]
  %v668 = vld [vmem:[#allocation3 + $0x30] sm:$0xff]
  %v669 = vld [vmem:[#allocation3 + $0x38] sm:$0xff]
  %v670 = vld [vmem:[#allocation3 + $0x40] sm:$0xff]
  %v671 = vld [vmem:[#allocation3 + $0x48] sm:$0xff]
  %v672 = vld [vmem:[#allocation3 + $0x50] sm:$0xff]
  %v673 = vld [vmem:[#allocation3 + $0x58] sm:$0xff]
  %v674 = vld [vmem:[#allocation3 + $0x60] sm:$0xff]
  %v675 = vld [vmem:[#allocation3 + $0x68] sm:$0xff]
  %v676 = vld [vmem:[#allocation3 + $0x70] sm:$0xff]
  %v677 = vld [vmem:[#allocation3 + $0x78] sm:$0xff]
  %v678 = vld [vmem:[#allocation3 + $0x80] sm:$0xff]
  %v679 = vld [vmem:[#allocation3 + $0x88] sm:$0xff]
  %v680 = vld [vmem:[#allocation3 + $0x90] sm:$0xff]
  %v681 = vld [vmem:[#allocation3 + $0x98] sm:$0xff]
  %v682 = vld [vmem:[#allocation3 + $0xa0] sm:$0xff]
  %v683 = vld [vmem:[#allocation3 + $0xa8] sm:$0xff]
  %v684 = vld [vmem:[#allocation3 + $0xb0] sm:$0xff]
  %v685 = vld [vmem:[#allocation3 + $0xb8] sm:$0xff]
  %v686 = vld [vmem:[#allocation3 + $0xc0] sm:$0xff]
  %v687 = vld [vmem:[#allocation3 + $0xc8] sm:$0xff]
  %v688 = vld [vmem:[#allocation3 + $0xd0] sm:$0xff]
  %v689 = vld [vmem:[#allocation3 + $0xd8] sm:$0xff]
  %v690 = vld [vmem:[#allocation3 + $0xe0] sm:$0xff]
  %v691 = vld [vmem:[#allocation3 + $0xe8] sm:$0xff]
  %v692 = vld [vmem:[#allocation3 + $0xf0] sm:$0xff]
  %v693 = vld [vmem:[#allocation3 + $0xf8] sm:$0xff]
  %v694 = vld [vmem:[%s1] sm:$0xff]
  %v695 = vld [vmem:[%s1 + $0x8] sm:$0xff]
  %v696 = vld [vmem:[%s1 + $0x10] sm:$0xff]
  %v697 = vld [vmem:[%s1 + $0x18] sm:$0xff]
  %v698 = vld [vmem:[%s1 + $0x20] sm:$0xff]
  %v699 = vld [vmem:[%s1 + $0x28] sm:$0xff]
  %v700 = vld [vmem:[%s1 + $0x30] sm:$0xff]
  %v701 = vld [vmem:[%s1 + $0x38] sm:$0xff]
  %v702 = vld [vmem:[%s1 + $0x40] sm:$0xff]
  %v703 = vld [vmem:[%s1 + $0x48] sm:$0xff]
  %v704 = vld [vmem:[%s1 + $0x50] sm:$0xff]
  %v705 = vld [vmem:[%s1 + $0x58] sm:$0xff]
  %v706 = vld [vmem:[%s1 + $0x60] sm:$0xff]
  %v707 = vld [vmem:[%s1 + $0x68] sm:$0xff]
  %v708 = vld [vmem:[%s1 + $0x70] sm:$0xff]
  %v709 = vld [vmem:[%s1 + $0x78] sm:$0xff]
  %v710 = vld [vmem:[%s1 + $0x80] sm:$0xff]
  %v711 = vld [vmem:[%s1 + $0x88] sm:$0xff]
  %v712 = vld [vmem:[%s1 + $0x90] sm:$0xff]
  %v713 = vld [vmem:[%s1 + $0x98] sm:$0xff]
  %v714 = vld [vmem:[%s1 + $0xa0] sm:$0xff]
  %v715 = vld [vmem:[%s1 + $0xa8] sm:$0xff]
  %v716 = vld [vmem:[%s1 + $0xb0] sm:$0xff]
  %v717 = vld [vmem:[%s1 + $0xb8] sm:$0xff]
  %v718 = vld [vmem:[%s1 + $0xc0] sm:$0xff]
  %v719 = vld [vmem:[%s1 + $0xc8] sm:$0xff]
  %v720 = vld [vmem:[%s1 + $0xd0] sm:$0xff]
  %v721 = vld [vmem:[%s1 + $0xd8] sm:$0xff]
  %v722 = vld [vmem:[%s1 + $0xe0] sm:$0xff]
  %v723 = vld [vmem:[%s1 + $0xe8] sm:$0xff]
  %v724 = vld [vmem:[%s1 + $0xf0] sm:$0xff]
  %v725 = vld [vmem:[%s1 + $0xf8] sm:$0xff]
  %v758 = vunpack.c.l.b16 %v694
  %v759 = vunpack.c.h.b16 %v694
  %v760 = vunpack.c.l.b16 %v695
  %v761 = vunpack.c.h.b16 %v695
  %v762 = vunpack.c.l.b16 %v696
  %v763 = vunpack.c.h.b16 %v696
  %v764 = vunpack.c.l.b16 %v697
  %v765 = vunpack.c.h.b16 %v697
  %v766 = vunpack.c.l.b16 %v698
  %v767 = vunpack.c.h.b16 %v698
  %v768 = vunpack.c.l.b16 %v699
  %v769 = vunpack.c.h.b16 %v699
  %v770 = vunpack.c.l.b16 %v700
  %v771 = vunpack.c.h.b16 %v700
  %v772 = vunpack.c.l.b16 %v701
  %v773 = vunpack.c.h.b16 %v701
  %v774 = vunpack.c.l.b16 %v702
  %v775 = vunpack.c.h.b16 %v702
  %v776 = vunpack.c.l.b16 %v703
  %v777 = vunpack.c.h.b16 %v703
  %v778 = vunpack.c.l.b16 %v704
  %v779 = vunpack.c.h.b16 %v704
  %v780 = vunpack.c.l.b16 %v705
  %v781 = vunpack.c.h.b16 %v705
  %v782 = vunpack.c.l.b16 %v706
  %v783 = vunpack.c.h.b16 %v706
  %v784 = vunpack.c.l.b16 %v707
  %v785 = vunpack.c.h.b16 %v707
  %v786 = vunpack.c.l.b16 %v708
  %v787 = vunpack.c.h.b16 %v708
  %v788 = vunpack.c.l.b16 %v709
  %v789 = vunpack.c.h.b16 %v709
  %v790 = vunpack.c.l.b16 %v710
  %v791 = vunpack.c.h.b16 %v710
  %v792 = vunpack.c.l.b16 %v711
  %v793 = vunpack.c.h.b16 %v711
  %v794 = vunpack.c.l.b16 %v712
  %v795 = vunpack.c.h.b16 %v712
  %v796 = vunpack.c.l.b16 %v713
  %v797 = vunpack.c.h.b16 %v713
  %v798 = vunpack.c.l.b16 %v714
  %v799 = vunpack.c.h.b16 %v714
  %v800 = vunpack.c.l.b16 %v715
  %v801 = vunpack.c.h.b16 %v715
  %v802 = vunpack.c.l.b16 %v716
  %v803 = vunpack.c.h.b16 %v716
  %v804 = vunpack.c.l.b16 %v717
  %v805 = vunpack.c.h.b16 %v717
  %v806 = vunpack.c.l.b16 %v718
  %v807 = vunpack.c.h.b16 %v718
  %v808 = vunpack.c.l.b16 %v719
  %v809 = vunpack.c.h.b16 %v719
  %v810 = vunpack.c.l.b16 %v720
  %v811 = vunpack.c.h.b16 %v720
  %v812 = vunpack.c.l.b16 %v721
  %v813 = vunpack.c.h.b16 %v721
  %v814 = vunpack.c.l.b16 %v722
  %v815 = vunpack.c.h.b16 %v722
  %v816 = vunpack.c.l.b16 %v723
  %v817 = vunpack.c.h.b16 %v723
  %v818 = vunpack.c.l.b16 %v724
  %v819 = vunpack.c.h.b16 %v724
  %v820 = vunpack.c.l.b16 %v725
  %v821 = vunpack.c.h.b16 %v725
  %v822 = vpack.c.b16 %v760, %v758
  %v823 = vpack.c.b16 %v761, %v759
  %v824 = vpack.c.b16 %v764, %v762
  %v825 = vpack.c.b16 %v765, %v763
  %v826 = vpack.c.b16 %v768, %v766
  %v827 = vpack.c.b16 %v769, %v767
  %v828 = vpack.c.b16 %v772, %v770
  %v829 = vpack.c.b16 %v773, %v771
  %v830 = vpack.c.b16 %v776, %v774
  %v831 = vpack.c.b16 %v777, %v775
  %v832 = vpack.c.b16 %v780, %v778
  %v833 = vpack.c.b16 %v781, %v779
  %v834 = vpack.c.b16 %v784, %v782
  %v835 = vpack.c.b16 %v785, %v783
  %v836 = vpack.c.b16 %v788, %v786
  %v837 = vpack.c.b16 %v789, %v787
  %v838 = vpack.c.b16 %v792, %v790
  %v839 = vpack.c.b16 %v793, %v791
  %v840 = vpack.c.b16 %v796, %v794
  %v841 = vpack.c.b16 %v797, %v795
  %v842 = vpack.c.b16 %v800, %v798
  %v843 = vpack.c.b16 %v801, %v799
  %v844 = vpack.c.b16 %v804, %v802
  %v845 = vpack.c.b16 %v805, %v803
  %v846 = vpack.c.b16 %v808, %v806
  %v847 = vpack.c.b16 %v809, %v807
  %v848 = vpack.c.b16 %v812, %v810
  %v849 = vpack.c.b16 %v813, %v811
  %v850 = vpack.c.b16 %v816, %v814
  %v851 = vpack.c.b16 %v817, %v815
  %v852 = vpack.c.b16 %v820, %v818
  %v853 = vpack.c.b16 %v821, %v819
  %v886 = vunpack.c.h.b16 %v85
  %v887 = vunpack.c.h.b16 %v86
  %v888 = vunpack.c.h.b16 %v87
  %v889 = vunpack.c.h.b16 %v88
  %v890 = vunpack.c.h.b16 %v89
  %v891 = vunpack.c.h.b16 %v90
  %v892 = vunpack.c.h.b16 %v91
  %v893 = vunpack.c.h.b16 %v92
  %v894 = vunpack.c.h.b16 %v93
  %v895 = vunpack.c.h.b16 %v94
  %v896 = vunpack.c.h.b16 %v95
  %v897 = vunpack.c.h.b16 %v96
  %v898 = vunpack.c.h.b16 %v97
  %v899 = vunpack.c.h.b16 %v98
  %v900 = vunpack.c.h.b16 %v99
  %v901 = vunpack.c.h.b16 %v100
  %v902 = vunpack.c.h.b16 %v101
  %v903 = vunpack.c.h.b16 %v102
  %v904 = vunpack.c.h.b16 %v103
  %v905 = vunpack.c.h.b16 %v104
  %v906 = vunpack.c.h.b16 %v105
  %v907 = vunpack.c.h.b16 %v106
  %v908 = vunpack.c.h.b16 %v107
  %v909 = vunpack.c.h.b16 %v108
  %v910 = vunpack.c.h.b16 %v109
  %v911 = vunpack.c.h.b16 %v110
  %v912 = vunpack.c.h.b16 %v111
  %v913 = vunpack.c.h.b16 %v112
  %v914 = vunpack.c.h.b16 %v113
  %v915 = vunpack.c.h.b16 %v114
  %v916 = vunpack.c.h.b16 %v115
  %v917 = vunpack.c.h.b16 %v116
  %v918 = vpack.c.b16 %v887, %v886
  %v919 = vpack.c.b16 %v889, %v888
  %v920 = vpack.c.b16 %v891, %v890
  %v921 = vpack.c.b16 %v893, %v892
  %v922 = vpack.c.b16 %v895, %v894
  %v923 = vpack.c.b16 %v897, %v896
  %v924 = vpack.c.b16 %v899, %v898
  %v925 = vpack.c.b16 %v901, %v900
  %v926 = vpack.c.b16 %v903, %v902
  %v927 = vpack.c.b16 %v905, %v904
  %v928 = vpack.c.b16 %v907, %v906
  %v929 = vpack.c.b16 %v909, %v908
  %v930 = vpack.c.b16 %v911, %v910
  %v931 = vpack.c.b16 %v913, %v912
  %v932 = vpack.c.b16 %v915, %v914
  %v933 = vpack.c.b16 %v917, %v916
  %950 = vmatprep.subr.bf16.mxu0 0
  %951 = vmatpush1.bf16.msra.mxu0 %v918
  %952 = vmatprep.subr.bf16.mxu0 0
  %953 = vmatpush1.bf16.msra.mxu0 %v919
  %954 = vmatprep.subr.bf16.mxu0 0
  %955 = vmatpush1.bf16.msra.mxu0 %v920
  %956 = vmatprep.subr.bf16.mxu0 0
  %957 = vmatpush1.bf16.msra.mxu0 %v921
  %958 = vmatprep.subr.bf16.mxu0 0
  %959 = vmatpush1.bf16.msra.mxu0 %v922
  %960 = vmatprep.subr.bf16.mxu0 0
  %961 = vmatpush1.bf16.msra.mxu0 %v923
  %962 = vmatprep.subr.bf16.mxu0 0
  %963 = vmatpush1.bf16.msra.mxu0 %v924
  %964 = vmatprep.subr.bf16.mxu0 0
  %965 = vmatpush1.bf16.msra.mxu0 %v925
  %966 = vmatprep.subr.bf16.mxu0 0
  %967 = vmatpush1.bf16.msra.mxu0 %v926
  %968 = vmatprep.subr.bf16.mxu0 0
  %969 = vmatpush1.bf16.msra.mxu0 %v927
  %970 = vmatprep.subr.bf16.mxu0 0
  %971 = vmatpush1.bf16.msra.mxu0 %v928
  %972 = vmatprep.subr.bf16.mxu0 0
  %973 = vmatpush1.bf16.msra.mxu0 %v929
  %974 = vmatprep.subr.bf16.mxu0 0
  %975 = vmatpush1.bf16.msra.mxu0 %v930
  %976 = vmatprep.subr.bf16.mxu0 0
  %977 = vmatpush1.bf16.msra.mxu0 %v931
  %978 = vmatprep.subr.bf16.mxu0 0
  %979 = vmatpush1.bf16.msra.mxu0 %v932
  %980 = vmatprep.subr.bf16.mxu0 0
  %981 = vmatpush1.bf16.msra.mxu0 %v933
  %982 = vmatprep.mubr.bf16.mxu0 %v823
  %983 = vmatmul.mubr.bf16.gmra.mrb[0].mxu0 %v822
  %v984 = vpop.f32.mrb[0].mxu0
  %v985 = vadd.f32 0.0, %v984
  %v986 = vpop.f32.mrb[0].mxu0
  %v987 = vpop.f32.mrb[0].mxu0
  %v988 = vadd.f32 0.0, %v987
  %v989 = vpop.f32.mrb[0].mxu0
  %990 = vmatprep.mubr.bf16.mxu0 %v825
  %991 = vmatmul.mubr.bf16.gmra.mrb[0].mxu0 %v824
  %v992 = vpop.f32.mrb[0].mxu0
  %v993 = vadd.f32 0.0, %v992
  %v994 = vpop.f32.mrb[0].mxu0
  %v995 = vpop.f32.mrb[0].mxu0
  %v996 = vadd.f32 0.0, %v995
  %v997 = vpop.f32.mrb[0].mxu0
  %998 = vmatprep.mubr.bf16.mxu0 %v827
  %999 = vmatmul.mubr.bf16.gmra.mrb[0].mxu0 %v826
  %v1000 = vpop.f32.mrb[0].mxu0
  %v1001 = vadd.f32 0.0, %v1000
  %v1002 = vpop.f32.mrb[0].mxu0
  %v1003 = vpop.f32.mrb[0].mxu0
  %v1004 = vadd.f32 0.0, %v1003
  %v1005 = vpop.f32.mrb[0].mxu0
  %1006 = vmatprep.mubr.bf16.mxu0 %v829
  %1007 = vmatmul.mubr.bf16.gmra.mrb[0].mxu0 %v828
  %v1008 = vpop.f32.mrb[0].mxu0
  %v1009 = vadd.f32 0.0, %v1008
  %v1010 = vpop.f32.mrb[0].mxu0
  %v1011 = vpop.f32.mrb[0].mxu0
  %v1012 = vadd.f32 0.0, %v1011
  %v1013 = vpop.f32.mrb[0].mxu0
  %1014 = vmatprep.mubr.bf16.mxu0 %v831
  %1015 = vmatmul.mubr.bf16.gmra.mrb[0].mxu0 %v830
  %v1016 = vpop.f32.mrb[0].mxu0
  %v1017 = vadd.f32 0.0, %v1016
  %v1018 = vpop.f32.mrb[0].mxu0
  %v1019 = vpop.f32.mrb[0].mxu0
  %v1020 = vadd.f32 0.0, %v1019
  %v1021 = vpop.f32.mrb[0].mxu0
  %1022 = vmatprep.mubr.bf16.mxu0 %v833
  %1023 = vmatmul.mubr.bf16.gmra.mrb[0].mxu0 %v832
  %v1024 = vpop.f32.mrb[0].mxu0
  %v1025 = vadd.f32 0.0, %v1024
  %v1026 = vpop.f32.mrb[0].mxu0
  %v1027 = vpop.f32.mrb[0].mxu0
  %v1028 = vadd.f32 0.0, %v1027
  %v1029 = vpop.f32.mrb[0].mxu0
  %1030 = vmatprep.mubr.bf16.mxu0 %v835
  %1031 = vmatmul.mubr.bf16.gmra.mrb[0].mxu0 %v834
  %v1032 = vpop.f32.mrb[0].mxu0
  %v1033 = vadd.f32 0.0, %v1032
  %v1034 = vpop.f32.mrb[0].mxu0
  %v1035 = vpop.f32.mrb[0].mxu0
  %v1036 = vadd.f32 0.0, %v1035
  %v1037 = vpop.f32.mrb[0].mxu0
  %1038 = vmatprep.mubr.bf16.mxu0 %v837
  %1039 = vmatmul.mubr.bf16.gmra.mrb[0].mxu0 %v836
  %v1040 = vpop.f32.mrb[0].mxu0
  %v1041 = vadd.f32 0.0, %v1040
  %v1042 = vpop.f32.mrb[0].mxu0
  %v1043 = vpop.f32.mrb[0].mxu0
  %v1044 = vadd.f32 0.0, %v1043
  %v1045 = vpop.f32.mrb[0].mxu0
  %1046 = vmatprep.mubr.bf16.mxu0 %v839
  %1047 = vmatmul.mubr.bf16.gmra.mrb[0].mxu0 %v838
  %v1048 = vpop.f32.mrb[0].mxu0
  %v1049 = vadd.f32 0.0, %v1048
  %v1050 = vpop.f32.mrb[0].mxu0
  %v1051 = vpop.f32.mrb[0].mxu0
  %v1052 = vadd.f32 0.0, %v1051
  %v1053 = vpop.f32.mrb[0].mxu0
  %1054 = vmatprep.mubr.bf16.mxu0 %v841
  %1055 = vmatmul.mubr.bf16.gmra.mrb[0].mxu0 %v840
  %v1056 = vpop.f32.mrb[0].mxu0
  %v1057 = vadd.f32 0.0, %v1056
  %v1058 = vpop.f32.mrb[0].mxu0
  %v1059 = vpop.f32.mrb[0].mxu0
  %v1060 = vadd.f32 0.0, %v1059
  %v1061 = vpop.f32.mrb[0].mxu0
  %1062 = vmatprep.mubr.bf16.mxu0 %v843
  %1063 = vmatmul.mubr.bf16.gmra.mrb[0].mxu0 %v842
  %v1064 = vpop.f32.mrb[0].mxu0
  %v1065 = vadd.f32 0.0, %v1064
  %v1066 = vpop.f32.mrb[0].mxu0
  %v1067 = vpop.f32.mrb[0].mxu0
  %v1068 = vadd.f32 0.0, %v1067
  %v1069 = vpop.f32.mrb[0].mxu0
  %1070 = vmatprep.mubr.bf16.mxu0 %v845
  %1071 = vmatmul.mubr.bf16.gmra.mrb[0].mxu0 %v844
  %v1072 = vpop.f32.mrb[0].mxu0
  %v1073 = vadd.f32 0.0, %v1072
  %v1074 = vpop.f32.mrb[0].mxu0
  %v1075 = vpop.f32.mrb[0].mxu0
  %v1076 = vadd.f32 0.0, %v1075
  %v1077 = vpop.f32.mrb[0].mxu0
  %1078 = vmatprep.mubr.bf16.mxu0 %v847
  %1079 = vmatmul.mubr.bf16.gmra.mrb[0].mxu0 %v846
  %v1080 = vpop.f32.mrb[0].mxu0
  %v1081 = vadd.f32 0.0, %v1080
  %v1082 = vpop.f32.mrb[0].mxu0
  %v1083 = vpop.f32.mrb[0].mxu0
  %v1084 = vadd.f32 0.0, %v1083
  %v1085 = vpop.f32.mrb[0].mxu0
  %1086 = vmatprep.mubr.bf16.mxu0 %v849
  %1087 = vmatmul.mubr.bf16.gmra.mrb[0].mxu0 %v848
  %v1088 = vpop.f32.mrb[0].mxu0
  %v1089 = vadd.f32 0.0, %v1088
  %v1090 = vpop.f32.mrb[0].mxu0
  %v1091 = vpop.f32.mrb[0].mxu0
  %v1092 = vadd.f32 0.0, %v1091
  %v1093 = vpop.f32.mrb[0].mxu0
  %1094 = vmatprep.mubr.bf16.mxu0 %v851
  %1095 = vmatmul.mubr.bf16.gmra.mrb[0].mxu0 %v850
  %v1096 = vpop.f32.mrb[0].mxu0
  %v1097 = vadd.f32 0.0, %v1096
  %v1098 = vpop.f32.mrb[0].mxu0
  %v1099 = vpop.f32.mrb[0].mxu0
  %v1100 = vadd.f32 0.0, %v1099
  %v1101 = vpop.f32.mrb[0].mxu0
  %1102 = vmatprep.mubr.bf16.mxu0 %v853
  %1103 = vmatmul.mubr.bf16.gmra.mrb[0].mxu0 %v852
  %v1104 = vpop.f32.mrb[0].mxu0
  %v1105 = vadd.f32 0.0, %v1104
  %v1106 = vpop.f32.mrb[0].mxu0
  %v1107 = vpop.f32.mrb[0].mxu0
  %v1108 = vadd.f32 0.0, %v1107
  %v1109 = vpop.f32.mrb[0].mxu0
  %1110 = vdwg.mxu0
  %v1111 = vadd.f32 %v662, %v985
  %v1112 = vadd.f32 %v663, %v988
  %v1113 = vadd.f32 %v664, %v993
  %v1114 = vadd.f32 %v665, %v996
  %v1115 = vadd.f32 %v666, %v1001
  %v1116 = vadd.f32 %v667, %v1004
  %v1117 = vadd.f32 %v668, %v1009
  %v1118 = vadd.f32 %v669, %v1012
  %v1119 = vadd.f32 %v670, %v1017
  %v1120 = vadd.f32 %v671, %v1020
  %v1121 = vadd.f32 %v672, %v1025
  %v1122 = vadd.f32 %v673, %v1028
  %v1123 = vadd.f32 %v674, %v1033
  %v1124 = vadd.f32 %v675, %v1036
  %v1125 = vadd.f32 %v676, %v1041
  %v1126 = vadd.f32 %v677, %v1044
  %v1127 = vadd.f32 %v678, %v1049
  %v1128 = vadd.f32 %v679, %v1052
  %v1129 = vadd.f32 %v680, %v1057
  %v1130 = vadd.f32 %v681, %v1060
  %v1131 = vadd.f32 %v682, %v1065
  %v1132 = vadd.f32 %v683, %v1068
  %v1133 = vadd.f32 %v684, %v1073
  %v1134 = vadd.f32 %v685, %v1076
  %v1135 = vadd.f32 %v686, %v1081
  %v1136 = vadd.f32 %v687, %v1084
  %v1137 = vadd.f32 %v688, %v1089
  %v1138 = vadd.f32 %v689, %v1092
  %v1139 = vadd.f32 %v690, %v1097
  %v1140 = vadd.f32 %v691, %v1100
  %v1141 = vadd.f32 %v692, %v1105
  %v1142 = vadd.f32 %v693, %v1108
  %1143 = vst [vmem:[#allocation3] sm:$0xff] %v1111
  %1144 = vst [vmem:[#allocation3 + $0x8] sm:$0xff] %v1112
  %1145 = vst [vmem:[#allocation3 + $0x10] sm:$0xff] %v1113
  %1146 = vst [vmem:[#allocation3 + $0x18] sm:$0xff] %v1114
  %1147 = vst [vmem:[#allocation3 + $0x20] sm:$0xff] %v1115
  %1148 = vst [vmem:[#allocation3 + $0x28] sm:$0xff] %v1116
  %1149 = vst [vmem:[#allocation3 + $0x30] sm:$0xff] %v1117
  %1150 = vst [vmem:[#allocation3 + $0x38] sm:$0xff] %v1118
  %1151 = vst [vmem:[#allocation3 + $0x40] sm:$0xff] %v1119
  %1152 = vst [vmem:[#allocation3 + $0x48] sm:$0xff] %v1120
  %1153 = vst [vmem:[#allocation3 + $0x50] sm:$0xff] %v1121
  %1154 = vst [vmem:[#allocation3 + $0x58] sm:$0xff] %v1122
  %1155 = vst [vmem:[#allocation3 + $0x60] sm:$0xff] %v1123
  %1156 = vst [vmem:[#allocation3 + $0x68] sm:$0xff] %v1124
  %1157 = vst [vmem:[#allocation3 + $0x70] sm:$0xff] %v1125
  %1158 = vst [vmem:[#allocation3 + $0x78] sm:$0xff] %v1126
  %1159 = vst [vmem:[#allocation3 + $0x80] sm:$0xff] %v1127
  %1160 = vst [vmem:[#allocation3 + $0x88] sm:$0xff] %v1128
  %1161 = vst [vmem:[#allocation3 + $0x90] sm:$0xff] %v1129
  %1162 = vst [vmem:[#allocation3 + $0x98] sm:$0xff] %v1130
  %1163 = vst [vmem:[#allocation3 + $0xa0] sm:$0xff] %v1131
  %1164 = vst [vmem:[#allocation3 + $0xa8] sm:$0xff] %v1132
  %1165 = vst [vmem:[#allocation3 + $0xb0] sm:$0xff] %v1133
  %1166 = vst [vmem:[#allocation3 + $0xb8] sm:$0xff] %v1134
  %1167 = vst [vmem:[#allocation3 + $0xc0] sm:$0xff] %v1135
  %1168 = vst [vmem:[#allocation3 + $0xc8] sm:$0xff] %v1136
  %1169 = vst [vmem:[#allocation3 + $0xd0] sm:$0xff] %v1137
  %1170 = vst [vmem:[#allocation3 + $0xd8] sm:$0xff] %v1138
  %1171 = vst [vmem:[#allocation3 + $0xe0] sm:$0xff] %v1139
  %1172 = vst [vmem:[#allocation3 + $0xe8] sm:$0xff] %v1140
  %1173 = vst [vmem:[#allocation3 + $0xf0] sm:$0xff] %v1141
  %1174 = vst [vmem:[#allocation3 + $0xf8] sm:$0xff] %v1142
  // Predicated region
  $region18: #{_lambda_.6} parent=0 // pred_check
    %p1175 = pneg %p17
  $region19: #{_lambda_.6} parent=0 // pred_check_branch
    %1177 = sbr.rel (%p1175) target = $region21
  $region20: #{_lambda_.6} parent=0 // pred_region
    %v1178 = vld [vmem:[#allocation2] sm:$0xff]
    %v1179 = vld [vmem:[#allocation2 + $0x8] sm:$0xff]
    %v1180 = vld [vmem:[#allocation2 + $0x10] sm:$0xff]
    %v1181 = vld [vmem:[#allocation2 + $0x18] sm:$0xff]
    %v1182 = vld [vmem:[#allocation2 + $0x20] sm:$0xff]
    %v1183 = vld [vmem:[#allocation2 + $0x28] sm:$0xff]
    %v1184 = vld [vmem:[#allocation2 + $0x30] sm:$0xff]
    %v1185 = vld [vmem:[#allocation2 + $0x38] sm:$0xff]
    %v1186 = vld [vmem:[#allocation2 + $0x40] sm:$0xff]
    %v1187 = vld [vmem:[#allocation2 + $0x48] sm:$0xff]
    %v1188 = vld [vmem:[#allocation2 + $0x50] sm:$0xff]
    %v1189 = vld [vmem:[#allocation2 + $0x58] sm:$0xff]
    %v1190 = vld [vmem:[#allocation2 + $0x60] sm:$0xff]
    %v1191 = vld [vmem:[#allocation2 + $0x68] sm:$0xff]
    %v1192 = vld [vmem:[#allocation2 + $0x70] sm:$0xff]
    %v1193 = vld [vmem:[#allocation2 + $0x78] sm:$0xff]
    %v1194 = vld [vmem:[#allocation2 + $0x80] sm:$0xff]
    %v1195 = vld [vmem:[#allocation2 + $0x88] sm:$0xff]
    %v1196 = vld [vmem:[#allocation2 + $0x90] sm:$0xff]
    %v1197 = vld [vmem:[#allocation2 + $0x98] sm:$0xff]
    %v1198 = vld [vmem:[#allocation2 + $0xa0] sm:$0xff]
    %v1199 = vld [vmem:[#allocation2 + $0xa8] sm:$0xff]
    %v1200 = vld [vmem:[#allocation2 + $0xb0] sm:$0xff]
    %v1201 = vld [vmem:[#allocation2 + $0xb8] sm:$0xff]
    %v1202 = vld [vmem:[#allocation2 + $0xc0] sm:$0xff]
    %v1203 = vld [vmem:[#allocation2 + $0xc8] sm:$0xff]
    %v1204 = vld [vmem:[#allocation2 + $0xd0] sm:$0xff]
    %v1205 = vld [vmem:[#allocation2 + $0xd8] sm:$0xff]
    %v1206 = vld [vmem:[#allocation2 + $0xe0] sm:$0xff]
    %v1207 = vld [vmem:[#allocation2 + $0xe8] sm:$0xff]
    %v1208 = vld [vmem:[#allocation2 + $0xf0] sm:$0xff]
    %v1209 = vld [vmem:[#allocation2 + $0xf8] sm:$0xff]
    %v1210 = vpack.c.bf16 %v1179, %v1178
    %v1211 = vpack.c.bf16 %v1181, %v1180
    %v1212 = vpack.c.bf16 %v1183, %v1182
    %v1213 = vpack.c.bf16 %v1185, %v1184
    %v1214 = vpack.c.bf16 %v1187, %v1186
    %v1215 = vpack.c.bf16 %v1189, %v1188
    %v1216 = vpack.c.bf16 %v1191, %v1190
    %v1217 = vpack.c.bf16 %v1193, %v1192
    %v1218 = vpack.c.bf16 %v1195, %v1194
    %v1219 = vpack.c.bf16 %v1197, %v1196
    %v1220 = vpack.c.bf16 %v1199, %v1198
    %v1221 = vpack.c.bf16 %v1201, %v1200
    %v1222 = vpack.c.bf16 %v1203, %v1202
    %v1223 = vpack.c.bf16 %v1205, %v1204
    %v1224 = vpack.c.bf16 %v1207, %v1206
    %v1225 = vpack.c.bf16 %v1209, %v1208
    %v1242 = vunpack.c.l.b16 %v1210
    %v1243 = vunpack.c.h.b16 %v1210
    %v1244 = vunpack.c.l.b16 %v1211
    %v1245 = vunpack.c.h.b16 %v1211
    %v1246 = vunpack.c.l.b16 %v1212
    %v1247 = vunpack.c.h.b16 %v1212
    %v1248 = vunpack.c.l.b16 %v1213
    %v1249 = vunpack.c.h.b16 %v1213
    %v1250 = vunpack.c.l.b16 %v1214
    %v1251 = vunpack.c.h.b16 %v1214
    %v1252 = vunpack.c.l.b16 %v1215
    %v1253 = vunpack.c.h.b16 %v1215
    %v1254 = vunpack.c.l.b16 %v1216
    %v1255 = vunpack.c.h.b16 %v1216
    %v1256 = vunpack.c.l.b16 %v1217
    %v1257 = vunpack.c.h.b16 %v1217
    %v1258 = vunpack.c.l.b16 %v1218
    %v1259 = vunpack.c.h.b16 %v1218
    %v1260 = vunpack.c.l.b16 %v1219
    %v1261 = vunpack.c.h.b16 %v1219
    %v1262 = vunpack.c.l.b16 %v1220
    %v1263 = vunpack.c.h.b16 %v1220
    %v1264 = vunpack.c.l.b16 %v1221
    %v1265 = vunpack.c.h.b16 %v1221
    %v1266 = vunpack.c.l.b16 %v1222
    %v1267 = vunpack.c.h.b16 %v1222
    %v1268 = vunpack.c.l.b16 %v1223
    %v1269 = vunpack.c.h.b16 %v1223
    %v1270 = vunpack.c.l.b16 %v1224
    %v1271 = vunpack.c.h.b16 %v1224
    %v1272 = vunpack.c.l.b16 %v1225
    %v1273 = vunpack.c.h.b16 %v1225
    %v1274 = vpack.c.b16 %v1242, %v1242
    %v1275 = vpack.c.b16 %v1243, %v1243
    %v1276 = vpack.c.b16 %v1244, %v1244
    %v1277 = vpack.c.b16 %v1245, %v1245
    %v1278 = vpack.c.b16 %v1246, %v1246
    %v1279 = vpack.c.b16 %v1247, %v1247
    %v1280 = vpack.c.b16 %v1248, %v1248
    %v1281 = vpack.c.b16 %v1249, %v1249
    %v1282 = vpack.c.b16 %v1250, %v1250
    %v1283 = vpack.c.b16 %v1251, %v1251
    %v1284 = vpack.c.b16 %v1252, %v1252
    %v1285 = vpack.c.b16 %v1253, %v1253
    %v1286 = vpack.c.b16 %v1254, %v1254
    %v1287 = vpack.c.b16 %v1255, %v1255
    %v1288 = vpack.c.b16 %v1256, %v1256
    %v1289 = vpack.c.b16 %v1257, %v1257
    %v1290 = vpack.c.b16 %v1258, %v1258
    %v1291 = vpack.c.b16 %v1259, %v1259
    %v1292 = vpack.c.b16 %v1260, %v1260
    %v1293 = vpack.c.b16 %v1261, %v1261
    %v1294 = vpack.c.b16 %v1262, %v1262
    %v1295 = vpack.c.b16 %v1263, %v1263
    %v1296 = vpack.c.b16 %v1264, %v1264
    %v1297 = vpack.c.b16 %v1265, %v1265
    %v1298 = vpack.c.b16 %v1266, %v1266
    %v1299 = vpack.c.b16 %v1267, %v1267
    %v1300 = vpack.c.b16 %v1268, %v1268
    %v1301 = vpack.c.b16 %v1269, %v1269
    %v1302 = vpack.c.b16 %v1270, %v1270
    %v1303 = vpack.c.b16 %v1271, %v1271
    %v1304 = vpack.c.b16 %v1272, %v1272
    %v1305 = vpack.c.b16 %v1273, %v1273
    %1338 = vst [vmem:[%s3] sm:$0xf] %v1274
    %1339 = vst [vmem:[%s3 + $0x4] sm:$0xf] %v1275
    %1340 = vst [vmem:[%s3 + $0x8] sm:$0xf] %v1276
    %1341 = vst [vmem:[%s3 + $0xc] sm:$0xf] %v1277
    %1342 = vst [vmem:[%s3 + $0x10] sm:$0xf] %v1278
    %1343 = vst [vmem:[%s3 + $0x14] sm:$0xf] %v1279
    %1344 = vst [vmem:[%s3 + $0x18] sm:$0xf] %v1280
    %1345 = vst [vmem:[%s3 + $0x1c] sm:$0xf] %v1281
    %1346 = vst [vmem:[%s3 + $0x20] sm:$0xf] %v1282
    %1347 = vst [vmem:[%s3 + $0x24] sm:$0xf] %v1283
    %1348 = vst [vmem:[%s3 + $0x28] sm:$0xf] %v1284
    %1349 = vst [vmem:[%s3 + $0x2c] sm:$0xf] %v1285
    %1350 = vst [vmem:[%s3 + $0x30] sm:$0xf] %v1286
    %1351 = vst [vmem:[%s3 + $0x34] sm:$0xf] %v1287
    %1352 = vst [vmem:[%s3 + $0x38] sm:$0xf] %v1288
    %1353 = vst [vmem:[%s3 + $0x3c] sm:$0xf] %v1289
    %1354 = vst [vmem:[%s3 + $0x40] sm:$0xf] %v1290
    %1355 = vst [vmem:[%s3 + $0x44] sm:$0xf] %v1291
    %1356 = vst [vmem:[%s3 + $0x48] sm:$0xf] %v1292
    %1357 = vst [vmem:[%s3 + $0x4c] sm:$0xf] %v1293
    %1358 = vst [vmem:[%s3 + $0x50] sm:$0xf] %v1294
    %1359 = vst [vmem:[%s3 + $0x54] sm:$0xf] %v1295
    %1360 = vst [vmem:[%s3 + $0x58] sm:$0xf] %v1296
    %1361 = vst [vmem:[%s3 + $0x5c] sm:$0xf] %v1297
    %1362 = vst [vmem:[%s3 + $0x60] sm:$0xf] %v1298
    %1363 = vst [vmem:[%s3 + $0x64] sm:$0xf] %v1299
    %1364 = vst [vmem:[%s3 + $0x68] sm:$0xf] %v1300
    %1365 = vst [vmem:[%s3 + $0x6c] sm:$0xf] %v1301
    %1366 = vst [vmem:[%s3 + $0x70] sm:$0xf] %v1302
    %1367 = vst [vmem:[%s3 + $0x74] sm:$0xf] %v1303
    %1368 = vst [vmem:[%s3 + $0x78] sm:$0xf] %v1304
    %1369 = vst [vmem:[%s3 + $0x7c] sm:$0xf] %v1305
    %v1370 = vld [vmem:[#allocation3] sm:$0xff]
    %v1371 = vld [vmem:[#allocation3 + $0x8] sm:$0xff]
    %v1372 = vld [vmem:[#allocation3 + $0x10] sm:$0xff]
    %v1373 = vld [vmem:[#allocation3 + $0x18] sm:$0xff]
    %v1374 = vld [vmem:[#allocation3 + $0x20] sm:$0xff]
    %v1375 = vld [vmem:[#allocation3 + $0x28] sm:$0xff]
    %v1376 = vld [vmem:[#allocation3 + $0x30] sm:$0xff]
    %v1377 = vld [vmem:[#allocation3 + $0x38] sm:$0xff]
    %v1378 = vld [vmem:[#allocation3 + $0x40] sm:$0xff]
    %v1379 = vld [vmem:[#allocation3 + $0x48] sm:$0xff]
    %v1380 = vld [vmem:[#allocation3 + $0x50] sm:$0xff]
    %v1381 = vld [vmem:[#allocation3 + $0x58] sm:$0xff]
    %v1382 = vld [vmem:[#allocation3 + $0x60] sm:$0xff]
    %v1383 = vld [vmem:[#allocation3 + $0x68] sm:$0xff]
    %v1384 = vld [vmem:[#allocation3 + $0x70] sm:$0xff]
    %v1385 = vld [vmem:[#allocation3 + $0x78] sm:$0xff]
    %v1386 = vld [vmem:[#allocation3 + $0x80] sm:$0xff]
    %v1387 = vld [vmem:[#allocation3 + $0x88] sm:$0xff]
    %v1388 = vld [vmem:[#allocation3 + $0x90] sm:$0xff]
    %v1389 = vld [vmem:[#allocation3 + $0x98] sm:$0xff]
    %v1390 = vld [vmem:[#allocation3 + $0xa0] sm:$0xff]
    %v1391 = vld [vmem:[#allocation3 + $0xa8] sm:$0xff]
    %v1392 = vld [vmem:[#allocation3 + $0xb0] sm:$0xff]
    %v1393 = vld [vmem:[#allocation3 + $0xb8] sm:$0xff]
    %v1394 = vld [vmem:[#allocation3 + $0xc0] sm:$0xff]
    %v1395 = vld [vmem:[#allocation3 + $0xc8] sm:$0xff]
    %v1396 = vld [vmem:[#allocation3 + $0xd0] sm:$0xff]
    %v1397 = vld [vmem:[#allocation3 + $0xd8] sm:$0xff]
    %v1398 = vld [vmem:[#allocation3 + $0xe0] sm:$0xff]
    %v1399 = vld [vmem:[#allocation3 + $0xe8] sm:$0xff]
    %v1400 = vld [vmem:[#allocation3 + $0xf0] sm:$0xff]
    %v1401 = vld [vmem:[#allocation3 + $0xf8] sm:$0xff]
    %v1402 = vpack.c.bf16 %v1371, %v1370
    %v1403 = vpack.c.bf16 %v1373, %v1372
    %v1404 = vpack.c.bf16 %v1375, %v1374
    %v1405 = vpack.c.bf16 %v1377, %v1376
    %v1406 = vpack.c.bf16 %v1379, %v1378
    %v1407 = vpack.c.bf16 %v1381, %v1380
    %v1408 = vpack.c.bf16 %v1383, %v1382
    %v1409 = vpack.c.bf16 %v1385, %v1384
    %v1410 = vpack.c.bf16 %v1387, %v1386
    %v1411 = vpack.c.bf16 %v1389, %v1388
    %v1412 = vpack.c.bf16 %v1391, %v1390
    %v1413 = vpack.c.bf16 %v1393, %v1392
    %v1414 = vpack.c.bf16 %v1395, %v1394
    %v1415 = vpack.c.bf16 %v1397, %v1396
    %v1416 = vpack.c.bf16 %v1399, %v1398
    %v1417 = vpack.c.bf16 %v1401, %v1400
    %v1434 = vunpack.c.l.b16 %v1402
    %v1435 = vunpack.c.h.b16 %v1402
    %v1436 = vunpack.c.l.b16 %v1403
    %v1437 = vunpack.c.h.b16 %v1403
    %v1438 = vunpack.c.l.b16 %v1404
    %v1439 = vunpack.c.h.b16 %v1404
    %v1440 = vunpack.c.l.b16 %v1405
    %v1441 = vunpack.c.h.b16 %v1405
    %v1442 = vunpack.c.l.b16 %v1406
    %v1443 = vunpack.c.h.b16 %v1406
    %v1444 = vunpack.c.l.b16 %v1407
    %v1445 = vunpack.c.h.b16 %v1407
    %v1446 = vunpack.c.l.b16 %v1408
    %v1447 = vunpack.c.h.b16 %v1408
    %v1448 = vunpack.c.l.b16 %v1409
    %v1449 = vunpack.c.h.b16 %v1409
    %v1450 = vunpack.c.l.b16 %v1410
    %v1451 = vunpack.c.h.b16 %v1410
    %v1452 = vunpack.c.l.b16 %v1411
    %v1453 = vunpack.c.h.b16 %v1411
    %v1454 = vunpack.c.l.b16 %v1412
    %v1455 = vunpack.c.h.b16 %v1412
    %v1456 = vunpack.c.l.b16 %v1413
    %v1457 = vunpack.c.h.b16 %v1413
    %v1458 = vunpack.c.l.b16 %v1414
    %v1459 = vunpack.c.h.b16 %v1414
    %v1460 = vunpack.c.l.b16 %v1415
    %v1461 = vunpack.c.h.b16 %v1415
    %v1462 = vunpack.c.l.b16 %v1416
    %v1463 = vunpack.c.h.b16 %v1416
    %v1464 = vunpack.c.l.b16 %v1417
    %v1465 = vunpack.c.h.b16 %v1417
    %v1466 = vpack.c.b16 %v1434, %v1434
    %v1467 = vpack.c.b16 %v1435, %v1435
    %v1468 = vpack.c.b16 %v1436, %v1436
    %v1469 = vpack.c.b16 %v1437, %v1437
    %v1470 = vpack.c.b16 %v1438, %v1438
    %v1471 = vpack.c.b16 %v1439, %v1439
    %v1472 = vpack.c.b16 %v1440, %v1440
    %v1473 = vpack.c.b16 %v1441, %v1441
    %v1474 = vpack.c.b16 %v1442, %v1442
    %v1475 = vpack.c.b16 %v1443, %v1443
    %v1476 = vpack.c.b16 %v1444, %v1444
    %v1477 = vpack.c.b16 %v1445, %v1445
    %v1478 = vpack.c.b16 %v1446, %v1446
    %v1479 = vpack.c.b16 %v1447, %v1447
    %v1480 = vpack.c.b16 %v1448, %v1448
    %v1481 = vpack.c.b16 %v1449, %v1449
    %v1482 = vpack.c.b16 %v1450, %v1450
    %v1483 = vpack.c.b16 %v1451, %v1451
    %v1484 = vpack.c.b16 %v1452, %v1452
    %v1485 = vpack.c.b16 %v1453, %v1453
    %v1486 = vpack.c.b16 %v1454, %v1454
    %v1487 = vpack.c.b16 %v1455, %v1455
    %v1488 = vpack.c.b16 %v1456, %v1456
    %v1489 = vpack.c.b16 %v1457, %v1457
    %v1490 = vpack.c.b16 %v1458, %v1458
    %v1491 = vpack.c.b16 %v1459, %v1459
    %v1492 = vpack.c.b16 %v1460, %v1460
    %v1493 = vpack.c.b16 %v1461, %v1461
    %v1494 = vpack.c.b16 %v1462, %v1462
    %v1495 = vpack.c.b16 %v1463, %v1463
    %v1496 = vpack.c.b16 %v1464, %v1464
    %v1497 = vpack.c.b16 %v1465, %v1465
    %1530 = vst [vmem:[%s4] sm:$0xf] %v1466
    %1531 = vst [vmem:[%s4 + $0x4] sm:$0xf] %v1467
    %1532 = vst [vmem:[%s4 + $0x8] sm:$0xf] %v1468
    %1533 = vst [vmem:[%s4 + $0xc] sm:$0xf] %v1469
    %1534 = vst [vmem:[%s4 + $0x10] sm:$0xf] %v1470
    %1535 = vst [vmem:[%s4 + $0x14] sm:$0xf] %v1471
    %1536 = vst [vmem:[%s4 + $0x18] sm:$0xf] %v1472
    %1537 = vst [vmem:[%s4 + $0x1c] sm:$0xf] %v1473
    %1538 = vst [vmem:[%s4 + $0x20] sm:$0xf] %v1474
    %1539 = vst [vmem:[%s4 + $0x24] sm:$0xf] %v1475
    %1540 = vst [vmem:[%s4 + $0x28] sm:$0xf] %v1476
    %1541 = vst [vmem:[%s4 + $0x2c] sm:$0xf] %v1477
    %1542 = vst [vmem:[%s4 + $0x30] sm:$0xf] %v1478
    %1543 = vst [vmem:[%s4 + $0x34] sm:$0xf] %v1479
    %1544 = vst [vmem:[%s4 + $0x38] sm:$0xf] %v1480
    %1545 = vst [vmem:[%s4 + $0x3c] sm:$0xf] %v1481
    %1546 = vst [vmem:[%s4 + $0x40] sm:$0xf] %v1482
    %1547 = vst [vmem:[%s4 + $0x44] sm:$0xf] %v1483
    %1548 = vst [vmem:[%s4 + $0x48] sm:$0xf] %v1484
    %1549 = vst [vmem:[%s4 + $0x4c] sm:$0xf] %v1485
    %1550 = vst [vmem:[%s4 + $0x50] sm:$0xf] %v1486
    %1551 = vst [vmem:[%s4 + $0x54] sm:$0xf] %v1487
    %1552 = vst [vmem:[%s4 + $0x58] sm:$0xf] %v1488
    %1553 = vst [vmem:[%s4 + $0x5c] sm:$0xf] %v1489
    %1554 = vst [vmem:[%s4 + $0x60] sm:$0xf] %v1490
    %1555 = vst [vmem:[%s4 + $0x64] sm:$0xf] %v1491
    %1556 = vst [vmem:[%s4 + $0x68] sm:$0xf] %v1492
    %1557 = vst [vmem:[%s4 + $0x6c] sm:$0xf] %v1493
    %1558 = vst [vmem:[%s4 + $0x70] sm:$0xf] %v1494
    %1559 = vst [vmem:[%s4 + $0x74] sm:$0xf] %v1495
    %1560 = vst [vmem:[%s4 + $0x78] sm:$0xf] %v1496
    %1561 = vst [vmem:[%s4 + $0x7c] sm:$0xf] %v1497
  $region21: #{_lambda_.6} parent=0 // pred_fallthru
    _
  // Predicated region
  $region22: #{_lambda_.6} parent=0 // pred_check
    _
  $region23: #{_lambda_.6} parent=0 // pred_check_branch
    %1563 = sbr.rel (0) target = $region25
  $region24: #{_lambda_.6} parent=0 // pred_region
    _
  $region25: #{_lambda_.6} parent=0 // pred_fallthru
    _
  // Predicated region
  $region26: #{_lambda_.6} parent=0 // pred_check
    _
  $region27: #{_lambda_.6} parent=0 // pred_check_branch
    %1565 = sbr.rel (0) target = $region29
  $region28: #{_lambda_.6} parent=0 // pred_region
    _
  $region29: #{_lambda_.6} parent=0 // pred_fallthru
    _
  // Predicated region
  $region30: #{_lambda_.6} parent=0 // pred_check
    _
  $region31: #{_lambda_.6} parent=0 // pred_check_branch
    %1567 = sbr.rel (0) target = $region33
  $region32: #{_lambda_.6} parent=0 // pred_region
    _
  $region33: #{_lambda_.6} parent=0 // pred_fallthru
    _
  // Predicated region
  $region34: #{_lambda_.6} parent=0 // pred_check
    _
  $region35: #{_lambda_.6} parent=0 // pred_check_branch
    %1569 = sbr.rel (0) target = $region37
  $region36: #{_lambda_.6} parent=0 // pred_region
    _
  $region37: #{_lambda_.6} parent=0 // pred_fallthru
    _

// kernel: _lambda_.5
$region0: #{_lambda_.5}
  #allocation0 [shape = 'u32[]', space=smem, size = 0x4, offset = 0x4, fixed_abs, tag = 'smem constant byte address 0x4 - core index']
  #allocation1 [shape = 'u32[144,128]{1,0:T(1,128)}', space=vmem, size = 0x12000, scoped, tag = 'internal scratch']
  #allocation2 [shape = 'f32[256,128]{1,0:T(8,128)}', space=vmem, size = 0x20000, scoped, tag = 'scratch operand']
  #allocation3 [shape = 'f32[256,128]{1,0:T(8,128)}', space=vmem, size = 0x20000, scoped, tag = 'scratch operand']
  %s0 = inlined_call_operand.vmem [shape: bf16[256,256], index: 0, kind: input, shape index: {}]
  %s1 = inlined_call_operand.vmem [shape: bf16[256,256], index: 1, kind: input, shape index: {}]
  %s2 = inlined_call_operand.vmem [shape: bf16[256,256], index: 2, kind: input, shape index: {}]
  %s3 = inlined_call_operand.vmem [shape: bf16[128,128], index: 3, kind: input, shape index: {}]
  %s4 = inlined_call_operand.vmem [shape: f32[1,128], index: 4, kind: input, shape index: {}]
  %s5 = inlined_call_operand.vmem [shape: bf16[128,128], index: 5, kind: input, shape index: {}]
  %s6 = inlined_call_operand.vmem [shape: f32[1,128], index: 6, kind: input, shape index: {}]
  %s7 = inlined_call_operand.vmem [shape: bf16[256,256], index: 7, kind: output, shape index: {}]
  %s8 = sld [smem:[#allocation0]]
  $region46: #{_lambda_.5} parent=0
    _
  %s10 = ssub.s32 1, %s8
  %s11 = scalar_select 0, %s10, %s8
  // Predicated region
  $region2: #{_lambda_.5} parent=0 // pred_check
    _
  $region3: #{_lambda_.5} parent=0 // pred_check_branch
    %13 = sbr.rel (0) target = $region5
  $region4: #{_lambda_.5} parent=0 // pred_region
    _
  $region5: #{_lambda_.5} parent=0 // pred_fallthru
    _
  // Predicated region
  $region6: #{_lambda_.5} parent=0 // pred_check
    _
  $region7: #{_lambda_.5} parent=0 // pred_check_branch
    %15 = sbr.rel (0) target = $region9
  $region8: #{_lambda_.5} parent=0 // pred_region
    _
  $region9: #{_lambda_.5} parent=0 // pred_fallthru
    _
  // Predicated region
  $region10: #{_lambda_.5} parent=0 // pred_check
    _
  $region11: #{_lambda_.5} parent=0 // pred_check_branch
    %17 = sbr.rel (0) target = $region13
  $region12: #{_lambda_.5} parent=0 // pred_region
    _
  $region13: #{_lambda_.5} parent=0 // pred_fallthru
    _
  // Predicated region
  $region14: #{_lambda_.5} parent=0 // pred_check
    _
  $region15: #{_lambda_.5} parent=0 // pred_check_branch
    %19 = sbr.rel (0) target = $region17
  $region16: #{_lambda_.5} parent=0 // pred_region
    _
  $region17: #{_lambda_.5} parent=0 // pred_fallthru
    _
  // Predicated region
  $region18: #{_lambda_.5} parent=0 // pred_check
    _
  $region19: #{_lambda_.5} parent=0 // pred_check_branch
    %21 = sbr.rel (0) target = $region21
  $region20: #{_lambda_.5} parent=0 // pred_region
    _
  $region21: #{_lambda_.5} parent=0 // pred_fallthru
    _
  // Predicated region
  $region22: #{_lambda_.5} parent=0 // pred_check
    _
  $region23: #{_lambda_.5} parent=0 // pred_check_branch
    %23 = sbr.rel (0) target = $region25
  $region24: #{_lambda_.5} parent=0 // pred_region
    _
  $region25: #{_lambda_.5} parent=0 // pred_fallthru
    _
  // Predicated region
  $region26: #{_lambda_.5} parent=0 // pred_check
    _
  $region27: #{_lambda_.5} parent=0 // pred_check_branch
    %25 = sbr.rel (0) target = $region29
  $region28: #{_lambda_.5} parent=0 // pred_region
    _
  $region29: #{_lambda_.5} parent=0 // pred_fallthru
    _
  %p27 = scmp.eq.s32.totalorder 0, 0
  // Predicated region
  $region30: #{_lambda_.5} parent=0 // pred_check
    %p28 = pneg %p27
  $region31: #{_lambda_.5} parent=0 // pred_check_branch
    %30 = sbr.rel (%p28) target = $region33
  $region32: #{_lambda_.5} parent=0 // pred_region
    %31 = vst [vmem:[#allocation2] sm:$0xff] 0.0
    %32 = vst [vmem:[#allocation2 + $0x8] sm:$0xff] 0.0
    %33 = vst [vmem:[#allocation2 + $0x10] sm:$0xff] 0.0
    %34 = vst [vmem:[#allocation2 + $0x18] sm:$0xff] 0.0
    %35 = vst [vmem:[#allocation2 + $0x20] sm:$0xff] 0.0
    %36 = vst [vmem:[#allocation2 + $0x28] sm:$0xff] 0.0
    %37 = vst [vmem:[#allocation2 + $0x30] sm:$0xff] 0.0
    %38 = vst [vmem:[#allocation2 + $0x38] sm:$0xff] 0.0
    %39 = vst [vmem:[#allocation2 + $0x40] sm:$0xff] 0.0
    %40 = vst [vmem:[#allocation2 + $0x48] sm:$0xff] 0.0
    %41 = vst [vmem:[#allocation2 + $0x50] sm:$0xff] 0.0
    %42 = vst [vmem:[#allocation2 + $0x58] sm:$0xff] 0.0
    %43 = vst [vmem:[#allocation2 + $0x60] sm:$0xff] 0.0
    %44 = vst [vmem:[#allocation2 + $0x68] sm:$0xff] 0.0
    %45 = vst [vmem:[#allocation2 + $0x70] sm:$0xff] 0.0
    %46 = vst [vmem:[#allocation2 + $0x78] sm:$0xff] 0.0
    %47 = vst [vmem:[#allocation2 + $0x80] sm:$0xff] 0.0
    %48 = vst [vmem:[#allocation2 + $0x88] sm:$0xff] 0.0
    %49 = vst [vmem:[#allocation2 + $0x90] sm:$0xff] 0.0
    %50 = vst [vmem:[#allocation2 + $0x98] sm:$0xff] 0.0
    %51 = vst [vmem:[#allocation2 + $0xa0] sm:$0xff] 0.0
    %52 = vst [vmem:[#allocation2 + $0xa8] sm:$0xff] 0.0
    %53 = vst [vmem:[#allocation2 + $0xb0] sm:$0xff] 0.0
    %54 = vst [vmem:[#allocation2 + $0xb8] sm:$0xff] 0.0
    %55 = vst [vmem:[#allocation2 + $0xc0] sm:$0xff] 0.0
    %56 = vst [vmem:[#allocation2 + $0xc8] sm:$0xff] 0.0
    %57 = vst [vmem:[#allocation2 + $0xd0] sm:$0xff] 0.0
    %58 = vst [vmem:[#allocation2 + $0xd8] sm:$0xff] 0.0
    %59 = vst [vmem:[#allocation2 + $0xe0] sm:$0xff] 0.0
    %60 = vst [vmem:[#allocation2 + $0xe8] sm:$0xff] 0.0
    %61 = vst [vmem:[#allocation2 + $0xf0] sm:$0xff] 0.0
    %62 = vst [vmem:[#allocation2 + $0xf8] sm:$0xff] 0.0
    %63 = vst [vmem:[#allocation3] sm:$0xff] 0.0
    %64 = vst [vmem:[#allocation3 + $0x8] sm:$0xff] 0.0
    %65 = vst [vmem:[#allocation3 + $0x10] sm:$0xff] 0.0
    %66 = vst [vmem:[#allocation3 + $0x18] sm:$0xff] 0.0
    %67 = vst [vmem:[#allocation3 + $0x20] sm:$0xff] 0.0
    %68 = vst [vmem:[#allocation3 + $0x28] sm:$0xff] 0.0
    %69 = vst [vmem:[#allocation3 + $0x30] sm:$0xff] 0.0
    %70 = vst [vmem:[#allocation3 + $0x38] sm:$0xff] 0.0
    %71 = vst [vmem:[#allocation3 + $0x40] sm:$0xff] 0.0
    %72 = vst [vmem:[#allocation3 + $0x48] sm:$0xff] 0.0
    %73 = vst [vmem:[#allocation3 + $0x50] sm:$0xff] 0.0
    %74 = vst [vmem:[#allocation3 + $0x58] sm:$0xff] 0.0
    %75 = vst [vmem:[#allocation3 + $0x60] sm:$0xff] 0.0
    %76 = vst [vmem:[#allocation3 + $0x68] sm:$0xff] 0.0
    %77 = vst [vmem:[#allocation3 + $0x70] sm:$0xff] 0.0
    %78 = vst [vmem:[#allocation3 + $0x78] sm:$0xff] 0.0
    %79 = vst [vmem:[#allocation3 + $0x80] sm:$0xff] 0.0
    %80 = vst [vmem:[#allocation3 + $0x88] sm:$0xff] 0.0
    %81 = vst [vmem:[#allocation3 + $0x90] sm:$0xff] 0.0
    %82 = vst [vmem:[#allocation3 + $0x98] sm:$0xff] 0.0
    %83 = vst [vmem:[#allocation3 + $0xa0] sm:$0xff] 0.0
    %84 = vst [vmem:[#allocation3 + $0xa8] sm:$0xff] 0.0
    %85 = vst [vmem:[#allocation3 + $0xb0] sm:$0xff] 0.0
    %86 = vst [vmem:[#allocation3 + $0xb8] sm:$0xff] 0.0
    %87 = vst [vmem:[#allocation3 + $0xc0] sm:$0xff] 0.0
    %88 = vst [vmem:[#allocation3 + $0xc8] sm:$0xff] 0.0
    %89 = vst [vmem:[#allocation3 + $0xd0] sm:$0xff] 0.0
    %90 = vst [vmem:[#allocation3 + $0xd8] sm:$0xff] 0.0
    %91 = vst [vmem:[#allocation3 + $0xe0] sm:$0xff] 0.0
    %92 = vst [vmem:[#allocation3 + $0xe8] sm:$0xff] 0.0
    %93 = vst [vmem:[#allocation3 + $0xf0] sm:$0xff] 0.0
    %94 = vst [vmem:[#allocation3 + $0xf8] sm:$0xff] 0.0
  $region33: #{_lambda_.5} parent=0 // pred_fallthru
    _
  %v95 = vld [vmem:[%s2] sm:$0xff]
  %v96 = vld [vmem:[%s2 + $0x8] sm:$0xff]
  %v97 = vld [vmem:[%s2 + $0x10] sm:$0xff]
  %v98 = vld [vmem:[%s2 + $0x18] sm:$0xff]
  %v99 = vld [vmem:[%s2 + $0x20] sm:$0xff]
  %v100 = vld [vmem:[%s2 + $0x28] sm:$0xff]
  %v101 = vld [vmem:[%s2 + $0x30] sm:$0xff]
  %v102 = vld [vmem:[%s2 + $0x38] sm:$0xff]
  %v103 = vld [vmem:[%s2 + $0x40] sm:$0xff]
  %v104 = vld [vmem:[%s2 + $0x48] sm:$0xff]
  %v105 = vld [vmem:[%s2 + $0x50] sm:$0xff]
  %v106 = vld [vmem:[%s2 + $0x58] sm:$0xff]
  %v107 = vld [vmem:[%s2 + $0x60] sm:$0xff]
  %v108 = vld [vmem:[%s2 + $0x68] sm:$0xff]
  %v109 = vld [vmem:[%s2 + $0x70] sm:$0xff]
  %v110 = vld [vmem:[%s2 + $0x78] sm:$0xff]
  %v111 = vld [vmem:[%s2 + $0x80] sm:$0xff]
  %v112 = vld [vmem:[%s2 + $0x88] sm:$0xff]
  %v113 = vld [vmem:[%s2 + $0x90] sm:$0xff]
  %v114 = vld [vmem:[%s2 + $0x98] sm:$0xff]
  %v115 = vld [vmem:[%s2 + $0xa0] sm:$0xff]
  %v116 = vld [vmem:[%s2 + $0xa8] sm:$0xff]
  %v117 = vld [vmem:[%s2 + $0xb0] sm:$0xff]
  %v118 = vld [vmem:[%s2 + $0xb8] sm:$0xff]
  %v119 = vld [vmem:[%s2 + $0xc0] sm:$0xff]
  %v120 = vld [vmem:[%s2 + $0xc8] sm:$0xff]
  %v121 = vld [vmem:[%s2 + $0xd0] sm:$0xff]
  %v122 = vld [vmem:[%s2 + $0xd8] sm:$0xff]
  %v123 = vld [vmem:[%s2 + $0xe0] sm:$0xff]
  %v124 = vld [vmem:[%s2 + $0xe8] sm:$0xff]
  %v125 = vld [vmem:[%s2 + $0xf0] sm:$0xff]
  %v126 = vld [vmem:[%s2 + $0xf8] sm:$0xff]
  %v127 = vld [vmem:[#allocation2] sm:$0xff]
  %v128 = vld [vmem:[#allocation2 + $0x8] sm:$0xff]
  %v129 = vld [vmem:[#allocation2 + $0x10] sm:$0xff]
  %v130 = vld [vmem:[#allocation2 + $0x18] sm:$0xff]
  %v131 = vld [vmem:[#allocation2 + $0x20] sm:$0xff]
  %v132 = vld [vmem:[#allocation2 + $0x28] sm:$0xff]
  %v133 = vld [vmem:[#allocation2 + $0x30] sm:$0xff]
  %v134 = vld [vmem:[#allocation2 + $0x38] sm:$0xff]
  %v135 = vld [vmem:[#allocation2 + $0x40] sm:$0xff]
  %v136 = vld [vmem:[#allocation2 + $0x48] sm:$0xff]
  %v137 = vld [vmem:[#allocation2 + $0x50] sm:$0xff]
  %v138 = vld [vmem:[#allocation2 + $0x58] sm:$0xff]
  %v139 = vld [vmem:[#allocation2 + $0x60] sm:$0xff]
  %v140 = vld [vmem:[#allocation2 + $0x68] sm:$0xff]
  %v141 = vld [vmem:[#allocation2 + $0x70] sm:$0xff]
  %v142 = vld [vmem:[#allocation2 + $0x78] sm:$0xff]
  %v143 = vld [vmem:[#allocation2 + $0x80] sm:$0xff]
  %v144 = vld [vmem:[#allocation2 + $0x88] sm:$0xff]
  %v145 = vld [vmem:[#allocation2 + $0x90] sm:$0xff]
  %v146 = vld [vmem:[#allocation2 + $0x98] sm:$0xff]
  %v147 = vld [vmem:[#allocation2 + $0xa0] sm:$0xff]
  %v148 = vld [vmem:[#allocation2 + $0xa8] sm:$0xff]
  %v149 = vld [vmem:[#allocation2 + $0xb0] sm:$0xff]
  %v150 = vld [vmem:[#allocation2 + $0xb8] sm:$0xff]
  %v151 = vld [vmem:[#allocation2 + $0xc0] sm:$0xff]
  %v152 = vld [vmem:[#allocation2 + $0xc8] sm:$0xff]
  %v153 = vld [vmem:[#allocation2 + $0xd0] sm:$0xff]
  %v154 = vld [vmem:[#allocation2 + $0xd8] sm:$0xff]
  %v155 = vld [vmem:[#allocation2 + $0xe0] sm:$0xff]
  %v156 = vld [vmem:[#allocation2 + $0xe8] sm:$0xff]
  %v157 = vld [vmem:[#allocation2 + $0xf0] sm:$0xff]
  %v158 = vld [vmem:[#allocation2 + $0xf8] sm:$0xff]
  %v159 = vld [vmem:[%s0] sm:$0xff]
  %v160 = vld [vmem:[%s0 + $0x8] sm:$0xff]
  %v161 = vld [vmem:[%s0 + $0x10] sm:$0xff]
  %v162 = vld [vmem:[%s0 + $0x18] sm:$0xff]
  %v163 = vld [vmem:[%s0 + $0x20] sm:$0xff]
  %v164 = vld [vmem:[%s0 + $0x28] sm:$0xff]
  %v165 = vld [vmem:[%s0 + $0x30] sm:$0xff]
  %v166 = vld [vmem:[%s0 + $0x38] sm:$0xff]
  %v167 = vld [vmem:[%s0 + $0x40] sm:$0xff]
  %v168 = vld [vmem:[%s0 + $0x48] sm:$0xff]
  %v169 = vld [vmem:[%s0 + $0x50] sm:$0xff]
  %v170 = vld [vmem:[%s0 + $0x58] sm:$0xff]
  %v171 = vld [vmem:[%s0 + $0x60] sm:$0xff]
  %v172 = vld [vmem:[%s0 + $0x68] sm:$0xff]
  %v173 = vld [vmem:[%s0 + $0x70] sm:$0xff]
  %v174 = vld [vmem:[%s0 + $0x78] sm:$0xff]
  %v175 = vld [vmem:[%s0 + $0x80] sm:$0xff]
  %v176 = vld [vmem:[%s0 + $0x88] sm:$0xff]
  %v177 = vld [vmem:[%s0 + $0x90] sm:$0xff]
  %v178 = vld [vmem:[%s0 + $0x98] sm:$0xff]
  %v179 = vld [vmem:[%s0 + $0xa0] sm:$0xff]
  %v180 = vld [vmem:[%s0 + $0xa8] sm:$0xff]
  %v181 = vld [vmem:[%s0 + $0xb0] sm:$0xff]
  %v182 = vld [vmem:[%s0 + $0xb8] sm:$0xff]
  %v183 = vld [vmem:[%s0 + $0xc0] sm:$0xff]
  %v184 = vld [vmem:[%s0 + $0xc8] sm:$0xff]
  %v185 = vld [vmem:[%s0 + $0xd0] sm:$0xff]
  %v186 = vld [vmem:[%s0 + $0xd8] sm:$0xff]
  %v187 = vld [vmem:[%s0 + $0xe0] sm:$0xff]
  %v188 = vld [vmem:[%s0 + $0xe8] sm:$0xff]
  %v189 = vld [vmem:[%s0 + $0xf0] sm:$0xff]
  %v190 = vld [vmem:[%s0 + $0xf8] sm:$0xff]
  %v223 = vunpack.c.l.b16 %v159
  %v224 = vunpack.c.h.b16 %v159
  %v225 = vunpack.c.l.b16 %v160
  %v226 = vunpack.c.h.b16 %v160
  %v227 = vunpack.c.l.b16 %v161
  %v228 = vunpack.c.h.b16 %v161
  %v229 = vunpack.c.l.b16 %v162
  %v230 = vunpack.c.h.b16 %v162
  %v231 = vunpack.c.l.b16 %v163
  %v232 = vunpack.c.h.b16 %v163
  %v233 = vunpack.c.l.b16 %v164
  %v234 = vunpack.c.h.b16 %v164
  %v235 = vunpack.c.l.b16 %v165
  %v236 = vunpack.c.h.b16 %v165
  %v237 = vunpack.c.l.b16 %v166
  %v238 = vunpack.c.h.b16 %v166
  %v239 = vunpack.c.l.b16 %v167
  %v240 = vunpack.c.h.b16 %v167
  %v241 = vunpack.c.l.b16 %v168
  %v242 = vunpack.c.h.b16 %v168
  %v243 = vunpack.c.l.b16 %v169
  %v244 = vunpack.c.h.b16 %v169
  %v245 = vunpack.c.l.b16 %v170
  %v246 = vunpack.c.h.b16 %v170
  %v247 = vunpack.c.l.b16 %v171
  %v248 = vunpack.c.h.b16 %v171
  %v249 = vunpack.c.l.b16 %v172
  %v250 = vunpack.c.h.b16 %v172
  %v251 = vunpack.c.l.b16 %v173
  %v252 = vunpack.c.h.b16 %v173
  %v253 = vunpack.c.l.b16 %v174
  %v254 = vunpack.c.h.b16 %v174
  %v255 = vunpack.c.l.b16 %v175
  %v256 = vunpack.c.h.b16 %v175
  %v257 = vunpack.c.l.b16 %v176
  %v258 = vunpack.c.h.b16 %v176
  %v259 = vunpack.c.l.b16 %v177
  %v260 = vunpack.c.h.b16 %v177
  %v261 = vunpack.c.l.b16 %v178
  %v262 = vunpack.c.h.b16 %v178
  %v263 = vunpack.c.l.b16 %v179
  %v264 = vunpack.c.h.b16 %v179
  %v265 = vunpack.c.l.b16 %v180
  %v266 = vunpack.c.h.b16 %v180
  %v267 = vunpack.c.l.b16 %v181
  %v268 = vunpack.c.h.b16 %v181
  %v269 = vunpack.c.l.b16 %v182
  %v270 = vunpack.c.h.b16 %v182
  %v271 = vunpack.c.l.b16 %v183
  %v272 = vunpack.c.h.b16 %v183
  %v273 = vunpack.c.l.b16 %v184
  %v274 = vunpack.c.h.b16 %v184
  %v275 = vunpack.c.l.b16 %v185
  %v276 = vunpack.c.h.b16 %v185
  %v277 = vunpack.c.l.b16 %v186
  %v278 = vunpack.c.h.b16 %v186
  %v279 = vunpack.c.l.b16 %v187
  %v280 = vunpack.c.h.b16 %v187
  %v281 = vunpack.c.l.b16 %v188
  %v282 = vunpack.c.h.b16 %v188
  %v283 = vunpack.c.l.b16 %v189
  %v284 = vunpack.c.h.b16 %v189
  %v285 = vunpack.c.l.b16 %v190
  %v286 = vunpack.c.h.b16 %v190
  %v287 = vpack.c.b16 %v225, %v223
  %v288 = vpack.c.b16 %v226, %v224
  %v289 = vpack.c.b16 %v229, %v227
  %v290 = vpack.c.b16 %v230, %v228
  %v291 = vpack.c.b16 %v233, %v231
  %v292 = vpack.c.b16 %v234, %v232
  %v293 = vpack.c.b16 %v237, %v235
  %v294 = vpack.c.b16 %v238, %v236
  %v295 = vpack.c.b16 %v241, %v239
  %v296 = vpack.c.b16 %v242, %v240
  %v297 = vpack.c.b16 %v245, %v243
  %v298 = vpack.c.b16 %v246, %v244
  %v299 = vpack.c.b16 %v249, %v247
  %v300 = vpack.c.b16 %v250, %v248
  %v301 = vpack.c.b16 %v253, %v251
  %v302 = vpack.c.b16 %v254, %v252
  %v303 = vpack.c.b16 %v257, %v255
  %v304 = vpack.c.b16 %v258, %v256
  %v305 = vpack.c.b16 %v261, %v259
  %v306 = vpack.c.b16 %v262, %v260
  %v307 = vpack.c.b16 %v265, %v263
  %v308 = vpack.c.b16 %v266, %v264
  %v309 = vpack.c.b16 %v269, %v267
  %v310 = vpack.c.b16 %v270, %v268
  %v311 = vpack.c.b16 %v273, %v271
  %v312 = vpack.c.b16 %v274, %v272
  %v313 = vpack.c.b16 %v277, %v275
  %v314 = vpack.c.b16 %v278, %v276
  %v315 = vpack.c.b16 %v281, %v279
  %v316 = vpack.c.b16 %v282, %v280
  %v317 = vpack.c.b16 %v285, %v283
  %v318 = vpack.c.b16 %v286, %v284
  %v383 = vunpack.c.l.b16 %v95
  %v384 = vunpack.c.l.b16 %v96
  %v385 = vunpack.c.l.b16 %v97
  %v386 = vunpack.c.l.b16 %v98
  %v387 = vunpack.c.l.b16 %v99
  %v388 = vunpack.c.l.b16 %v100
  %v389 = vunpack.c.l.b16 %v101
  %v390 = vunpack.c.l.b16 %v102
  %v391 = vunpack.c.l.b16 %v103
  %v392 = vunpack.c.l.b16 %v104
  %v393 = vunpack.c.l.b16 %v105
  %v394 = vunpack.c.l.b16 %v106
  %v395 = vunpack.c.l.b16 %v107
  %v396 = vunpack.c.l.b16 %v108
  %v397 = vunpack.c.l.b16 %v109
  %v398 = vunpack.c.l.b16 %v110
  %v399 = vunpack.c.l.b16 %v111
  %v400 = vunpack.c.l.b16 %v112
  %v401 = vunpack.c.l.b16 %v113
  %v402 = vunpack.c.l.b16 %v114
  %v403 = vunpack.c.l.b16 %v115
  %v404 = vunpack.c.l.b16 %v116
  %v405 = vunpack.c.l.b16 %v117
  %v406 = vunpack.c.l.b16 %v118
  %v407 = vunpack.c.l.b16 %v119
  %v408 = vunpack.c.l.b16 %v120
  %v409 = vunpack.c.l.b16 %v121
  %v410 = vunpack.c.l.b16 %v122
  %v411 = vunpack.c.l.b16 %v123
  %v412 = vunpack.c.l.b16 %v124
  %v413 = vunpack.c.l.b16 %v125
  %v414 = vunpack.c.l.b16 %v126
  %v415 = vpack.c.b16 %v384, %v383
  %v416 = vpack.c.b16 %v386, %v385
  %v417 = vpack.c.b16 %v388, %v387
  %v418 = vpack.c.b16 %v390, %v389
  %v419 = vpack.c.b16 %v392, %v391
  %v420 = vpack.c.b16 %v394, %v393
  %v421 = vpack.c.b16 %v396, %v395
  %v422 = vpack.c.b16 %v398, %v397
  %v423 = vpack.c.b16 %v400, %v399
  %v424 = vpack.c.b16 %v402, %v401
  %v425 = vpack.c.b16 %v404, %v403
  %v426 = vpack.c.b16 %v406, %v405
  %v427 = vpack.c.b16 %v408, %v407
  %v428 = vpack.c.b16 %v410, %v409
  %v429 = vpack.c.b16 %v412, %v411
  %v430 = vpack.c.b16 %v414, %v413
  %447 = vmatprep.subr.bf16.mxu0 0
  %448 = vmatpush1.bf16.msra.mxu0 %v415
  %449 = vmatprep.subr.bf16.mxu0 0
  %450 = vmatpush1.bf16.msra.mxu0 %v416
  %451 = vmatprep.subr.bf16.mxu0 0
  %452 = vmatpush1.bf16.msra.mxu0 %v417
  %453 = vmatprep.subr.bf16.mxu0 0
  %454 = vmatpush1.bf16.msra.mxu0 %v418
  %455 = vmatprep.subr.bf16.mxu0 0
  %456 = vmatpush1.bf16.msra.mxu0 %v419
  %457 = vmatprep.subr.bf16.mxu0 0
  %458 = vmatpush1.bf16.msra.mxu0 %v420
  %459 = vmatprep.subr.bf16.mxu0 0
  %460 = vmatpush1.bf16.msra.mxu0 %v421
  %461 = vmatprep.subr.bf16.mxu0 0
  %462 = vmatpush1.bf16.msra.mxu0 %v422
  %463 = vmatprep.subr.bf16.mxu0 0
  %464 = vmatpush1.bf16.msra.mxu0 %v423
  %465 = vmatprep.subr.bf16.mxu0 0
  %466 = vmatpush1.bf16.msra.mxu0 %v424
  %467 = vmatprep.subr.bf16.mxu0 0
  %468 = vmatpush1.bf16.msra.mxu0 %v425
  %469 = vmatprep.subr.bf16.mxu0 0
  %470 = vmatpush1.bf16.msra.mxu0 %v426
  %471 = vmatprep.subr.bf16.mxu0 0
  %472 = vmatpush1.bf16.msra.mxu0 %v427
  %473 = vmatprep.subr.bf16.mxu0 0
  %474 = vmatpush1.bf16.msra.mxu0 %v428
  %475 = vmatprep.subr.bf16.mxu0 0
  %476 = vmatpush1.bf16.msra.mxu0 %v429
  %477 = vmatprep.subr.bf16.mxu0 0
  %478 = vmatpush1.bf16.msra.mxu0 %v430
  %479 = vmatprep.mubr.bf16.mxu0 %v288
  %480 = vmatmul.mubr.bf16.gmra.mrb[0].mxu0 %v287
  %v481 = vpop.f32.mrb[0].mxu0
  %v482 = vadd.f32 0.0, %v481
  %v483 = vpop.f32.mrb[0].mxu0
  %v484 = vpop.f32.mrb[0].mxu0
  %v485 = vadd.f32 0.0, %v484
  %v486 = vpop.f32.mrb[0].mxu0
  %487 = vmatprep.mubr.bf16.mxu0 %v290
  %488 = vmatmul.mubr.bf16.gmra.mrb[0].mxu0 %v289
  %v489 = vpop.f32.mrb[0].mxu0
  %v490 = vadd.f32 0.0, %v489
  %v491 = vpop.f32.mrb[0].mxu0
  %v492 = vpop.f32.mrb[0].mxu0
  %v493 = vadd.f32 0.0, %v492
  %v494 = vpop.f32.mrb[0].mxu0
  %495 = vmatprep.mubr.bf16.mxu0 %v292
  %496 = vmatmul.mubr.bf16.gmra.mrb[0].mxu0 %v291
  %v497 = vpop.f32.mrb[0].mxu0
  %v498 = vadd.f32 0.0, %v497
  %v499 = vpop.f32.mrb[0].mxu0
  %v500 = vpop.f32.mrb[0].mxu0
  %v501 = vadd.f32 0.0, %v500
  %v502 = vpop.f32.mrb[0].mxu0
  %503 = vmatprep.mubr.bf16.mxu0 %v294
  %504 = vmatmul.mubr.bf16.gmra.mrb[0].mxu0 %v293
  %v505 = vpop.f32.mrb[0].mxu0
  %v506 = vadd.f32 0.0, %v505
  %v507 = vpop.f32.mrb[0].mxu0
  %v508 = vpop.f32.mrb[0].mxu0
  %v509 = vadd.f32 0.0, %v508
  %v510 = vpop.f32.mrb[0].mxu0
  %511 = vmatprep.mubr.bf16.mxu0 %v296
  %512 = vmatmul.mubr.bf16.gmra.mrb[0].mxu0 %v295
  %v513 = vpop.f32.mrb[0].mxu0
  %v514 = vadd.f32 0.0, %v513
  %v515 = vpop.f32.mrb[0].mxu0
  %v516 = vpop.f32.mrb[0].mxu0
  %v517 = vadd.f32 0.0, %v516
  %v518 = vpop.f32.mrb[0].mxu0
  %519 = vmatprep.mubr.bf16.mxu0 %v298
  %520 = vmatmul.mubr.bf16.gmra.mrb[0].mxu0 %v297
  %v521 = vpop.f32.mrb[0].mxu0
  %v522 = vadd.f32 0.0, %v521
  %v523 = vpop.f32.mrb[0].mxu0
  %v524 = vpop.f32.mrb[0].mxu0
  %v525 = vadd.f32 0.0, %v524
  %v526 = vpop.f32.mrb[0].mxu0
  %527 = vmatprep.mubr.bf16.mxu0 %v300
  %528 = vmatmul.mubr.bf16.gmra.mrb[0].mxu0 %v299
  %v529 = vpop.f32.mrb[0].mxu0
  %v530 = vadd.f32 0.0, %v529
  %v531 = vpop.f32.mrb[0].mxu0
  %v532 = vpop.f32.mrb[0].mxu0
  %v533 = vadd.f32 0.0, %v532
  %v534 = vpop.f32.mrb[0].mxu0
  %535 = vmatprep.mubr.bf16.mxu0 %v302
  %536 = vmatmul.mubr.bf16.gmra.mrb[0].mxu0 %v301
  %v537 = vpop.f32.mrb[0].mxu0
  %v538 = vadd.f32 0.0, %v537
  %v539 = vpop.f32.mrb[0].mxu0
  %v540 = vpop.f32.mrb[0].mxu0
  %v541 = vadd.f32 0.0, %v540
  %v542 = vpop.f32.mrb[0].mxu0
  %543 = vmatprep.mubr.bf16.mxu0 %v304
  %544 = vmatmul.mubr.bf16.gmra.mrb[0].mxu0 %v303
  %v545 = vpop.f32.mrb[0].mxu0
  %v546 = vadd.f32 0.0, %v545
  %v547 = vpop.f32.mrb[0].mxu0
  %v548 = vpop.f32.mrb[0].mxu0
  %v549 = vadd.f32 0.0, %v548
  %v550 = vpop.f32.mrb[0].mxu0
  %551 = vmatprep.mubr.bf16.mxu0 %v306
  %552 = vmatmul.mubr.bf16.gmra.mrb[0].mxu0 %v305
  %v553 = vpop.f32.mrb[0].mxu0
  %v554 = vadd.f32 0.0, %v553
  %v555 = vpop.f32.mrb[0].mxu0
  %v556 = vpop.f32.mrb[0].mxu0
  %v557 = vadd.f32 0.0, %v556
  %v558 = vpop.f32.mrb[0].mxu0
  %559 = vmatprep.mubr.bf16.mxu0 %v308
  %560 = vmatmul.mubr.bf16.gmra.mrb[0].mxu0 %v307
  %v561 = vpop.f32.mrb[0].mxu0
  %v562 = vadd.f32 0.0, %v561
  %v563 = vpop.f32.mrb[0].mxu0
  %v564 = vpop.f32.mrb[0].mxu0
  %v565 = vadd.f32 0.0, %v564
  %v566 = vpop.f32.mrb[0].mxu0
  %567 = vmatprep.mubr.bf16.mxu0 %v310
  %568 = vmatmul.mubr.bf16.gmra.mrb[0].mxu0 %v309
  %v569 = vpop.f32.mrb[0].mxu0
  %v570 = vadd.f32 0.0, %v569
  %v571 = vpop.f32.mrb[0].mxu0
  %v572 = vpop.f32.mrb[0].mxu0
  %v573 = vadd.f32 0.0, %v572
  %v574 = vpop.f32.mrb[0].mxu0
  %575 = vmatprep.mubr.bf16.mxu0 %v312
  %576 = vmatmul.mubr.bf16.gmra.mrb[0].mxu0 %v311
  %v577 = vpop.f32.mrb[0].mxu0
  %v578 = vadd.f32 0.0, %v577
  %v579 = vpop.f32.mrb[0].mxu0
  %v580 = vpop.f32.mrb[0].mxu0
  %v581 = vadd.f32 0.0, %v580
  %v582 = vpop.f32.mrb[0].mxu0
  %583 = vmatprep.mubr.bf16.mxu0 %v314
  %584 = vmatmul.mubr.bf16.gmra.mrb[0].mxu0 %v313
  %v585 = vpop.f32.mrb[0].mxu0
  %v586 = vadd.f32 0.0, %v585
  %v587 = vpop.f32.mrb[0].mxu0
  %v588 = vpop.f32.mrb[0].mxu0
  %v589 = vadd.f32 0.0, %v588
  %v590 = vpop.f32.mrb[0].mxu0
  %591 = vmatprep.mubr.bf16.mxu0 %v316
  %592 = vmatmul.mubr.bf16.gmra.mrb[0].mxu0 %v315
  %v593 = vpop.f32.mrb[0].mxu0
  %v594 = vadd.f32 0.0, %v593
  %v595 = vpop.f32.mrb[0].mxu0
  %v596 = vpop.f32.mrb[0].mxu0
  %v597 = vadd.f32 0.0, %v596
  %v598 = vpop.f32.mrb[0].mxu0
  %599 = vmatprep.mubr.bf16.mxu0 %v318
  %600 = vmatmul.mubr.bf16.gmra.mrb[0].mxu0 %v317
  %v601 = vpop.f32.mrb[0].mxu0
  %v602 = vadd.f32 0.0, %v601
  %v603 = vpop.f32.mrb[0].mxu0
  %v604 = vpop.f32.mrb[0].mxu0
  %v605 = vadd.f32 0.0, %v604
  %v606 = vpop.f32.mrb[0].mxu0
  %607 = vdwg.mxu0
  %v608 = vadd.f32 %v127, %v482
  %v609 = vadd.f32 %v128, %v485
  %v610 = vadd.f32 %v129, %v490
  %v611 = vadd.f32 %v130, %v493
  %v612 = vadd.f32 %v131, %v498
  %v613 = vadd.f32 %v132, %v501
  %v614 = vadd.f32 %v133, %v506
  %v615 = vadd.f32 %v134, %v509
  %v616 = vadd.f32 %v135, %v514
  %v617 = vadd.f32 %v136, %v517
  %v618 = vadd.f32 %v137, %v522
  %v619 = vadd.f32 %v138, %v525
  %v620 = vadd.f32 %v139, %v530
  %v621 = vadd.f32 %v140, %v533
  %v622 = vadd.f32 %v141, %v538
  %v623 = vadd.f32 %v142, %v541
  %v624 = vadd.f32 %v143, %v546
  %v625 = vadd.f32 %v144, %v549
  %v626 = vadd.f32 %v145, %v554
  %v627 = vadd.f32 %v146, %v557
  %v628 = vadd.f32 %v147, %v562
  %v629 = vadd.f32 %v148, %v565
  %v630 = vadd.f32 %v149, %v570
  %v631 = vadd.f32 %v150, %v573
  %v632 = vadd.f32 %v151, %v578
  %v633 = vadd.f32 %v152, %v581
  %v634 = vadd.f32 %v153, %v586
  %v635 = vadd.f32 %v154, %v589
  %v636 = vadd.f32 %v155, %v594
  %v637 = vadd.f32 %v156, %v597
  %v638 = vadd.f32 %v157, %v602
  %v639 = vadd.f32 %v158, %v605
  %640 = vst [vmem:[#allocation2] sm:$0xff] %v608
  %641 = vst [vmem:[#allocation2 + $0x8] sm:$0xff] %v609
  %642 = vst [vmem:[#allocation2 + $0x10] sm:$0xff] %v610
  %643 = vst [vmem:[#allocation2 + $0x18] sm:$0xff] %v611
  %644 = vst [vmem:[#allocation2 + $0x20] sm:$0xff] %v612
  %645 = vst [vmem:[#allocation2 + $0x28] sm:$0xff] %v613
  %646 = vst [vmem:[#allocation2 + $0x30] sm:$0xff] %v614
  %647 = vst [vmem:[#allocation2 + $0x38] sm:$0xff] %v615
  %648 = vst [vmem:[#allocation2 + $0x40] sm:$0xff] %v616
  %649 = vst [vmem:[#allocation2 + $0x48] sm:$0xff] %v617
  %650 = vst [vmem:[#allocation2 + $0x50] sm:$0xff] %v618
  %651 = vst [vmem:[#allocation2 + $0x58] sm:$0xff] %v619
  %652 = vst [vmem:[#allocation2 + $0x60] sm:$0xff] %v620
  %653 = vst [vmem:[#allocation2 + $0x68] sm:$0xff] %v621
  %654 = vst [vmem:[#allocation2 + $0x70] sm:$0xff] %v622
  %655 = vst [vmem:[#allocation2 + $0x78] sm:$0xff] %v623
  %656 = vst [vmem:[#allocation2 + $0x80] sm:$0xff] %v624
  %657 = vst [vmem:[#allocation2 + $0x88] sm:$0xff] %v625
  %658 = vst [vmem:[#allocation2 + $0x90] sm:$0xff] %v626
  %659 = vst [vmem:[#allocation2 + $0x98] sm:$0xff] %v627
  %660 = vst [vmem:[#allocation2 + $0xa0] sm:$0xff] %v628
  %661 = vst [vmem:[#allocation2 + $0xa8] sm:$0xff] %v629
  %662 = vst [vmem:[#allocation2 + $0xb0] sm:$0xff] %v630
  %663 = vst [vmem:[#allocation2 + $0xb8] sm:$0xff] %v631
  %664 = vst [vmem:[#allocation2 + $0xc0] sm:$0xff] %v632
  %665 = vst [vmem:[#allocation2 + $0xc8] sm:$0xff] %v633
  %666 = vst [vmem:[#allocation2 + $0xd0] sm:$0xff] %v634
  %667 = vst [vmem:[#allocation2 + $0xd8] sm:$0xff] %v635
  %668 = vst [vmem:[#allocation2 + $0xe0] sm:$0xff] %v636
  %669 = vst [vmem:[#allocation2 + $0xe8] sm:$0xff] %v637
  %670 = vst [vmem:[#allocation2 + $0xf0] sm:$0xff] %v638
  %671 = vst [vmem:[#allocation2 + $0xf8] sm:$0xff] %v639
  %v672 = vld [vmem:[#allocation3] sm:$0xff]
  %v673 = vld [vmem:[#allocation3 + $0x8] sm:$0xff]
  %v674 = vld [vmem:[#allocation3 + $0x10] sm:$0xff]
  %v675 = vld [vmem:[#allocation3 + $0x18] sm:$0xff]
  %v676 = vld [vmem:[#allocation3 + $0x20] sm:$0xff]
  %v677 = vld [vmem:[#allocation3 + $0x28] sm:$0xff]
  %v678 = vld [vmem:[#allocation3 + $0x30] sm:$0xff]
  %v679 = vld [vmem:[#allocation3 + $0x38] sm:$0xff]
  %v680 = vld [vmem:[#allocation3 + $0x40] sm:$0xff]
  %v681 = vld [vmem:[#allocation3 + $0x48] sm:$0xff]
  %v682 = vld [vmem:[#allocation3 + $0x50] sm:$0xff]
  %v683 = vld [vmem:[#allocation3 + $0x58] sm:$0xff]
  %v684 = vld [vmem:[#allocation3 + $0x60] sm:$0xff]
  %v685 = vld [vmem:[#allocation3 + $0x68] sm:$0xff]
  %v686 = vld [vmem:[#allocation3 + $0x70] sm:$0xff]
  %v687 = vld [vmem:[#allocation3 + $0x78] sm:$0xff]
  %v688 = vld [vmem:[#allocation3 + $0x80] sm:$0xff]
  %v689 = vld [vmem:[#allocation3 + $0x88] sm:$0xff]
  %v690 = vld [vmem:[#allocation3 + $0x90] sm:$0xff]
  %v691 = vld [vmem:[#allocation3 + $0x98] sm:$0xff]
  %v692 = vld [vmem:[#allocation3 + $0xa0] sm:$0xff]
  %v693 = vld [vmem:[#allocation3 + $0xa8] sm:$0xff]
  %v694 = vld [vmem:[#allocation3 + $0xb0] sm:$0xff]
  %v695 = vld [vmem:[#allocation3 + $0xb8] sm:$0xff]
  %v696 = vld [vmem:[#allocation3 + $0xc0] sm:$0xff]
  %v697 = vld [vmem:[#allocation3 + $0xc8] sm:$0xff]
  %v698 = vld [vmem:[#allocation3 + $0xd0] sm:$0xff]
  %v699 = vld [vmem:[#allocation3 + $0xd8] sm:$0xff]
  %v700 = vld [vmem:[#allocation3 + $0xe0] sm:$0xff]
  %v701 = vld [vmem:[#allocation3 + $0xe8] sm:$0xff]
  %v702 = vld [vmem:[#allocation3 + $0xf0] sm:$0xff]
  %v703 = vld [vmem:[#allocation3 + $0xf8] sm:$0xff]
  %v704 = vld [vmem:[%s1] sm:$0xff]
  %v705 = vld [vmem:[%s1 + $0x8] sm:$0xff]
  %v706 = vld [vmem:[%s1 + $0x10] sm:$0xff]
  %v707 = vld [vmem:[%s1 + $0x18] sm:$0xff]
  %v708 = vld [vmem:[%s1 + $0x20] sm:$0xff]
  %v709 = vld [vmem:[%s1 + $0x28] sm:$0xff]
  %v710 = vld [vmem:[%s1 + $0x30] sm:$0xff]
  %v711 = vld [vmem:[%s1 + $0x38] sm:$0xff]
  %v712 = vld [vmem:[%s1 + $0x40] sm:$0xff]
  %v713 = vld [vmem:[%s1 + $0x48] sm:$0xff]
  %v714 = vld [vmem:[%s1 + $0x50] sm:$0xff]
  %v715 = vld [vmem:[%s1 + $0x58] sm:$0xff]
  %v716 = vld [vmem:[%s1 + $0x60] sm:$0xff]
  %v717 = vld [vmem:[%s1 + $0x68] sm:$0xff]
  %v718 = vld [vmem:[%s1 + $0x70] sm:$0xff]
  %v719 = vld [vmem:[%s1 + $0x78] sm:$0xff]
  %v720 = vld [vmem:[%s1 + $0x80] sm:$0xff]
  %v721 = vld [vmem:[%s1 + $0x88] sm:$0xff]
  %v722 = vld [vmem:[%s1 + $0x90] sm:$0xff]
  %v723 = vld [vmem:[%s1 + $0x98] sm:$0xff]
  %v724 = vld [vmem:[%s1 + $0xa0] sm:$0xff]
  %v725 = vld [vmem:[%s1 + $0xa8] sm:$0xff]
  %v726 = vld [vmem:[%s1 + $0xb0] sm:$0xff]
  %v727 = vld [vmem:[%s1 + $0xb8] sm:$0xff]
  %v728 = vld [vmem:[%s1 + $0xc0] sm:$0xff]
  %v729 = vld [vmem:[%s1 + $0xc8] sm:$0xff]
  %v730 = vld [vmem:[%s1 + $0xd0] sm:$0xff]
  %v731 = vld [vmem:[%s1 + $0xd8] sm:$0xff]
  %v732 = vld [vmem:[%s1 + $0xe0] sm:$0xff]
  %v733 = vld [vmem:[%s1 + $0xe8] sm:$0xff]
  %v734 = vld [vmem:[%s1 + $0xf0] sm:$0xff]
  %v735 = vld [vmem:[%s1 + $0xf8] sm:$0xff]
  %v768 = vunpack.c.l.b16 %v704
  %v769 = vunpack.c.h.b16 %v704
  %v770 = vunpack.c.l.b16 %v705
  %v771 = vunpack.c.h.b16 %v705
  %v772 = vunpack.c.l.b16 %v706
  %v773 = vunpack.c.h.b16 %v706
  %v774 = vunpack.c.l.b16 %v707
  %v775 = vunpack.c.h.b16 %v707
  %v776 = vunpack.c.l.b16 %v708
  %v777 = vunpack.c.h.b16 %v708
  %v778 = vunpack.c.l.b16 %v709
  %v779 = vunpack.c.h.b16 %v709
  %v780 = vunpack.c.l.b16 %v710
  %v781 = vunpack.c.h.b16 %v710
  %v782 = vunpack.c.l.b16 %v711
  %v783 = vunpack.c.h.b16 %v711
  %v784 = vunpack.c.l.b16 %v712
  %v785 = vunpack.c.h.b16 %v712
  %v786 = vunpack.c.l.b16 %v713
  %v787 = vunpack.c.h.b16 %v713
  %v788 = vunpack.c.l.b16 %v714
  %v789 = vunpack.c.h.b16 %v714
  %v790 = vunpack.c.l.b16 %v715
  %v791 = vunpack.c.h.b16 %v715
  %v792 = vunpack.c.l.b16 %v716
  %v793 = vunpack.c.h.b16 %v716
  %v794 = vunpack.c.l.b16 %v717
  %v795 = vunpack.c.h.b16 %v717
  %v796 = vunpack.c.l.b16 %v718
  %v797 = vunpack.c.h.b16 %v718
  %v798 = vunpack.c.l.b16 %v719
  %v799 = vunpack.c.h.b16 %v719
  %v800 = vunpack.c.l.b16 %v720
  %v801 = vunpack.c.h.b16 %v720
  %v802 = vunpack.c.l.b16 %v721
  %v803 = vunpack.c.h.b16 %v721
  %v804 = vunpack.c.l.b16 %v722
  %v805 = vunpack.c.h.b16 %v722
  %v806 = vunpack.c.l.b16 %v723
  %v807 = vunpack.c.h.b16 %v723
  %v808 = vunpack.c.l.b16 %v724
  %v809 = vunpack.c.h.b16 %v724
  %v810 = vunpack.c.l.b16 %v725
  %v811 = vunpack.c.h.b16 %v725
  %v812 = vunpack.c.l.b16 %v726
  %v813 = vunpack.c.h.b16 %v726
  %v814 = vunpack.c.l.b16 %v727
  %v815 = vunpack.c.h.b16 %v727
  %v816 = vunpack.c.l.b16 %v728
  %v817 = vunpack.c.h.b16 %v728
  %v818 = vunpack.c.l.b16 %v729
  %v819 = vunpack.c.h.b16 %v729
  %v820 = vunpack.c.l.b16 %v730
  %v821 = vunpack.c.h.b16 %v730
  %v822 = vunpack.c.l.b16 %v731
  %v823 = vunpack.c.h.b16 %v731
  %v824 = vunpack.c.l.b16 %v732
  %v825 = vunpack.c.h.b16 %v732
  %v826 = vunpack.c.l.b16 %v733
  %v827 = vunpack.c.h.b16 %v733
  %v828 = vunpack.c.l.b16 %v734
  %v829 = vunpack.c.h.b16 %v734
  %v830 = vunpack.c.l.b16 %v735
  %v831 = vunpack.c.h.b16 %v735
  %v832 = vpack.c.b16 %v770, %v768
  %v833 = vpack.c.b16 %v771, %v769
  %v834 = vpack.c.b16 %v774, %v772
  %v835 = vpack.c.b16 %v775, %v773
  %v836 = vpack.c.b16 %v778, %v776
  %v837 = vpack.c.b16 %v779, %v777
  %v838 = vpack.c.b16 %v782, %v780
  %v839 = vpack.c.b16 %v783, %v781
  %v840 = vpack.c.b16 %v786, %v784
  %v841 = vpack.c.b16 %v787, %v785
  %v842 = vpack.c.b16 %v790, %v788
  %v843 = vpack.c.b16 %v791, %v789
  %v844 = vpack.c.b16 %v794, %v792
  %v845 = vpack.c.b16 %v795, %v793
  %v846 = vpack.c.b16 %v798, %v796
  %v847 = vpack.c.b16 %v799, %v797
  %v848 = vpack.c.b16 %v802, %v800
  %v849 = vpack.c.b16 %v803, %v801
  %v850 = vpack.c.b16 %v806, %v804
  %v851 = vpack.c.b16 %v807, %v805
  %v852 = vpack.c.b16 %v810, %v808
  %v853 = vpack.c.b16 %v811, %v809
  %v854 = vpack.c.b16 %v814, %v812
  %v855 = vpack.c.b16 %v815, %v813
  %v856 = vpack.c.b16 %v818, %v816
  %v857 = vpack.c.b16 %v819, %v817
  %v858 = vpack.c.b16 %v822, %v820
  %v859 = vpack.c.b16 %v823, %v821
  %v860 = vpack.c.b16 %v826, %v824
  %v861 = vpack.c.b16 %v827, %v825
  %v862 = vpack.c.b16 %v830, %v828
  %v863 = vpack.c.b16 %v831, %v829
  %v896 = vunpack.c.h.b16 %v95
  %v897 = vunpack.c.h.b16 %v96
  %v898 = vunpack.c.h.b16 %v97
  %v899 = vunpack.c.h.b16 %v98
  %v900 = vunpack.c.h.b16 %v99
  %v901 = vunpack.c.h.b16 %v100
  %v902 = vunpack.c.h.b16 %v101
  %v903 = vunpack.c.h.b16 %v102
  %v904 = vunpack.c.h.b16 %v103
  %v905 = vunpack.c.h.b16 %v104
  %v906 = vunpack.c.h.b16 %v105
  %v907 = vunpack.c.h.b16 %v106
  %v908 = vunpack.c.h.b16 %v107
  %v909 = vunpack.c.h.b16 %v108
  %v910 = vunpack.c.h.b16 %v109
  %v911 = vunpack.c.h.b16 %v110
  %v912 = vunpack.c.h.b16 %v111
  %v913 = vunpack.c.h.b16 %v112
  %v914 = vunpack.c.h.b16 %v113
  %v915 = vunpack.c.h.b16 %v114
  %v916 = vunpack.c.h.b16 %v115
  %v917 = vunpack.c.h.b16 %v116
  %v918 = vunpack.c.h.b16 %v117
  %v919 = vunpack.c.h.b16 %v118
  %v920 = vunpack.c.h.b16 %v119
  %v921 = vunpack.c.h.b16 %v120
  %v922 = vunpack.c.h.b16 %v121
  %v923 = vunpack.c.h.b16 %v122
  %v924 = vunpack.c.h.b16 %v123
  %v925 = vunpack.c.h.b16 %v124
  %v926 = vunpack.c.h.b16 %v125
  %v927 = vunpack.c.h.b16 %v126
  %v928 = vpack.c.b16 %v897, %v896
  %v929 = vpack.c.b16 %v899, %v898
  %v930 = vpack.c.b16 %v901, %v900
  %v931 = vpack.c.b16 %v903, %v902
  %v932 = vpack.c.b16 %v905, %v904
  %v933 = vpack.c.b16 %v907, %v906
  %v934 = vpack.c.b16 %v909, %v908
  %v935 = vpack.c.b16 %v911, %v910
  %v936 = vpack.c.b16 %v913, %v912
  %v937 = vpack.c.b16 %v915, %v914
  %v938 = vpack.c.b16 %v917, %v916
  %v939 = vpack.c.b16 %v919, %v918
  %v940 = vpack.c.b16 %v921, %v920
  %v941 = vpack.c.b16 %v923, %v922
  %v942 = vpack.c.b16 %v925, %v924
  %v943 = vpack.c.b16 %v927, %v926
  %960 = vmatprep.subr.bf16.mxu0 0
  %961 = vmatpush1.bf16.msra.mxu0 %v928
  %962 = vmatprep.subr.bf16.mxu0 0
  %963 = vmatpush1.bf16.msra.mxu0 %v929
  %964 = vmatprep.subr.bf16.mxu0 0
  %965 = vmatpush1.bf16.msra.mxu0 %v930
  %966 = vmatprep.subr.bf16.mxu0 0
  %967 = vmatpush1.bf16.msra.mxu0 %v931
  %968 = vmatprep.subr.bf16.mxu0 0
  %969 = vmatpush1.bf16.msra.mxu0 %v932
  %970 = vmatprep.subr.bf16.mxu0 0
  %971 = vmatpush1.bf16.msra.mxu0 %v933
  %972 = vmatprep.subr.bf16.mxu0 0
  %973 = vmatpush1.bf16.msra.mxu0 %v934
  %974 = vmatprep.subr.bf16.mxu0 0
  %975 = vmatpush1.bf16.msra.mxu0 %v935
  %976 = vmatprep.subr.bf16.mxu0 0
  %977 = vmatpush1.bf16.msra.mxu0 %v936
  %978 = vmatprep.subr.bf16.mxu0 0
  %979 = vmatpush1.bf16.msra.mxu0 %v937
  %980 = vmatprep.subr.bf16.mxu0 0
  %981 = vmatpush1.bf16.msra.mxu0 %v938
  %982 = vmatprep.subr.bf16.mxu0 0
  %983 = vmatpush1.bf16.msra.mxu0 %v939
  %984 = vmatprep.subr.bf16.mxu0 0
  %985 = vmatpush1.bf16.msra.mxu0 %v940
  %986 = vmatprep.subr.bf16.mxu0 0
  %987 = vmatpush1.bf16.msra.mxu0 %v941
  %988 = vmatprep.subr.bf16.mxu0 0
  %989 = vmatpush1.bf16.msra.mxu0 %v942
  %990 = vmatprep.subr.bf16.mxu0 0
  %991 = vmatpush1.bf16.msra.mxu0 %v943
  %992 = vmatprep.mubr.bf16.mxu0 %v833
  %993 = vmatmul.mubr.bf16.gmra.mrb[0].mxu0 %v832
  %v994 = vpop.f32.mrb[0].mxu0
  %v995 = vadd.f32 0.0, %v994
  %v996 = vpop.f32.mrb[0].mxu0
  %v997 = vpop.f32.mrb[0].mxu0
  %v998 = vadd.f32 0.0, %v997
  %v999 = vpop.f32.mrb[0].mxu0
  %1000 = vmatprep.mubr.bf16.mxu0 %v835
  %1001 = vmatmul.mubr.bf16.gmra.mrb[0].mxu0 %v834
  %v1002 = vpop.f32.mrb[0].mxu0
  %v1003 = vadd.f32 0.0, %v1002
  %v1004 = vpop.f32.mrb[0].mxu0
  %v1005 = vpop.f32.mrb[0].mxu0
  %v1006 = vadd.f32 0.0, %v1005
  %v1007 = vpop.f32.mrb[0].mxu0
  %1008 = vmatprep.mubr.bf16.mxu0 %v837
  %1009 = vmatmul.mubr.bf16.gmra.mrb[0].mxu0 %v836
  %v1010 = vpop.f32.mrb[0].mxu0
  %v1011 = vadd.f32 0.0, %v1010
  %v1012 = vpop.f32.mrb[0].mxu0
  %v1013 = vpop.f32.mrb[0].mxu0
  %v1014 = vadd.f32 0.0, %v1013
  %v1015 = vpop.f32.mrb[0].mxu0
  %1016 = vmatprep.mubr.bf16.mxu0 %v839
  %1017 = vmatmul.mubr.bf16.gmra.mrb[0].mxu0 %v838
  %v1018 = vpop.f32.mrb[0].mxu0
  %v1019 = vadd.f32 0.0, %v1018
  %v1020 = vpop.f32.mrb[0].mxu0
  %v1021 = vpop.f32.mrb[0].mxu0
  %v1022 = vadd.f32 0.0, %v1021
  %v1023 = vpop.f32.mrb[0].mxu0
  %1024 = vmatprep.mubr.bf16.mxu0 %v841
  %1025 = vmatmul.mubr.bf16.gmra.mrb[0].mxu0 %v840
  %v1026 = vpop.f32.mrb[0].mxu0
  %v1027 = vadd.f32 0.0, %v1026
  %v1028 = vpop.f32.mrb[0].mxu0
  %v1029 = vpop.f32.mrb[0].mxu0
  %v1030 = vadd.f32 0.0, %v1029
  %v1031 = vpop.f32.mrb[0].mxu0
  %1032 = vmatprep.mubr.bf16.mxu0 %v843
  %1033 = vmatmul.mubr.bf16.gmra.mrb[0].mxu0 %v842
  %v1034 = vpop.f32.mrb[0].mxu0
  %v1035 = vadd.f32 0.0, %v1034
  %v1036 = vpop.f32.mrb[0].mxu0
  %v1037 = vpop.f32.mrb[0].mxu0
  %v1038 = vadd.f32 0.0, %v1037
  %v1039 = vpop.f32.mrb[0].mxu0
  %1040 = vmatprep.mubr.bf16.mxu0 %v845
  %1041 = vmatmul.mubr.bf16.gmra.mrb[0].mxu0 %v844
  %v1042 = vpop.f32.mrb[0].mxu0
  %v1043 = vadd.f32 0.0, %v1042
  %v1044 = vpop.f32.mrb[0].mxu0
  %v1045 = vpop.f32.mrb[0].mxu0
  %v1046 = vadd.f32 0.0, %v1045
  %v1047 = vpop.f32.mrb[0].mxu0
  %1048 = vmatprep.mubr.bf16.mxu0 %v847
  %1049 = vmatmul.mubr.bf16.gmra.mrb[0].mxu0 %v846
  %v1050 = vpop.f32.mrb[0].mxu0
  %v1051 = vadd.f32 0.0, %v1050
  %v1052 = vpop.f32.mrb[0].mxu0
  %v1053 = vpop.f32.mrb[0].mxu0
  %v1054 = vadd.f32 0.0, %v1053
  %v1055 = vpop.f32.mrb[0].mxu0
  %1056 = vmatprep.mubr.bf16.mxu0 %v849
  %1057 = vmatmul.mubr.bf16.gmra.mrb[0].mxu0 %v848
  %v1058 = vpop.f32.mrb[0].mxu0
  %v1059 = vadd.f32 0.0, %v1058
  %v1060 = vpop.f32.mrb[0].mxu0
  %v1061 = vpop.f32.mrb[0].mxu0
  %v1062 = vadd.f32 0.0, %v1061
  %v1063 = vpop.f32.mrb[0].mxu0
  %1064 = vmatprep.mubr.bf16.mxu0 %v851
  %1065 = vmatmul.mubr.bf16.gmra.mrb[0].mxu0 %v850
  %v1066 = vpop.f32.mrb[0].mxu0
  %v1067 = vadd.f32 0.0, %v1066
  %v1068 = vpop.f32.mrb[0].mxu0
  %v1069 = vpop.f32.mrb[0].mxu0
  %v1070 = vadd.f32 0.0, %v1069
  %v1071 = vpop.f32.mrb[0].mxu0
  %1072 = vmatprep.mubr.bf16.mxu0 %v853
  %1073 = vmatmul.mubr.bf16.gmra.mrb[0].mxu0 %v852
  %v1074 = vpop.f32.mrb[0].mxu0
  %v1075 = vadd.f32 0.0, %v1074
  %v1076 = vpop.f32.mrb[0].mxu0
  %v1077 = vpop.f32.mrb[0].mxu0
  %v1078 = vadd.f32 0.0, %v1077
  %v1079 = vpop.f32.mrb[0].mxu0
  %1080 = vmatprep.mubr.bf16.mxu0 %v855
  %1081 = vmatmul.mubr.bf16.gmra.mrb[0].mxu0 %v854
  %v1082 = vpop.f32.mrb[0].mxu0
  %v1083 = vadd.f32 0.0, %v1082
  %v1084 = vpop.f32.mrb[0].mxu0
  %v1085 = vpop.f32.mrb[0].mxu0
  %v1086 = vadd.f32 0.0, %v1085
  %v1087 = vpop.f32.mrb[0].mxu0
  %1088 = vmatprep.mubr.bf16.mxu0 %v857
  %1089 = vmatmul.mubr.bf16.gmra.mrb[0].mxu0 %v856
  %v1090 = vpop.f32.mrb[0].mxu0
  %v1091 = vadd.f32 0.0, %v1090
  %v1092 = vpop.f32.mrb[0].mxu0
  %v1093 = vpop.f32.mrb[0].mxu0
  %v1094 = vadd.f32 0.0, %v1093
  %v1095 = vpop.f32.mrb[0].mxu0
  %1096 = vmatprep.mubr.bf16.mxu0 %v859
  %1097 = vmatmul.mubr.bf16.gmra.mrb[0].mxu0 %v858
  %v1098 = vpop.f32.mrb[0].mxu0
  %v1099 = vadd.f32 0.0, %v1098
  %v1100 = vpop.f32.mrb[0].mxu0
  %v1101 = vpop.f32.mrb[0].mxu0
  %v1102 = vadd.f32 0.0, %v1101
  %v1103 = vpop.f32.mrb[0].mxu0
  %1104 = vmatprep.mubr.bf16.mxu0 %v861
  %1105 = vmatmul.mubr.bf16.gmra.mrb[0].mxu0 %v860
  %v1106 = vpop.f32.mrb[0].mxu0
  %v1107 = vadd.f32 0.0, %v1106
  %v1108 = vpop.f32.mrb[0].mxu0
  %v1109 = vpop.f32.mrb[0].mxu0
  %v1110 = vadd.f32 0.0, %v1109
  %v1111 = vpop.f32.mrb[0].mxu0
  %1112 = vmatprep.mubr.bf16.mxu0 %v863
  %1113 = vmatmul.mubr.bf16.gmra.mrb[0].mxu0 %v862
  %v1114 = vpop.f32.mrb[0].mxu0
  %v1115 = vadd.f32 0.0, %v1114
  %v1116 = vpop.f32.mrb[0].mxu0
  %v1117 = vpop.f32.mrb[0].mxu0
  %v1118 = vadd.f32 0.0, %v1117
  %v1119 = vpop.f32.mrb[0].mxu0
  %1120 = vdwg.mxu0
  %v1121 = vadd.f32 %v672, %v995
  %v1122 = vadd.f32 %v673, %v998
  %v1123 = vadd.f32 %v674, %v1003
  %v1124 = vadd.f32 %v675, %v1006
  %v1125 = vadd.f32 %v676, %v1011
  %v1126 = vadd.f32 %v677, %v1014
  %v1127 = vadd.f32 %v678, %v1019
  %v1128 = vadd.f32 %v679, %v1022
  %v1129 = vadd.f32 %v680, %v1027
  %v1130 = vadd.f32 %v681, %v1030
  %v1131 = vadd.f32 %v682, %v1035
  %v1132 = vadd.f32 %v683, %v1038
  %v1133 = vadd.f32 %v684, %v1043
  %v1134 = vadd.f32 %v685, %v1046
  %v1135 = vadd.f32 %v686, %v1051
  %v1136 = vadd.f32 %v687, %v1054
  %v1137 = vadd.f32 %v688, %v1059
  %v1138 = vadd.f32 %v689, %v1062
  %v1139 = vadd.f32 %v690, %v1067
  %v1140 = vadd.f32 %v691, %v1070
  %v1141 = vadd.f32 %v692, %v1075
  %v1142 = vadd.f32 %v693, %v1078
  %v1143 = vadd.f32 %v694, %v1083
  %v1144 = vadd.f32 %v695, %v1086
  %v1145 = vadd.f32 %v696, %v1091
  %v1146 = vadd.f32 %v697, %v1094
  %v1147 = vadd.f32 %v698, %v1099
  %v1148 = vadd.f32 %v699, %v1102
  %v1149 = vadd.f32 %v700, %v1107
  %v1150 = vadd.f32 %v701, %v1110
  %v1151 = vadd.f32 %v702, %v1115
  %v1152 = vadd.f32 %v703, %v1118
  %1153 = vst [vmem:[#allocation3] sm:$0xff] %v1121
  %1154 = vst [vmem:[#allocation3 + $0x8] sm:$0xff] %v1122
  %1155 = vst [vmem:[#allocation3 + $0x10] sm:$0xff] %v1123
  %1156 = vst [vmem:[#allocation3 + $0x18] sm:$0xff] %v1124
  %1157 = vst [vmem:[#allocation3 + $0x20] sm:$0xff] %v1125
  %1158 = vst [vmem:[#allocation3 + $0x28] sm:$0xff] %v1126
  %1159 = vst [vmem:[#allocation3 + $0x30] sm:$0xff] %v1127
  %1160 = vst [vmem:[#allocation3 + $0x38] sm:$0xff] %v1128
  %1161 = vst [vmem:[#allocation3 + $0x40] sm:$0xff] %v1129
  %1162 = vst [vmem:[#allocation3 + $0x48] sm:$0xff] %v1130
  %1163 = vst [vmem:[#allocation3 + $0x50] sm:$0xff] %v1131
  %1164 = vst [vmem:[#allocation3 + $0x58] sm:$0xff] %v1132
  %1165 = vst [vmem:[#allocation3 + $0x60] sm:$0xff] %v1133
  %1166 = vst [vmem:[#allocation3 + $0x68] sm:$0xff] %v1134
  %1167 = vst [vmem:[#allocation3 + $0x70] sm:$0xff] %v1135
  %1168 = vst [vmem:[#allocation3 + $0x78] sm:$0xff] %v1136
  %1169 = vst [vmem:[#allocation3 + $0x80] sm:$0xff] %v1137
  %1170 = vst [vmem:[#allocation3 + $0x88] sm:$0xff] %v1138
  %1171 = vst [vmem:[#allocation3 + $0x90] sm:$0xff] %v1139
  %1172 = vst [vmem:[#allocation3 + $0x98] sm:$0xff] %v1140
  %1173 = vst [vmem:[#allocation3 + $0xa0] sm:$0xff] %v1141
  %1174 = vst [vmem:[#allocation3 + $0xa8] sm:$0xff] %v1142
  %1175 = vst [vmem:[#allocation3 + $0xb0] sm:$0xff] %v1143
  %1176 = vst [vmem:[#allocation3 + $0xb8] sm:$0xff] %v1144
  %1177 = vst [vmem:[#allocation3 + $0xc0] sm:$0xff] %v1145
  %1178 = vst [vmem:[#allocation3 + $0xc8] sm:$0xff] %v1146
  %1179 = vst [vmem:[#allocation3 + $0xd0] sm:$0xff] %v1147
  %1180 = vst [vmem:[#allocation3 + $0xd8] sm:$0xff] %v1148
  %1181 = vst [vmem:[#allocation3 + $0xe0] sm:$0xff] %v1149
  %1182 = vst [vmem:[#allocation3 + $0xe8] sm:$0xff] %v1150
  %1183 = vst [vmem:[#allocation3 + $0xf0] sm:$0xff] %v1151
  %1184 = vst [vmem:[#allocation3 + $0xf8] sm:$0xff] %v1152
  // Predicated region
  $region34: #{_lambda_.5} parent=0 // pred_check
    %p1185 = pneg %p27
  $region35: #{_lambda_.5} parent=0 // pred_check_branch
    %1187 = sbr.rel (%p1185) target = $region37
  $region36: #{_lambda_.5} parent=0 // pred_region
    %v1188 = vld [vmem:[#allocation2] sm:$0xff]
    %v1189 = vld [vmem:[#allocation2 + $0x8] sm:$0xff]
    %v1190 = vld [vmem:[#allocation2 + $0x10] sm:$0xff]
    %v1191 = vld [vmem:[#allocation2 + $0x18] sm:$0xff]
    %v1192 = vld [vmem:[#allocation2 + $0x20] sm:$0xff]
    %v1193 = vld [vmem:[#allocation2 + $0x28] sm:$0xff]
    %v1194 = vld [vmem:[#allocation2 + $0x30] sm:$0xff]
    %v1195 = vld [vmem:[#allocation2 + $0x38] sm:$0xff]
    %v1196 = vld [vmem:[#allocation2 + $0x40] sm:$0xff]
    %v1197 = vld [vmem:[#allocation2 + $0x48] sm:$0xff]
    %v1198 = vld [vmem:[#allocation2 + $0x50] sm:$0xff]
    %v1199 = vld [vmem:[#allocation2 + $0x58] sm:$0xff]
    %v1200 = vld [vmem:[#allocation2 + $0x60] sm:$0xff]
    %v1201 = vld [vmem:[#allocation2 + $0x68] sm:$0xff]
    %v1202 = vld [vmem:[#allocation2 + $0x70] sm:$0xff]
    %v1203 = vld [vmem:[#allocation2 + $0x78] sm:$0xff]
    %v1204 = vld [vmem:[#allocation2 + $0x80] sm:$0xff]
    %v1205 = vld [vmem:[#allocation2 + $0x88] sm:$0xff]
    %v1206 = vld [vmem:[#allocation2 + $0x90] sm:$0xff]
    %v1207 = vld [vmem:[#allocation2 + $0x98] sm:$0xff]
    %v1208 = vld [vmem:[#allocation2 + $0xa0] sm:$0xff]
    %v1209 = vld [vmem:[#allocation2 + $0xa8] sm:$0xff]
    %v1210 = vld [vmem:[#allocation2 + $0xb0] sm:$0xff]
    %v1211 = vld [vmem:[#allocation2 + $0xb8] sm:$0xff]
    %v1212 = vld [vmem:[#allocation2 + $0xc0] sm:$0xff]
    %v1213 = vld [vmem:[#allocation2 + $0xc8] sm:$0xff]
    %v1214 = vld [vmem:[#allocation2 + $0xd0] sm:$0xff]
    %v1215 = vld [vmem:[#allocation2 + $0xd8] sm:$0xff]
    %v1216 = vld [vmem:[#allocation2 + $0xe0] sm:$0xff]
    %v1217 = vld [vmem:[#allocation2 + $0xe8] sm:$0xff]
    %v1218 = vld [vmem:[#allocation2 + $0xf0] sm:$0xff]
    %v1219 = vld [vmem:[#allocation2 + $0xf8] sm:$0xff]
    %v1220 = vmax.f32 %v1188, 0.0
    %v1221 = vmax.f32 %v1189, 0.0
    %v1222 = vmax.f32 %v1190, 0.0
    %v1223 = vmax.f32 %v1191, 0.0
    %v1224 = vmax.f32 %v1192, 0.0
    %v1225 = vmax.f32 %v1193, 0.0
    %v1226 = vmax.f32 %v1194, 0.0
    %v1227 = vmax.f32 %v1195, 0.0
    %v1228 = vmax.f32 %v1196, 0.0
    %v1229 = vmax.f32 %v1197, 0.0
    %v1230 = vmax.f32 %v1198, 0.0
    %v1231 = vmax.f32 %v1199, 0.0
    %v1232 = vmax.f32 %v1200, 0.0
    %v1233 = vmax.f32 %v1201, 0.0
    %v1234 = vmax.f32 %v1202, 0.0
    %v1235 = vmax.f32 %v1203, 0.0
    %v1236 = vmax.f32 %v1204, 0.0
    %v1237 = vmax.f32 %v1205, 0.0
    %v1238 = vmax.f32 %v1206, 0.0
    %v1239 = vmax.f32 %v1207, 0.0
    %v1240 = vmax.f32 %v1208, 0.0
    %v1241 = vmax.f32 %v1209, 0.0
    %v1242 = vmax.f32 %v1210, 0.0
    %v1243 = vmax.f32 %v1211, 0.0
    %v1244 = vmax.f32 %v1212, 0.0
    %v1245 = vmax.f32 %v1213, 0.0
    %v1246 = vmax.f32 %v1214, 0.0
    %v1247 = vmax.f32 %v1215, 0.0
    %v1248 = vmax.f32 %v1216, 0.0
    %v1249 = vmax.f32 %v1217, 0.0
    %v1250 = vmax.f32 %v1218, 0.0
    %v1251 = vmax.f32 %v1219, 0.0
    %v1252 = vpack.c.bf16 %v1221, %v1220
    %v1253 = vpack.c.bf16 %v1223, %v1222
    %v1254 = vpack.c.bf16 %v1225, %v1224
    %v1255 = vpack.c.bf16 %v1227, %v1226
    %v1256 = vpack.c.bf16 %v1229, %v1228
    %v1257 = vpack.c.bf16 %v1231, %v1230
    %v1258 = vpack.c.bf16 %v1233, %v1232
    %v1259 = vpack.c.bf16 %v1235, %v1234
    %v1260 = vpack.c.bf16 %v1237, %v1236
    %v1261 = vpack.c.bf16 %v1239, %v1238
    %v1262 = vpack.c.bf16 %v1241, %v1240
    %v1263 = vpack.c.bf16 %v1243, %v1242
    %v1264 = vpack.c.bf16 %v1245, %v1244
    %v1265 = vpack.c.bf16 %v1247, %v1246
    %v1266 = vpack.c.bf16 %v1249, %v1248
    %v1267 = vpack.c.bf16 %v1251, %v1250
    %v1268 = vld [vmem:[#allocation3] sm:$0xff]
    %v1269 = vld [vmem:[#allocation3 + $0x8] sm:$0xff]
    %v1270 = vld [vmem:[#allocation3 + $0x10] sm:$0xff]
    %v1271 = vld [vmem:[#allocation3 + $0x18] sm:$0xff]
    %v1272 = vld [vmem:[#allocation3 + $0x20] sm:$0xff]
    %v1273 = vld [vmem:[#allocation3 + $0x28] sm:$0xff]
    %v1274 = vld [vmem:[#allocation3 + $0x30] sm:$0xff]
    %v1275 = vld [vmem:[#allocation3 + $0x38] sm:$0xff]
    %v1276 = vld [vmem:[#allocation3 + $0x40] sm:$0xff]
    %v1277 = vld [vmem:[#allocation3 + $0x48] sm:$0xff]
    %v1278 = vld [vmem:[#allocation3 + $0x50] sm:$0xff]
    %v1279 = vld [vmem:[#allocation3 + $0x58] sm:$0xff]
    %v1280 = vld [vmem:[#allocation3 + $0x60] sm:$0xff]
    %v1281 = vld [vmem:[#allocation3 + $0x68] sm:$0xff]
    %v1282 = vld [vmem:[#allocation3 + $0x70] sm:$0xff]
    %v1283 = vld [vmem:[#allocation3 + $0x78] sm:$0xff]
    %v1284 = vld [vmem:[#allocation3 + $0x80] sm:$0xff]
    %v1285 = vld [vmem:[#allocation3 + $0x88] sm:$0xff]
    %v1286 = vld [vmem:[#allocation3 + $0x90] sm:$0xff]
    %v1287 = vld [vmem:[#allocation3 + $0x98] sm:$0xff]
    %v1288 = vld [vmem:[#allocation3 + $0xa0] sm:$0xff]
    %v1289 = vld [vmem:[#allocation3 + $0xa8] sm:$0xff]
    %v1290 = vld [vmem:[#allocation3 + $0xb0] sm:$0xff]
    %v1291 = vld [vmem:[#allocation3 + $0xb8] sm:$0xff]
    %v1292 = vld [vmem:[#allocation3 + $0xc0] sm:$0xff]
    %v1293 = vld [vmem:[#allocation3 + $0xc8] sm:$0xff]
    %v1294 = vld [vmem:[#allocation3 + $0xd0] sm:$0xff]
    %v1295 = vld [vmem:[#allocation3 + $0xd8] sm:$0xff]
    %v1296 = vld [vmem:[#allocation3 + $0xe0] sm:$0xff]
    %v1297 = vld [vmem:[#allocation3 + $0xe8] sm:$0xff]
    %v1298 = vld [vmem:[#allocation3 + $0xf0] sm:$0xff]
    %v1299 = vld [vmem:[#allocation3 + $0xf8] sm:$0xff]
    %v1300 = vmax.f32 %v1268, 0.0
    %v1301 = vmax.f32 %v1269, 0.0
    %v1302 = vmax.f32 %v1270, 0.0
    %v1303 = vmax.f32 %v1271, 0.0
    %v1304 = vmax.f32 %v1272, 0.0
    %v1305 = vmax.f32 %v1273, 0.0
    %v1306 = vmax.f32 %v1274, 0.0
    %v1307 = vmax.f32 %v1275, 0.0
    %v1308 = vmax.f32 %v1276, 0.0
    %v1309 = vmax.f32 %v1277, 0.0
    %v1310 = vmax.f32 %v1278, 0.0
    %v1311 = vmax.f32 %v1279, 0.0
    %v1312 = vmax.f32 %v1280, 0.0
    %v1313 = vmax.f32 %v1281, 0.0
    %v1314 = vmax.f32 %v1282, 0.0
    %v1315 = vmax.f32 %v1283, 0.0
    %v1316 = vmax.f32 %v1284, 0.0
    %v1317 = vmax.f32 %v1285, 0.0
    %v1318 = vmax.f32 %v1286, 0.0
    %v1319 = vmax.f32 %v1287, 0.0
    %v1320 = vmax.f32 %v1288, 0.0
    %v1321 = vmax.f32 %v1289, 0.0
    %v1322 = vmax.f32 %v1290, 0.0
    %v1323 = vmax.f32 %v1291, 0.0
    %v1324 = vmax.f32 %v1292, 0.0
    %v1325 = vmax.f32 %v1293, 0.0
    %v1326 = vmax.f32 %v1294, 0.0
    %v1327 = vmax.f32 %v1295, 0.0
    %v1328 = vmax.f32 %v1296, 0.0
    %v1329 = vmax.f32 %v1297, 0.0
    %v1330 = vmax.f32 %v1298, 0.0
    %v1331 = vmax.f32 %v1299, 0.0
    %v1332 = vpack.c.bf16 %v1301, %v1300
    %v1333 = vpack.c.bf16 %v1303, %v1302
    %v1334 = vpack.c.bf16 %v1305, %v1304
    %v1335 = vpack.c.bf16 %v1307, %v1306
    %v1336 = vpack.c.bf16 %v1309, %v1308
    %v1337 = vpack.c.bf16 %v1311, %v1310
    %v1338 = vpack.c.bf16 %v1313, %v1312
    %v1339 = vpack.c.bf16 %v1315, %v1314
    %v1340 = vpack.c.bf16 %v1317, %v1316
    %v1341 = vpack.c.bf16 %v1319, %v1318
    %v1342 = vpack.c.bf16 %v1321, %v1320
    %v1343 = vpack.c.bf16 %v1323, %v1322
    %v1344 = vpack.c.bf16 %v1325, %v1324
    %v1345 = vpack.c.bf16 %v1327, %v1326
    %v1346 = vpack.c.bf16 %v1329, %v1328
    %v1347 = vpack.c.bf16 %v1331, %v1330
    %v1348 = vld [vmem:[%s3] sm:$0xf]
    %v1349 = vld [vmem:[%s3 + $0x4] sm:$0xf]
    %v1350 = vld [vmem:[%s3 + $0x8] sm:$0xf]
    %v1351 = vld [vmem:[%s3 + $0xc] sm:$0xf]
    %v1352 = vld [vmem:[%s3 + $0x10] sm:$0xf]
    %v1353 = vld [vmem:[%s3 + $0x14] sm:$0xf]
    %v1354 = vld [vmem:[%s3 + $0x18] sm:$0xf]
    %v1355 = vld [vmem:[%s3 + $0x1c] sm:$0xf]
    %v1356 = vld [vmem:[%s3 + $0x20] sm:$0xf]
    %v1357 = vld [vmem:[%s3 + $0x24] sm:$0xf]
    %v1358 = vld [vmem:[%s3 + $0x28] sm:$0xf]
    %v1359 = vld [vmem:[%s3 + $0x2c] sm:$0xf]
    %v1360 = vld [vmem:[%s3 + $0x30] sm:$0xf]
    %v1361 = vld [vmem:[%s3 + $0x34] sm:$0xf]
    %v1362 = vld [vmem:[%s3 + $0x38] sm:$0xf]
    %v1363 = vld [vmem:[%s3 + $0x3c] sm:$0xf]
    %v1364 = vld [vmem:[%s4] sm:$0x1]
    %v1366 = vlaneseq
    %v1367 = vshrl.u32 %v1366, 7
    %v1368 = vsub.s32 0, %v1367
    %v1369 = vrot.slane %v1364, %v1368
    %v1387 = vunpack.c.l.b16 %v1348
    %v1388 = vunpack.c.l.b16 %v1349
    %v1389 = vunpack.c.l.b16 %v1350
    %v1390 = vunpack.c.l.b16 %v1351
    %v1391 = vunpack.c.l.b16 %v1352
    %v1392 = vunpack.c.l.b16 %v1353
    %v1393 = vunpack.c.l.b16 %v1354
    %v1394 = vunpack.c.l.b16 %v1355
    %v1395 = vunpack.c.l.b16 %v1356
    %v1396 = vunpack.c.l.b16 %v1357
    %v1397 = vunpack.c.l.b16 %v1358
    %v1398 = vunpack.c.l.b16 %v1359
    %v1399 = vunpack.c.l.b16 %v1360
    %v1400 = vunpack.c.l.b16 %v1361
    %v1401 = vunpack.c.l.b16 %v1362
    %v1402 = vunpack.c.l.b16 %v1363
    %v1403 = vpack.c.b16 %v1388, %v1387
    %v1404 = vpack.c.b16 %v1390, %v1389
    %v1405 = vpack.c.b16 %v1392, %v1391
    %v1406 = vpack.c.b16 %v1394, %v1393
    %v1407 = vpack.c.b16 %v1396, %v1395
    %v1408 = vpack.c.b16 %v1398, %v1397
    %v1409 = vpack.c.b16 %v1400, %v1399
    %v1410 = vpack.c.b16 %v1402, %v1401
    %1419 = vmatprep.subr.bf16.mxu0 0
    %1420 = vmatpush1.bf16.msra.mxu0 %v1403
    %1421 = vmatprep.subr.bf16.mxu0 0
    %1422 = vmatpush1.bf16.msra.mxu0 %v1404
    %1423 = vmatprep.subr.bf16.mxu0 0
    %1424 = vmatpush1.bf16.msra.mxu0 %v1405
    %1425 = vmatprep.subr.bf16.mxu0 0
    %1426 = vmatpush1.bf16.msra.mxu0 %v1406
    %1427 = vmatprep.subr.bf16.mxu0 0
    %1428 = vmatpush1.bf16.msra.mxu0 %v1407
    %1429 = vmatprep.subr.bf16.mxu0 0
    %1430 = vmatpush1.bf16.msra.mxu0 %v1408
    %1431 = vmatprep.subr.bf16.mxu0 0
    %1432 = vmatpush1.bf16.msra.mxu0 %v1409
    %1433 = vmatprep.subr.bf16.mxu0 0
    %1434 = vmatpush1.bf16.msra.mxu0 %v1410
    %1435 = vmatprep.subr.bf16.mxu0 0
    %1436 = vmatpush1.bf16.msra.mxu0 0
    %1437 = vmatprep.subr.bf16.mxu0 0
    %1438 = vmatpush1.bf16.msra.mxu0 0
    %1439 = vmatprep.subr.bf16.mxu0 0
    %1440 = vmatpush1.bf16.msra.mxu0 0
    %1441 = vmatprep.subr.bf16.mxu0 0
    %1442 = vmatpush1.bf16.msra.mxu0 0
    %1443 = vmatprep.subr.bf16.mxu0 0
    %1444 = vmatpush1.bf16.msra.mxu0 0
    %1445 = vmatprep.subr.bf16.mxu0 0
    %1446 = vmatpush1.bf16.msra.mxu0 0
    %1447 = vmatprep.subr.bf16.mxu0 0
    %1448 = vmatpush1.bf16.msra.mxu0 0
    %1449 = vmatprep.subr.bf16.mxu0 0
    %1450 = vmatpush1.bf16.msra.mxu0 0
    %1451 = vmatprep.mubr.bf16.mxu0 0
    %1452 = vmatmul.mubr.bf16.gmra.mrb[0].mxu0 %v1332
    %v1453 = vpop.f32.mrb[0].mxu0
    %v1454 = vadd.f32 %v1369, %v1453
    %v1455 = vpop.f32.mrb[0].mxu0
    %v1456 = vpop.f32.mrb[0].mxu0
    %v1457 = vadd.f32 %v1369, %v1456
    %v1458 = vpop.f32.mrb[0].mxu0
    %1459 = vmatprep.mubr.bf16.mxu0 0
    %1460 = vmatmul.mubr.bf16.gmra.mrb[0].mxu0 %v1333
    %v1461 = vpop.f32.mrb[0].mxu0
    %v1462 = vadd.f32 %v1369, %v1461
    %v1463 = vpop.f32.mrb[0].mxu0
    %v1464 = vpop.f32.mrb[0].mxu0
    %v1465 = vadd.f32 %v1369, %v1464
    %v1466 = vpop.f32.mrb[0].mxu0
    %1467 = vmatprep.mubr.bf16.mxu0 0
    %1468 = vmatmul.mubr.bf16.gmra.mrb[0].mxu0 %v1334
    %v1469 = vpop.f32.mrb[0].mxu0
    %v1470 = vadd.f32 %v1369, %v1469
    %v1471 = vpop.f32.mrb[0].mxu0
    %v1472 = vpop.f32.mrb[0].mxu0
    %v1473 = vadd.f32 %v1369, %v1472
    %v1474 = vpop.f32.mrb[0].mxu0
    %1475 = vmatprep.mubr.bf16.mxu0 0
    %1476 = vmatmul.mubr.bf16.gmra.mrb[0].mxu0 %v1335
    %v1477 = vpop.f32.mrb[0].mxu0
    %v1478 = vadd.f32 %v1369, %v1477
    %v1479 = vpop.f32.mrb[0].mxu0
    %v1480 = vpop.f32.mrb[0].mxu0
    %v1481 = vadd.f32 %v1369, %v1480
    %v1482 = vpop.f32.mrb[0].mxu0
    %1483 = vmatprep.mubr.bf16.mxu0 0
    %1484 = vmatmul.mubr.bf16.gmra.mrb[0].mxu0 %v1336
    %v1485 = vpop.f32.mrb[0].mxu0
    %v1486 = vadd.f32 %v1369, %v1485
    %v1487 = vpop.f32.mrb[0].mxu0
    %v1488 = vpop.f32.mrb[0].mxu0
    %v1489 = vadd.f32 %v1369, %v1488
    %v1490 = vpop.f32.mrb[0].mxu0
    %1491 = vmatprep.mubr.bf16.mxu0 0
    %1492 = vmatmul.mubr.bf16.gmra.mrb[0].mxu0 %v1337
    %v1493 = vpop.f32.mrb[0].mxu0
    %v1494 = vadd.f32 %v1369, %v1493
    %v1495 = vpop.f32.mrb[0].mxu0
    %v1496 = vpop.f32.mrb[0].mxu0
    %v1497 = vadd.f32 %v1369, %v1496
    %v1498 = vpop.f32.mrb[0].mxu0
    %1499 = vmatprep.mubr.bf16.mxu0 0
    %1500 = vmatmul.mubr.bf16.gmra.mrb[0].mxu0 %v1338
    %v1501 = vpop.f32.mrb[0].mxu0
    %v1502 = vadd.f32 %v1369, %v1501
    %v1503 = vpop.f32.mrb[0].mxu0
    %v1504 = vpop.f32.mrb[0].mxu0
    %v1505 = vadd.f32 %v1369, %v1504
    %v1506 = vpop.f32.mrb[0].mxu0
    %1507 = vmatprep.mubr.bf16.mxu0 0
    %1508 = vmatmul.mubr.bf16.gmra.mrb[0].mxu0 %v1339
    %v1509 = vpop.f32.mrb[0].mxu0
    %v1510 = vadd.f32 %v1369, %v1509
    %v1511 = vpop.f32.mrb[0].mxu0
    %v1512 = vpop.f32.mrb[0].mxu0
    %v1513 = vadd.f32 %v1369, %v1512
    %v1514 = vpop.f32.mrb[0].mxu0
    %1515 = vmatprep.mubr.bf16.mxu0 0
    %1516 = vmatmul.mubr.bf16.gmra.mrb[0].mxu0 %v1340
    %v1517 = vpop.f32.mrb[0].mxu0
    %v1518 = vadd.f32 %v1369, %v1517
    %v1519 = vpop.f32.mrb[0].mxu0
    %v1520 = vpop.f32.mrb[0].mxu0
    %v1521 = vadd.f32 %v1369, %v1520
    %v1522 = vpop.f32.mrb[0].mxu0
    %1523 = vmatprep.mubr.bf16.mxu0 0
    %1524 = vmatmul.mubr.bf16.gmra.mrb[0].mxu0 %v1341
    %v1525 = vpop.f32.mrb[0].mxu0
    %v1526 = vadd.f32 %v1369, %v1525
    %v1527 = vpop.f32.mrb[0].mxu0
    %v1528 = vpop.f32.mrb[0].mxu0
    %v1529 = vadd.f32 %v1369, %v1528
    %v1530 = vpop.f32.mrb[0].mxu0
    %1531 = vmatprep.mubr.bf16.mxu0 0
    %1532 = vmatmul.mubr.bf16.gmra.mrb[0].mxu0 %v1342
    %v1533 = vpop.f32.mrb[0].mxu0
    %v1534 = vadd.f32 %v1369, %v1533
    %v1535 = vpop.f32.mrb[0].mxu0
    %v1536 = vpop.f32.mrb[0].mxu0
    %v1537 = vadd.f32 %v1369, %v1536
    %v1538 = vpop.f32.mrb[0].mxu0
    %1539 = vmatprep.mubr.bf16.mxu0 0
    %1540 = vmatmul.mubr.bf16.gmra.mrb[0].mxu0 %v1343
    %v1541 = vpop.f32.mrb[0].mxu0
    %v1542 = vadd.f32 %v1369, %v1541
    %v1543 = vpop.f32.mrb[0].mxu0
    %v1544 = vpop.f32.mrb[0].mxu0
    %v1545 = vadd.f32 %v1369, %v1544
    %v1546 = vpop.f32.mrb[0].mxu0
    %1547 = vmatprep.mubr.bf16.mxu0 0
    %1548 = vmatmul.mubr.bf16.gmra.mrb[0].mxu0 %v1344
    %v1549 = vpop.f32.mrb[0].mxu0
    %v1550 = vadd.f32 %v1369, %v1549
    %v1551 = vpop.f32.mrb[0].mxu0
    %v1552 = vpop.f32.mrb[0].mxu0
    %v1553 = vadd.f32 %v1369, %v1552
    %v1554 = vpop.f32.mrb[0].mxu0
    %1555 = vmatprep.mubr.bf16.mxu0 0
    %1556 = vmatmul.mubr.bf16.gmra.mrb[0].mxu0 %v1345
    %v1557 = vpop.f32.mrb[0].mxu0
    %v1558 = vadd.f32 %v1369, %v1557
    %v1559 = vpop.f32.mrb[0].mxu0
    %v1560 = vpop.f32.mrb[0].mxu0
    %v1561 = vadd.f32 %v1369, %v1560
    %v1562 = vpop.f32.mrb[0].mxu0
    %1563 = vmatprep.mubr.bf16.mxu0 0
    %1564 = vmatmul.mubr.bf16.gmra.mrb[0].mxu0 %v1346
    %v1565 = vpop.f32.mrb[0].mxu0
    %v1566 = vadd.f32 %v1369, %v1565
    %v1567 = vpop.f32.mrb[0].mxu0
    %v1568 = vpop.f32.mrb[0].mxu0
    %v1569 = vadd.f32 %v1369, %v1568
    %v1570 = vpop.f32.mrb[0].mxu0
    %1571 = vmatprep.mubr.bf16.mxu0 0
    %1572 = vmatmul.mubr.bf16.gmra.mrb[0].mxu0 %v1347
    %v1573 = vpop.f32.mrb[0].mxu0
    %v1574 = vadd.f32 %v1369, %v1573
    %v1575 = vpop.f32.mrb[0].mxu0
    %v1576 = vpop.f32.mrb[0].mxu0
    %v1577 = vadd.f32 %v1369, %v1576
    %v1578 = vpop.f32.mrb[0].mxu0
    %1579 = vdwg.mxu0
    %v1580 = vld [vmem:[%s5] sm:$0xf]
    %v1581 = vld [vmem:[%s5 + $0x4] sm:$0xf]
    %v1582 = vld [vmem:[%s5 + $0x8] sm:$0xf]
    %v1583 = vld [vmem:[%s5 + $0xc] sm:$0xf]
    %v1584 = vld [vmem:[%s5 + $0x10] sm:$0xf]
    %v1585 = vld [vmem:[%s5 + $0x14] sm:$0xf]
    %v1586 = vld [vmem:[%s5 + $0x18] sm:$0xf]
    %v1587 = vld [vmem:[%s5 + $0x1c] sm:$0xf]
    %v1588 = vld [vmem:[%s5 + $0x20] sm:$0xf]
    %v1589 = vld [vmem:[%s5 + $0x24] sm:$0xf]
    %v1590 = vld [vmem:[%s5 + $0x28] sm:$0xf]
    %v1591 = vld [vmem:[%s5 + $0x2c] sm:$0xf]
    %v1592 = vld [vmem:[%s5 + $0x30] sm:$0xf]
    %v1593 = vld [vmem:[%s5 + $0x34] sm:$0xf]
    %v1594 = vld [vmem:[%s5 + $0x38] sm:$0xf]
    %v1595 = vld [vmem:[%s5 + $0x3c] sm:$0xf]
    %v1596 = vld [vmem:[%s6] sm:$0x1]
    %v1598 = vlaneseq
    %v1599 = vshrl.u32 %v1598, 7
    %v1600 = vsub.s32 0, %v1599
    %v1601 = vrot.slane %v1596, %v1600
    %v1619 = vunpack.c.l.b16 %v1580
    %v1620 = vunpack.c.l.b16 %v1581
    %v1621 = vunpack.c.l.b16 %v1582
    %v1622 = vunpack.c.l.b16 %v1583
    %v1623 = vunpack.c.l.b16 %v1584
    %v1624 = vunpack.c.l.b16 %v1585
    %v1625 = vunpack.c.l.b16 %v1586
    %v1626 = vunpack.c.l.b16 %v1587
    %v1627 = vunpack.c.l.b16 %v1588
    %v1628 = vunpack.c.l.b16 %v1589
    %v1629 = vunpack.c.l.b16 %v1590
    %v1630 = vunpack.c.l.b16 %v1591
    %v1631 = vunpack.c.l.b16 %v1592
    %v1632 = vunpack.c.l.b16 %v1593
    %v1633 = vunpack.c.l.b16 %v1594
    %v1634 = vunpack.c.l.b16 %v1595
    %v1635 = vpack.c.b16 %v1620, %v1619
    %v1636 = vpack.c.b16 %v1622, %v1621
    %v1637 = vpack.c.b16 %v1624, %v1623
    %v1638 = vpack.c.b16 %v1626, %v1625
    %v1639 = vpack.c.b16 %v1628, %v1627
    %v1640 = vpack.c.b16 %v1630, %v1629
    %v1641 = vpack.c.b16 %v1632, %v1631
    %v1642 = vpack.c.b16 %v1634, %v1633
    %1651 = vmatprep.subr.bf16.mxu0 0
    %1652 = vmatpush1.bf16.msra.mxu0 %v1635
    %1653 = vmatprep.subr.bf16.mxu0 0
    %1654 = vmatpush1.bf16.msra.mxu0 %v1636
    %1655 = vmatprep.subr.bf16.mxu0 0
    %1656 = vmatpush1.bf16.msra.mxu0 %v1637
    %1657 = vmatprep.subr.bf16.mxu0 0
    %1658 = vmatpush1.bf16.msra.mxu0 %v1638
    %1659 = vmatprep.subr.bf16.mxu0 0
    %1660 = vmatpush1.bf16.msra.mxu0 %v1639
    %1661 = vmatprep.subr.bf16.mxu0 0
    %1662 = vmatpush1.bf16.msra.mxu0 %v1640
    %1663 = vmatprep.subr.bf16.mxu0 0
    %1664 = vmatpush1.bf16.msra.mxu0 %v1641
    %1665 = vmatprep.subr.bf16.mxu0 0
    %1666 = vmatpush1.bf16.msra.mxu0 %v1642
    %1667 = vmatprep.subr.bf16.mxu0 0
    %1668 = vmatpush1.bf16.msra.mxu0 0
    %1669 = vmatprep.subr.bf16.mxu0 0
    %1670 = vmatpush1.bf16.msra.mxu0 0
    %1671 = vmatprep.subr.bf16.mxu0 0
    %1672 = vmatpush1.bf16.msra.mxu0 0
    %1673 = vmatprep.subr.bf16.mxu0 0
    %1674 = vmatpush1.bf16.msra.mxu0 0
    %1675 = vmatprep.subr.bf16.mxu0 0
    %1676 = vmatpush1.bf16.msra.mxu0 0
    %1677 = vmatprep.subr.bf16.mxu0 0
    %1678 = vmatpush1.bf16.msra.mxu0 0
    %1679 = vmatprep.subr.bf16.mxu0 0
    %1680 = vmatpush1.bf16.msra.mxu0 0
    %1681 = vmatprep.subr.bf16.mxu0 0
    %1682 = vmatpush1.bf16.msra.mxu0 0
    %1683 = vmatprep.mubr.bf16.mxu0 0
    %1684 = vmatmul.mubr.bf16.gmra.mrb[0].mxu0 %v1252
    %v1685 = vpop.f32.mrb[0].mxu0
    %v1686 = vadd.f32 %v1601, %v1685
    %v1687 = vpop.f32.mrb[0].mxu0
    %v1688 = vpop.f32.mrb[0].mxu0
    %v1689 = vadd.f32 %v1601, %v1688
    %v1690 = vpop.f32.mrb[0].mxu0
    %1691 = vmatprep.mubr.bf16.mxu0 0
    %1692 = vmatmul.mubr.bf16.gmra.mrb[0].mxu0 %v1253
    %v1693 = vpop.f32.mrb[0].mxu0
    %v1694 = vadd.f32 %v1601, %v1693
    %v1695 = vpop.f32.mrb[0].mxu0
    %v1696 = vpop.f32.mrb[0].mxu0
    %v1697 = vadd.f32 %v1601, %v1696
    %v1698 = vpop.f32.mrb[0].mxu0
    %1699 = vmatprep.mubr.bf16.mxu0 0
    %1700 = vmatmul.mubr.bf16.gmra.mrb[0].mxu0 %v1254
    %v1701 = vpop.f32.mrb[0].mxu0
    %v1702 = vadd.f32 %v1601, %v1701
    %v1703 = vpop.f32.mrb[0].mxu0
    %v1704 = vpop.f32.mrb[0].mxu0
    %v1705 = vadd.f32 %v1601, %v1704
    %v1706 = vpop.f32.mrb[0].mxu0
    %1707 = vmatprep.mubr.bf16.mxu0 0
    %1708 = vmatmul.mubr.bf16.gmra.mrb[0].mxu0 %v1255
    %v1709 = vpop.f32.mrb[0].mxu0
    %v1710 = vadd.f32 %v1601, %v1709
    %v1711 = vpop.f32.mrb[0].mxu0
    %v1712 = vpop.f32.mrb[0].mxu0
    %v1713 = vadd.f32 %v1601, %v1712
    %v1714 = vpop.f32.mrb[0].mxu0
    %1715 = vmatprep.mubr.bf16.mxu0 0
    %1716 = vmatmul.mubr.bf16.gmra.mrb[0].mxu0 %v1256
    %v1717 = vpop.f32.mrb[0].mxu0
    %v1718 = vadd.f32 %v1601, %v1717
    %v1719 = vpop.f32.mrb[0].mxu0
    %v1720 = vpop.f32.mrb[0].mxu0
    %v1721 = vadd.f32 %v1601, %v1720
    %v1722 = vpop.f32.mrb[0].mxu0
    %1723 = vmatprep.mubr.bf16.mxu0 0
    %1724 = vmatmul.mubr.bf16.gmra.mrb[0].mxu0 %v1257
    %v1725 = vpop.f32.mrb[0].mxu0
    %v1726 = vadd.f32 %v1601, %v1725
    %v1727 = vpop.f32.mrb[0].mxu0
    %v1728 = vpop.f32.mrb[0].mxu0
    %v1729 = vadd.f32 %v1601, %v1728
    %v1730 = vpop.f32.mrb[0].mxu0
    %1731 = vmatprep.mubr.bf16.mxu0 0
    %1732 = vmatmul.mubr.bf16.gmra.mrb[0].mxu0 %v1258
    %v1733 = vpop.f32.mrb[0].mxu0
    %v1734 = vadd.f32 %v1601, %v1733
    %v1735 = vpop.f32.mrb[0].mxu0
    %v1736 = vpop.f32.mrb[0].mxu0
    %v1737 = vadd.f32 %v1601, %v1736
    %v1738 = vpop.f32.mrb[0].mxu0
    %1739 = vmatprep.mubr.bf16.mxu0 0
    %1740 = vmatmul.mubr.bf16.gmra.mrb[0].mxu0 %v1259
    %v1741 = vpop.f32.mrb[0].mxu0
    %v1742 = vadd.f32 %v1601, %v1741
    %v1743 = vpop.f32.mrb[0].mxu0
    %v1744 = vpop.f32.mrb[0].mxu0
    %v1745 = vadd.f32 %v1601, %v1744
    %v1746 = vpop.f32.mrb[0].mxu0
    %1747 = vmatprep.mubr.bf16.mxu0 0
    %1748 = vmatmul.mubr.bf16.gmra.mrb[0].mxu0 %v1260
    %v1749 = vpop.f32.mrb[0].mxu0
    %v1750 = vadd.f32 %v1601, %v1749
    %v1751 = vpop.f32.mrb[0].mxu0
    %v1752 = vpop.f32.mrb[0].mxu0
    %v1753 = vadd.f32 %v1601, %v1752
    %v1754 = vpop.f32.mrb[0].mxu0
    %1755 = vmatprep.mubr.bf16.mxu0 0
    %1756 = vmatmul.mubr.bf16.gmra.mrb[0].mxu0 %v1261
    %v1757 = vpop.f32.mrb[0].mxu0
    %v1758 = vadd.f32 %v1601, %v1757
    %v1759 = vpop.f32.mrb[0].mxu0
    %v1760 = vpop.f32.mrb[0].mxu0
    %v1761 = vadd.f32 %v1601, %v1760
    %v1762 = vpop.f32.mrb[0].mxu0
    %1763 = vmatprep.mubr.bf16.mxu0 0
    %1764 = vmatmul.mubr.bf16.gmra.mrb[0].mxu0 %v1262
    %v1765 = vpop.f32.mrb[0].mxu0
    %v1766 = vadd.f32 %v1601, %v1765
    %v1767 = vpop.f32.mrb[0].mxu0
    %v1768 = vpop.f32.mrb[0].mxu0
    %v1769 = vadd.f32 %v1601, %v1768
    %v1770 = vpop.f32.mrb[0].mxu0
    %1771 = vmatprep.mubr.bf16.mxu0 0
    %1772 = vmatmul.mubr.bf16.gmra.mrb[0].mxu0 %v1263
    %v1773 = vpop.f32.mrb[0].mxu0
    %v1774 = vadd.f32 %v1601, %v1773
    %v1775 = vpop.f32.mrb[0].mxu0
    %v1776 = vpop.f32.mrb[0].mxu0
    %v1777 = vadd.f32 %v1601, %v1776
    %v1778 = vpop.f32.mrb[0].mxu0
    %1779 = vmatprep.mubr.bf16.mxu0 0
    %1780 = vmatmul.mubr.bf16.gmra.mrb[0].mxu0 %v1264
    %v1781 = vpop.f32.mrb[0].mxu0
    %v1782 = vadd.f32 %v1601, %v1781
    %v1783 = vpop.f32.mrb[0].mxu0
    %v1784 = vpop.f32.mrb[0].mxu0
    %v1785 = vadd.f32 %v1601, %v1784
    %v1786 = vpop.f32.mrb[0].mxu0
    %1787 = vmatprep.mubr.bf16.mxu0 0
    %1788 = vmatmul.mubr.bf16.gmra.mrb[0].mxu0 %v1265
    %v1789 = vpop.f32.mrb[0].mxu0
    %v1790 = vadd.f32 %v1601, %v1789
    %v1791 = vpop.f32.mrb[0].mxu0
    %v1792 = vpop.f32.mrb[0].mxu0
    %v1793 = vadd.f32 %v1601, %v1792
    %v1794 = vpop.f32.mrb[0].mxu0
    %1795 = vmatprep.mubr.bf16.mxu0 0
    %1796 = vmatmul.mubr.bf16.gmra.mrb[0].mxu0 %v1266
    %v1797 = vpop.f32.mrb[0].mxu0
    %v1798 = vadd.f32 %v1601, %v1797
    %v1799 = vpop.f32.mrb[0].mxu0
    %v1800 = vpop.f32.mrb[0].mxu0
    %v1801 = vadd.f32 %v1601, %v1800
    %v1802 = vpop.f32.mrb[0].mxu0
    %1803 = vmatprep.mubr.bf16.mxu0 0
    %1804 = vmatmul.mubr.bf16.gmra.mrb[0].mxu0 %v1267
    %v1805 = vpop.f32.mrb[0].mxu0
    %v1806 = vadd.f32 %v1601, %v1805
    %v1807 = vpop.f32.mrb[0].mxu0
    %v1808 = vpop.f32.mrb[0].mxu0
    %v1809 = vadd.f32 %v1601, %v1808
    %v1810 = vpop.f32.mrb[0].mxu0
    %1811 = vdwg.mxu0
    %v1812 = vpack.c.bf16 %v1457, %v1454
    %v1813 = vpack.c.bf16 %v1465, %v1462
    %v1814 = vpack.c.bf16 %v1473, %v1470
    %v1815 = vpack.c.bf16 %v1481, %v1478
    %v1816 = vpack.c.bf16 %v1489, %v1486
    %v1817 = vpack.c.bf16 %v1497, %v1494
    %v1818 = vpack.c.bf16 %v1505, %v1502
    %v1819 = vpack.c.bf16 %v1513, %v1510
    %v1820 = vpack.c.bf16 %v1521, %v1518
    %v1821 = vpack.c.bf16 %v1529, %v1526
    %v1822 = vpack.c.bf16 %v1537, %v1534
    %v1823 = vpack.c.bf16 %v1545, %v1542
    %v1824 = vpack.c.bf16 %v1553, %v1550
    %v1825 = vpack.c.bf16 %v1561, %v1558
    %v1826 = vpack.c.bf16 %v1569, %v1566
    %v1827 = vpack.c.bf16 %v1577, %v1574
    %v1844 = vunpack.c.l.b16 %v1812
    %v1845 = vunpack.c.h.b16 %v1812
    %v1846 = vunpack.c.l.b16 %v1813
    %v1847 = vunpack.c.h.b16 %v1813
    %v1848 = vunpack.c.l.b16 %v1814
    %v1849 = vunpack.c.h.b16 %v1814
    %v1850 = vunpack.c.l.b16 %v1815
    %v1851 = vunpack.c.h.b16 %v1815
    %v1852 = vunpack.c.l.b16 %v1816
    %v1853 = vunpack.c.h.b16 %v1816
    %v1854 = vunpack.c.l.b16 %v1817
    %v1855 = vunpack.c.h.b16 %v1817
    %v1856 = vunpack.c.l.b16 %v1818
    %v1857 = vunpack.c.h.b16 %v1818
    %v1858 = vunpack.c.l.b16 %v1819
    %v1859 = vunpack.c.h.b16 %v1819
    %v1860 = vunpack.c.l.b16 %v1820
    %v1861 = vunpack.c.h.b16 %v1820
    %v1862 = vunpack.c.l.b16 %v1821
    %v1863 = vunpack.c.h.b16 %v1821
    %v1864 = vunpack.c.l.b16 %v1822
    %v1865 = vunpack.c.h.b16 %v1822
    %v1866 = vunpack.c.l.b16 %v1823
    %v1867 = vunpack.c.h.b16 %v1823
    %v1868 = vunpack.c.l.b16 %v1824
    %v1869 = vunpack.c.h.b16 %v1824
    %v1870 = vunpack.c.l.b16 %v1825
    %v1871 = vunpack.c.h.b16 %v1825
    %v1872 = vunpack.c.l.b16 %v1826
    %v1873 = vunpack.c.h.b16 %v1826
    %v1874 = vunpack.c.l.b16 %v1827
    %v1875 = vunpack.c.h.b16 %v1827
    %v1876 = vpack.c.b16 %v1844, %v1844
    %v1877 = vpack.c.b16 %v1845, %v1845
    %v1878 = vpack.c.b16 %v1846, %v1846
    %v1879 = vpack.c.b16 %v1847, %v1847
    %v1880 = vpack.c.b16 %v1848, %v1848
    %v1881 = vpack.c.b16 %v1849, %v1849
    %v1882 = vpack.c.b16 %v1850, %v1850
    %v1883 = vpack.c.b16 %v1851, %v1851
    %v1884 = vpack.c.b16 %v1852, %v1852
    %v1885 = vpack.c.b16 %v1853, %v1853
    %v1886 = vpack.c.b16 %v1854, %v1854
    %v1887 = vpack.c.b16 %v1855, %v1855
    %v1888 = vpack.c.b16 %v1856, %v1856
    %v1889 = vpack.c.b16 %v1857, %v1857
    %v1890 = vpack.c.b16 %v1858, %v1858
    %v1891 = vpack.c.b16 %v1859, %v1859
    %v1892 = vpack.c.b16 %v1860, %v1860
    %v1893 = vpack.c.b16 %v1861, %v1861
    %v1894 = vpack.c.b16 %v1862, %v1862
    %v1895 = vpack.c.b16 %v1863, %v1863
    %v1896 = vpack.c.b16 %v1864, %v1864
    %v1897 = vpack.c.b16 %v1865, %v1865
    %v1898 = vpack.c.b16 %v1866, %v1866
    %v1899 = vpack.c.b16 %v1867, %v1867
    %v1900 = vpack.c.b16 %v1868, %v1868
    %v1901 = vpack.c.b16 %v1869, %v1869
    %v1902 = vpack.c.b16 %v1870, %v1870
    %v1903 = vpack.c.b16 %v1871, %v1871
    %v1904 = vpack.c.b16 %v1872, %v1872
    %v1905 = vpack.c.b16 %v1873, %v1873
    %v1906 = vpack.c.b16 %v1874, %v1874
    %v1907 = vpack.c.b16 %v1875, %v1875
    %1940 = vst [vmem:[%s7] sm:$0xf] %v1876
    %1941 = vst [vmem:[%s7 + $0x8] sm:$0xf] %v1877
    %1942 = vst [vmem:[%s7 + $0x10] sm:$0xf] %v1878
    %1943 = vst [vmem:[%s7 + $0x18] sm:$0xf] %v1879
    %1944 = vst [vmem:[%s7 + $0x20] sm:$0xf] %v1880
    %1945 = vst [vmem:[%s7 + $0x28] sm:$0xf] %v1881
    %1946 = vst [vmem:[%s7 + $0x30] sm:$0xf] %v1882
    %1947 = vst [vmem:[%s7 + $0x38] sm:$0xf] %v1883
    %1948 = vst [vmem:[%s7 + $0x40] sm:$0xf] %v1884
    %1949 = vst [vmem:[%s7 + $0x48] sm:$0xf] %v1885
    %1950 = vst [vmem:[%s7 + $0x50] sm:$0xf] %v1886
    %1951 = vst [vmem:[%s7 + $0x58] sm:$0xf] %v1887
    %1952 = vst [vmem:[%s7 + $0x60] sm:$0xf] %v1888
    %1953 = vst [vmem:[%s7 + $0x68] sm:$0xf] %v1889
    %1954 = vst [vmem:[%s7 + $0x70] sm:$0xf] %v1890
    %1955 = vst [vmem:[%s7 + $0x78] sm:$0xf] %v1891
    %1956 = vst [vmem:[%s7 + $0x80] sm:$0xf] %v1892
    %1957 = vst [vmem:[%s7 + $0x88] sm:$0xf] %v1893
    %1958 = vst [vmem:[%s7 + $0x90] sm:$0xf] %v1894
    %1959 = vst [vmem:[%s7 + $0x98] sm:$0xf] %v1895
    %1960 = vst [vmem:[%s7 + $0xa0] sm:$0xf] %v1896
    %1961 = vst [vmem:[%s7 + $0xa8] sm:$0xf] %v1897
    %1962 = vst [vmem:[%s7 + $0xb0] sm:$0xf] %v1898
    %1963 = vst [vmem:[%s7 + $0xb8] sm:$0xf] %v1899
    %1964 = vst [vmem:[%s7 + $0xc0] sm:$0xf] %v1900
    %1965 = vst [vmem:[%s7 + $0xc8] sm:$0xf] %v1901
    %1966 = vst [vmem:[%s7 + $0xd0] sm:$0xf] %v1902
    %1967 = vst [vmem:[%s7 + $0xd8] sm:$0xf] %v1903
    %1968 = vst [vmem:[%s7 + $0xe0] sm:$0xf] %v1904
    %1969 = vst [vmem:[%s7 + $0xe8] sm:$0xf] %v1905
    %1970 = vst [vmem:[%s7 + $0xf0] sm:$0xf] %v1906
    %1971 = vst [vmem:[%s7 + $0xf8] sm:$0xf] %v1907
    %v1972 = vpack.c.bf16 %v1689, %v1686
    %v1973 = vpack.c.bf16 %v1697, %v1694
    %v1974 = vpack.c.bf16 %v1705, %v1702
    %v1975 = vpack.c.bf16 %v1713, %v1710
    %v1976 = vpack.c.bf16 %v1721, %v1718
    %v1977 = vpack.c.bf16 %v1729, %v1726
    %v1978 = vpack.c.bf16 %v1737, %v1734
    %v1979 = vpack.c.bf16 %v1745, %v1742
    %v1980 = vpack.c.bf16 %v1753, %v1750
    %v1981 = vpack.c.bf16 %v1761, %v1758
    %v1982 = vpack.c.bf16 %v1769, %v1766
    %v1983 = vpack.c.bf16 %v1777, %v1774
    %v1984 = vpack.c.bf16 %v1785, %v1782
    %v1985 = vpack.c.bf16 %v1793, %v1790
    %v1986 = vpack.c.bf16 %v1801, %v1798
    %v1987 = vpack.c.bf16 %v1809, %v1806
    %v2004 = vunpack.c.l.b16 %v1972
    %v2005 = vunpack.c.h.b16 %v1972
    %v2006 = vunpack.c.l.b16 %v1973
    %v2007 = vunpack.c.h.b16 %v1973
    %v2008 = vunpack.c.l.b16 %v1974
    %v2009 = vunpack.c.h.b16 %v1974
    %v2010 = vunpack.c.l.b16 %v1975
    %v2011 = vunpack.c.h.b16 %v1975
    %v2012 = vunpack.c.l.b16 %v1976
    %v2013 = vunpack.c.h.b16 %v1976
    %v2014 = vunpack.c.l.b16 %v1977
    %v2015 = vunpack.c.h.b16 %v1977
    %v2016 = vunpack.c.l.b16 %v1978
    %v2017 = vunpack.c.h.b16 %v1978
    %v2018 = vunpack.c.l.b16 %v1979
    %v2019 = vunpack.c.h.b16 %v1979
    %v2020 = vunpack.c.l.b16 %v1980
    %v2021 = vunpack.c.h.b16 %v1980
    %v2022 = vunpack.c.l.b16 %v1981
    %v2023 = vunpack.c.h.b16 %v1981
    %v2024 = vunpack.c.l.b16 %v1982
    %v2025 = vunpack.c.h.b16 %v1982
    %v2026 = vunpack.c.l.b16 %v1983
    %v2027 = vunpack.c.h.b16 %v1983
    %v2028 = vunpack.c.l.b16 %v1984
    %v2029 = vunpack.c.h.b16 %v1984
    %v2030 = vunpack.c.l.b16 %v1985
    %v2031 = vunpack.c.h.b16 %v1985
    %v2032 = vunpack.c.l.b16 %v1986
    %v2033 = vunpack.c.h.b16 %v1986
    %v2034 = vunpack.c.l.b16 %v1987
    %v2035 = vunpack.c.h.b16 %v1987
    %v2036 = vpack.c.b16 %v2004, %v2004
    %v2037 = vpack.c.b16 %v2005, %v2005
    %v2038 = vpack.c.b16 %v2006, %v2006
    %v2039 = vpack.c.b16 %v2007, %v2007
    %v2040 = vpack.c.b16 %v2008, %v2008
    %v2041 = vpack.c.b16 %v2009, %v2009
    %v2042 = vpack.c.b16 %v2010, %v2010
    %v2043 = vpack.c.b16 %v2011, %v2011
    %v2044 = vpack.c.b16 %v2012, %v2012
    %v2045 = vpack.c.b16 %v2013, %v2013
    %v2046 = vpack.c.b16 %v2014, %v2014
    %v2047 = vpack.c.b16 %v2015, %v2015
    %v2048 = vpack.c.b16 %v2016, %v2016
    %v2049 = vpack.c.b16 %v2017, %v2017
    %v2050 = vpack.c.b16 %v2018, %v2018
    %v2051 = vpack.c.b16 %v2019, %v2019
    %v2052 = vpack.c.b16 %v2020, %v2020
    %v2053 = vpack.c.b16 %v2021, %v2021
    %v2054 = vpack.c.b16 %v2022, %v2022
    %v2055 = vpack.c.b16 %v2023, %v2023
    %v2056 = vpack.c.b16 %v2024, %v2024
    %v2057 = vpack.c.b16 %v2025, %v2025
    %v2058 = vpack.c.b16 %v2026, %v2026
    %v2059 = vpack.c.b16 %v2027, %v2027
    %v2060 = vpack.c.b16 %v2028, %v2028
    %v2061 = vpack.c.b16 %v2029, %v2029
    %v2062 = vpack.c.b16 %v2030, %v2030
    %v2063 = vpack.c.b16 %v2031, %v2031
    %v2064 = vpack.c.b16 %v2032, %v2032
    %v2065 = vpack.c.b16 %v2033, %v2033
    %v2066 = vpack.c.b16 %v2034, %v2034
    %v2067 = vpack.c.b16 %v2035, %v2035
    %2100 = vst [vmem:[%s7 + $0x4] sm:$0xf] %v2036
    %2101 = vst [vmem:[%s7 + $0xc] sm:$0xf] %v2037
    %2102 = vst [vmem:[%s7 + $0x14] sm:$0xf] %v2038
    %2103 = vst [vmem:[%s7 + $0x1c] sm:$0xf] %v2039
    %2104 = vst [vmem:[%s7 + $0x24] sm:$0xf] %v2040
    %2105 = vst [vmem:[%s7 + $0x2c] sm:$0xf] %v2041
    %2106 = vst [vmem:[%s7 + $0x34] sm:$0xf] %v2042
    %2107 = vst [vmem:[%s7 + $0x3c] sm:$0xf] %v2043
    %2108 = vst [vmem:[%s7 + $0x44] sm:$0xf] %v2044
    %2109 = vst [vmem:[%s7 + $0x4c] sm:$0xf] %v2045
    %2110 = vst [vmem:[%s7 + $0x54] sm:$0xf] %v2046
    %2111 = vst [vmem:[%s7 + $0x5c] sm:$0xf] %v2047
    %2112 = vst [vmem:[%s7 + $0x64] sm:$0xf] %v2048
    %2113 = vst [vmem:[%s7 + $0x6c] sm:$0xf] %v2049
    %2114 = vst [vmem:[%s7 + $0x74] sm:$0xf] %v2050
    %2115 = vst [vmem:[%s7 + $0x7c] sm:$0xf] %v2051
    %2116 = vst [vmem:[%s7 + $0x84] sm:$0xf] %v2052
    %2117 = vst [vmem:[%s7 + $0x8c] sm:$0xf] %v2053
    %2118 = vst [vmem:[%s7 + $0x94] sm:$0xf] %v2054
    %2119 = vst [vmem:[%s7 + $0x9c] sm:$0xf] %v2055
    %2120 = vst [vmem:[%s7 + $0xa4] sm:$0xf] %v2056
    %2121 = vst [vmem:[%s7 + $0xac] sm:$0xf] %v2057
    %2122 = vst [vmem:[%s7 + $0xb4] sm:$0xf] %v2058
    %2123 = vst [vmem:[%s7 + $0xbc] sm:$0xf] %v2059
    %2124 = vst [vmem:[%s7 + $0xc4] sm:$0xf] %v2060
    %2125 = vst [vmem:[%s7 + $0xcc] sm:$0xf] %v2061
    %2126 = vst [vmem:[%s7 + $0xd4] sm:$0xf] %v2062
    %2127 = vst [vmem:[%s7 + $0xdc] sm:$0xf] %v2063
    %2128 = vst [vmem:[%s7 + $0xe4] sm:$0xf] %v2064
    %2129 = vst [vmem:[%s7 + $0xec] sm:$0xf] %v2065
    %2130 = vst [vmem:[%s7 + $0xf4] sm:$0xf] %v2066
    %2131 = vst [vmem:[%s7 + $0xfc] sm:$0xf] %v2067
  $region37: #{_lambda_.5} parent=0 // pred_fallthru
    _
  // Predicated region
  $region38: #{_lambda_.5} parent=0 // pred_check
    _
  $region39: #{_lambda_.5} parent=0 // pred_check_branch
    %2133 = sbr.rel (0) target = $region41
  $region40: #{_lambda_.5} parent=0 // pred_region
    _
  $region41: #{_lambda_.5} parent=0 // pred_fallthru
    _
  // Predicated region
  $region42: #{_lambda_.5} parent=0 // pred_check
    _
  $region43: #{_lambda_.5} parent=0 // pred_check_branch
    %2135 = sbr.rel (0) target = $region45
  $region44: #{_lambda_.5} parent=0 // pred_region
    _
  $region45: #{_lambda_.5} parent=0 // pred_fallthru
    _

</llo_original>
